<compile_context>
chip_gen: v7x
topology: tpu7x:2x2x1
jax: 0.10.0
libtpu: 0.0.40
codegen_flags: <defaults>
</compile_context>

<pallas_src>
import functools

import jax
import jax.numpy as jnp
from jax.experimental import pallas as pl
from jax.experimental.pallas import tpu as pltpu

# --- model hyperparameters (DIM / N_HEADS / N_LAYERS unspecified in snippet; small values) ---
VOCAB = 128
DIM = 32
N_HEADS = 4
N_LAYERS = 2
MAX_LEN_DOC = 110
MAX_LEN_QUERY = 100
MAX_LEN_ENCODER = MAX_LEN_QUERY + MAX_LEN_DOC
LN_EPS = 1e-5


# ----------------------------------------------------------------------------- kernel
def fused_encoder_kernel(h_ref, wqkv_ref, wo_ref, w1_ref, w2_ref, vec_ref, o_ref,
                         *, bt, seq, n_heads):
    """All N_LAYERS post-norm TransformerEncoderLayers for a block of `bt` batch rows.

    h_ref/o_ref blocks: (bt*seq, D).  Stacked weights (leading layer dim) use constant
    block indices, so they stay VMEM-resident across grid steps.
    """
    x = h_ref[...].astype(jnp.float32)          # (R, D) with R = bt*seq
    R, D = x.shape
    H = n_heads
    hd = D // H
    n_layers = wqkv_ref.shape[0]
    scale = 1.0 / float(hd) ** 0.5

    def layer_norm(t, g, b):
        mu = jnp.mean(t, axis=-1, keepdims=True)
        var = jnp.mean((t - mu) * (t - mu), axis=-1, keepdims=True)   # biased var (PyTorch LN)
        return (t - mu) * jax.lax.rsqrt(var + LN_EPS) * g + b

    for li in range(n_layers):                  # static unroll over layers
        # --- packed per-layer vectors: (1, width) rows, broadcast over tokens ----------
        bqkv = vec_ref[li, 0:1, 0:3 * D]
        bo = vec_ref[li, 1:2, 0:D]
        b1 = vec_ref[li, 2:3, 0:4 * D]
        b2 = vec_ref[li, 3:4, 0:D]
        ln1g = vec_ref[li, 4:5, 0:D]
        ln1b = vec_ref[li, 5:6, 0:D]
        ln2g = vec_ref[li, 6:7, 0:D]
        ln2b = vec_ref[li, 7:8, 0:D]

        # --- fused QKV projection: one (R, D) @ (D, 3D) matmul -------------------------
        qkv = jnp.dot(x, wqkv_ref[li], preferred_element_type=jnp.float32) + bqkv

        # --- self-attention per (batch, head); all slices are static -------------------
        ctx_rows = []
        for b in range(bt):
            r0 = b * seq
            head_ctx = []
            for h in range(H):
                q = qkv[r0:r0 + seq, h * hd:(h + 1) * hd]
                k = qkv[r0:r0 + seq, D + h * hd:D + (h + 1) * hd]
                v = qkv[r0:r0 + seq, 2 * D + h * hd:2 * D + (h + 1) * hd]
                # scores = q @ k^T (contract over head dim; no explicit transpose op)
                s = jax.lax.dot_general(q, k, (((1,), (1,)), ((), ())),
                                        preferred_element_type=jnp.float32) * scale
                m = jnp.max(s, axis=-1, keepdims=True)
                e = jnp.exp(s - m)
                p = e * pl.reciprocal(jnp.sum(e, axis=-1, keepdims=True), approx=True)
                head_ctx.append(jnp.dot(p, v, preferred_element_type=jnp.float32))  # (seq, hd)
            ctx_rows.append(jnp.concatenate(head_ctx, axis=-1))    # heads -> lanes, (seq, D)
        ctx = jnp.concatenate(ctx_rows, axis=0) if bt > 1 else ctx_rows[0]           # (R, D)

        # single out-projection matmul (K = D instead of per-head K = hd sums)
        attn = jnp.dot(ctx, wo_ref[li], preferred_element_type=jnp.float32) + bo

        # residual + LayerNorm1 (post-norm; dropout disabled in eval)
        x = layer_norm(x + attn, ln1g, ln1b)

        # --- feed-forward: D -> 4D -> D, tanh-GELU (EUP) --------------------------------
        f = jnp.dot(x, w1_ref[li], preferred_element_type=jnp.float32) + b1
        f = jax.nn.gelu(f, approximate=True)
        f = jnp.dot(f, w2_ref[li], preferred_element_type=jnp.float32) + b2

        # residual + LayerNorm2
        x = layer_norm(x + f, ln2g, ln2b)

    o_ref[...] = x.astype(o_ref.dtype)


# ----------------------------------------------------------------------------- wrapper
def transformer_forward(x_tokens, params):
    """Equivalent of TransformerForNextTokenPrediction.forward (returns hidden_state)."""
    N, S = x_tokens.shape
    D = params["tok_emb"].shape[1]
    # Embedding lookups are pure gathers -> plain JAX glue.
    h = params["tok_emb"][x_tokens] + params["pos_emb"][jnp.arange(S)][None, :, :]
    h2d = h.reshape(N * S, D)

    stacked = params["stacked"]

    # 2 parallel grid steps when the batch splits cleanly (feeds both TCs on v7x);
    # otherwise a single fat step (strictly best on 1-TC v5e/v6e).
    grid_steps = 2 if (N % 2 == 0 and ((N // 2) * S) % 8 == 0) else 1
    bt = N // grid_steps
    rows = bt * S

    def resident_spec(arr):                     # full array, constant block index -> no re-DMA
        nd = arr.ndim
        return pl.BlockSpec(arr.shape, lambda g, _nd=nd: (0,) * _nd)

    kern = functools.partial(fused_encoder_kernel, bt=bt, seq=S, n_heads=N_HEADS)

    out2d = pl.pallas_call(
        kern,
        out_shape=jax.ShapeDtypeStruct((N * S, D), h.dtype),
        grid=(grid_steps,),
        in_specs=[pl.BlockSpec((rows, D), lambda g: (g, 0))]
                 + [resident_spec(a) for a in stacked],
        out_specs=pl.BlockSpec((rows, D), lambda g: (g, 0)),
        compiler_params=pltpu.CompilerParams(dimension_semantics=("parallel",)),
    )(h2d, *stacked)
    return out2d.reshape(N, S, D)


# ----------------------------------------------------------------------------- params
def pack_kernel_weights(torch_layers, dim, n_heads):
    """PyTorch-layout per-layer weights -> stacked, pre-transposed/packed kernel layout."""
    D = dim
    vw = ((max(4 * D, 3 * D, 128) + 127) // 128) * 128   # lane width of the vector slab
    wqkv, wo, w1, w2, vecs = [], [], [], [], []

    def pad(v):
        return jnp.pad(v, (0, vw - v.shape[0]))

    for L in torch_layers:
        wqkv.append(L["in_proj_w"].T)        # (D, 3D): qkv = x @ in_proj_w.T
        wo.append(L["out_proj_w"].T)         # (D, D)
        w1.append(L["lin1_w"].T)             # (D, 4D)
        w2.append(L["lin2_w"].T)             # (4D, D)
        vecs.append(jnp.stack([
            pad(L["in_proj_b"]),             # row 0: qkv bias (3D)
            pad(L["out_proj_b"]),            # row 1: out-proj bias (D)
            pad(L["lin1_b"]),                # row 2: ffn bias 1 (4D)
            pad(L["lin2_b"]),                # row 3: ffn bias 2 (D)
            pad(L["ln1_g"]), pad(L["ln1_b"]),  # rows 4,5
            pad(L["ln2_g"]), pad(L["ln2_b"]),  # rows 6,7
        ], axis=0))                          # (8, vw)
    return (jnp.stack(wqkv), jnp.stack(wo), jnp.stack(w1), jnp.stack(w2), jnp.stack(vecs))


def init_params(key, vocab=VOCAB, dim=DIM, n_heads=N_HEADS, n_layers=N_LAYERS,
                max_len=MAX_LEN_ENCODER):
    """Deterministic synthetic weights (PyTorch shape conventions + packed kernel layout)."""
    keys = jax.random.split(key, 3 + n_layers)
    scale = 0.02
    params = {
        "tok_emb": scale * jax.random.normal(keys[0], (vocab, dim), jnp.float32),
        "pos_emb": scale * jax.random.normal(keys[1], (max_len, dim), jnp.float32),
        # head Linear(dim, vocab): initialized for completeness, unused by forward()
        "head_w": scale * jax.random.normal(keys[2], (vocab, dim), jnp.float32),
        "head_b": jnp.zeros((vocab,), jnp.float32),
        "torch_layers": [],
    }
    for li in range(n_layers):
        lk = jax.random.split(keys[3 + li], 8)
        layer = {
            "in_proj_w":  scale * jax.random.normal(lk[0], (3 * dim, dim), jnp.float32),
            "in_proj_b":  scale * jax.random.normal(lk[1], (3 * dim,), jnp.float32),
            "out_proj_w": scale * jax.random.normal(lk[2], (dim, dim), jnp.float32),
            "out_proj_b": scale * jax.random.normal(lk[3], (dim,), jnp.float32),
            "ln1_g": jnp.ones((dim,), jnp.float32),
            "ln1_b": jnp.zeros((dim,), jnp.float32),
            "lin1_w": scale * jax.random.normal(lk[4], (4 * dim, dim), jnp.float32),
            "lin1_b": scale * jax.random.normal(lk[5], (4 * dim,), jnp.float32),
            "lin2_w": scale * jax.random.normal(lk[6], (dim, 4 * dim), jnp.float32),
            "lin2_b": scale * jax.random.normal(lk[7], (dim,), jnp.float32),
            "ln2_g": jnp.ones((dim,), jnp.float32),
            "ln2_b": jnp.zeros((dim,), jnp.float32),
        }
        params["torch_layers"].append(layer)
    params["stacked"] = pack_kernel_weights(params["torch_layers"], dim, n_heads)
    return params


# ----------------------------------------------------------------------------- reference
def reference_forward(x_tokens, params):
    """Pure-JAX reference using the original PyTorch-layout weights (eval semantics)."""
    N, S = x_tokens.shape
    D = params["tok_emb"].shape[1]
    H, hd = N_HEADS, D // N_HEADS
    hp = jax.lax.Precision.HIGHEST

    def ln(t, g, b):
        mu = jnp.mean(t, axis=-1, keepdims=True)
        var = jnp.mean((t - mu) ** 2, axis=-1, keepdims=True)
        return (t - mu) * jax.lax.rsqrt(var + LN_EPS) * g + b

    h = params["tok_emb"][x_tokens] + params["pos_emb"][jnp.arange(S)][None, :, :]
    for L in params["torch_layers"]:
        qkv = jnp.einsum("nsd,ed->nse", h, L["in_proj_w"], precision=hp) + L["in_proj_b"]
        q, k, v = jnp.split(qkv, 3, axis=-1)
        q = q.reshape(N, S, H, hd).transpose(0, 2, 1, 3)
        k = k.reshape(N, S, H, hd).transpose(0, 2, 1, 3)
        v = v.reshape(N, S, H, hd).transpose(0, 2, 1, 3)
        s = jnp.einsum("nhqd,nhkd->nhqk", q, k, precision=hp) / jnp.sqrt(jnp.float32(hd))
        p = jax.nn.softmax(s, axis=-1)
        ctx = jnp.einsum("nhqk,nhkd->nhqd", p, v, precision=hp)
        ctx = ctx.transpose(0, 2, 1, 3).reshape(N, S, D)
        attn = jnp.einsum("nsd,ed->nse", ctx, L["out_proj_w"], precision=hp) + L["out_proj_b"]
        x1 = ln(h + attn, L["ln1_g"], L["ln1_b"])
        f = jnp.einsum("nsd,fd->nsf", x1, L["lin1_w"], precision=hp) + L["lin1_b"]
        f = jax.nn.gelu(f, approximate=False)   # PyTorch 'gelu' = exact erf GELU
        f = jnp.einsum("nsf,df->nsd", f, L["lin2_w"], precision=hp) + L["lin2_b"]
        h = ln(x1 + f, L["ln2_g"], L["ln2_b"])
    return h


# ----------------------------------------------------------------------------- main
if __name__ == "__main__":
    key = jax.random.PRNGKey(0)
    k_tok, k_par = jax.random.split(key)

    N, S = 2, 8  # small batch / sequence consistent with the module
    x_tokens = jax.random.randint(k_tok, (N, S), 0, VOCAB, dtype=jnp.int32)
    params = init_params(k_par)

    fwd = jax.jit(transformer_forward)
    out = jax.block_until_ready(fwd(x_tokens, params))
    assert out.shape == (N, S, DIM)

    ref = jax.block_until_ready(reference_forward(x_tokens, params))
    max_err = float(jnp.max(jnp.abs(out - ref)))
    assert max_err < 5e-2, f"mismatch vs pure-JAX reference: max_err={max_err}"

    print("KERNEL_OK")
</pallas_src>

<mosaic_0001>
module attributes {stable_mosaic.version = 11 : i64} {
  func.func @fused_encoder_kernel(%arg0: i32, %arg1: memref<8x32xf32, #tpu.memory_space<vmem>>, %arg2: memref<2x32x96xf32, #tpu.memory_space<vmem>>, %arg3: memref<2x32x32xf32, #tpu.memory_space<vmem>>, %arg4: memref<2x32x128xf32, #tpu.memory_space<vmem>>, %arg5: memref<2x128x32xf32, #tpu.memory_space<vmem>>, %arg6: memref<2x8x128xf32, #tpu.memory_space<vmem>>, %arg7: memref<8x32xf32, #tpu.memory_space<vmem>>) attributes {dimension_semantics = [#tpu.dimension_semantics<parallel>], iteration_bounds = array<i64: 2>, scalar_prefetch = 0 : i64, scratch_operands = 0 : i64, tpu.core_type = #tpu.core_type<tc>, window_params = [{transform_indices = @transform_0, window_bounds = array<i64: 8, 32>}, {pipeline_mode = #tpu.pipeline_mode<synchronous>, transform_indices = @transform_1, window_bounds = array<i64: 2, 32, 96>}, {pipeline_mode = #tpu.pipeline_mode<synchronous>, transform_indices = @transform_2, window_bounds = array<i64: 2, 32, 32>}, {pipeline_mode = #tpu.pipeline_mode<synchronous>, transform_indices = @transform_3, window_bounds = array<i64: 2, 32, 128>}, {pipeline_mode = #tpu.pipeline_mode<synchronous>, transform_indices = @transform_4, window_bounds = array<i64: 2, 128, 32>}, {pipeline_mode = #tpu.pipeline_mode<synchronous>, transform_indices = @transform_5, window_bounds = array<i64: 2, 8, 128>}, {transform_indices = @transform_6, window_bounds = array<i64: 8, 32>}]} {
    %c0 = arith.constant 0 : index
    %c0_0 = arith.constant 0 : index
    %0 = vector.load %arg1[%c0, %c0_0] : memref<8x32xf32, #tpu.memory_space<vmem>>, vector<8x32xf32>
    %c0_1 = arith.constant 0 : index
    %c0_2 = arith.constant 0 : index
    %c0_3 = arith.constant 0 : index
    %1 = vector.load %arg6[%c0_1, %c0_2, %c0_3] : memref<2x8x128xf32, #tpu.memory_space<vmem>>, vector<1x1x96xf32>
    %2 = vector.shape_cast %1 : vector<1x1x96xf32> to vector<1x96xf32>
    %c0_4 = arith.constant 0 : index
    %c1 = arith.constant 1 : index
    %c0_5 = arith.constant 0 : index
    %3 = vector.load %arg6[%c0_4, %c1, %c0_5] : memref<2x8x128xf32, #tpu.memory_space<vmem>>, vector<1x1x32xf32>
    %4 = vector.shape_cast %3 : vector<1x1x32xf32> to vector<1x32xf32>
    %c0_6 = arith.constant 0 : index
    %c2 = arith.constant 2 : index
    %c0_7 = arith.constant 0 : index
    %5 = vector.load %arg6[%c0_6, %c2, %c0_7] : memref<2x8x128xf32, #tpu.memory_space<vmem>>, vector<1x1x128xf32>
    %6 = vector.shape_cast %5 : vector<1x1x128xf32> to vector<1x128xf32>
    %c0_8 = arith.constant 0 : index
    %c3 = arith.constant 3 : index
    %c0_9 = arith.constant 0 : index
    %7 = vector.load %arg6[%c0_8, %c3, %c0_9] : memref<2x8x128xf32, #tpu.memory_space<vmem>>, vector<1x1x32xf32>
    %8 = vector.shape_cast %7 : vector<1x1x32xf32> to vector<1x32xf32>
    %c0_10 = arith.constant 0 : index
    %c4 = arith.constant 4 : index
    %c0_11 = arith.constant 0 : index
    %9 = vector.load %arg6[%c0_10, %c4, %c0_11] : memref<2x8x128xf32, #tpu.memory_space<vmem>>, vector<1x1x32xf32>
    %10 = vector.shape_cast %9 : vector<1x1x32xf32> to vector<1x32xf32>
    %c0_12 = arith.constant 0 : index
    %c5 = arith.constant 5 : index
    %c0_13 = arith.constant 0 : index
    %11 = vector.load %arg6[%c0_12, %c5, %c0_13] : memref<2x8x128xf32, #tpu.memory_space<vmem>>, vector<1x1x32xf32>
    %12 = vector.shape_cast %11 : vector<1x1x32xf32> to vector<1x32xf32>
    %c0_14 = arith.constant 0 : index
    %c6 = arith.constant 6 : index
    %c0_15 = arith.constant 0 : index
    %13 = vector.load %arg6[%c0_14, %c6, %c0_15] : memref<2x8x128xf32, #tpu.memory_space<vmem>>, vector<1x1x32xf32>
    %14 = vector.shape_cast %13 : vector<1x1x32xf32> to vector<1x32xf32>
    %c0_16 = arith.constant 0 : index
    %c7 = arith.constant 7 : index
    %c0_17 = arith.constant 0 : index
    %15 = vector.load %arg6[%c0_16, %c7, %c0_17] : memref<2x8x128xf32, #tpu.memory_space<vmem>>, vector<1x1x32xf32>
    %16 = vector.shape_cast %15 : vector<1x1x32xf32> to vector<1x32xf32>
    %c0_18 = arith.constant 0 : index
    %c0_19 = arith.constant 0 : index
    %c0_20 = arith.constant 0 : index
    %17 = vector.load %arg2[%c0_18, %c0_19, %c0_20] : memref<2x32x96xf32, #tpu.memory_space<vmem>>, vector<1x32x96xf32>
    %18 = vector.shape_cast %17 : vector<1x32x96xf32> to vector<32x96xf32>
    %cst = arith.constant dense<0.000000e+00> : vector<8x96xf32>
    %19 = tpu.matmul %0, %18, %cst {dimension_numbers = #tpu.dot_dimension_numbers<[1], [0], [0], [1], [0, 0, 1, 1], [], []>} : vector<8x32xf32>, vector<32x96xf32>, vector<8x96xf32> -> vector<8x96xf32>
    %20 = vector.broadcast %2 : vector<1x96xf32> to vector<8x96xf32>
    %21 = arith.addf %19, %20 : vector<8x96xf32>
    %22 = vector.extract_strided_slice %21 {offsets = [0, 0], sizes = [8, 8], strides = [1, 1]} : vector<8x96xf32> to vector<8x8xf32>
    %23 = vector.extract_strided_slice %21 {offsets = [0, 32], sizes = [8, 8], strides = [1, 1]} : vector<8x96xf32> to vector<8x8xf32>
    %24 = vector.extract_strided_slice %21 {offsets = [0, 64], sizes = [8, 8], strides = [1, 1]} : vector<8x96xf32> to vector<8x8xf32>
    %cst_21 = arith.constant dense<0.000000e+00> : vector<8x8xf32>
    %25 = tpu.matmul %22, %23, %cst_21 {dimension_numbers = #tpu.dot_dimension_numbers<[1], [1], [0], [0], [0, 0, 1, 0], [], []>} : vector<8x8xf32>, vector<8x8xf32>, vector<8x8xf32> -> vector<8x8xf32>
    %cst_22 = arith.constant 0.353553385 : f32
    %26 = vector.broadcast %cst_22 : f32 to vector<8x8xf32>
    %27 = arith.mulf %25, %26 : vector<8x8xf32>
    %cst_23 = arith.constant dense<0xFF800000> : vector<8xf32>
    %28 = vector.multi_reduction <maximumf>, %27, %cst_23 [1] : vector<8x8xf32> to vector<8xf32>
    %29 = vector.shape_cast %28 : vector<8xf32> to vector<8x1xf32>
    %30 = vector.broadcast %29 : vector<8x1xf32> to vector<8x8xf32>
    %31 = arith.subf %27, %30 : vector<8x8xf32>
    %32 = math.exp %31 : vector<8x8xf32>
    %cst_24 = arith.constant dense<0.000000e+00> : vector<8xf32>
    %33 = vector.multi_reduction <add>, %32, %cst_24 [1] : vector<8x8xf32> to vector<8xf32>
    %34 = vector.shape_cast %33 : vector<8xf32> to vector<8x1xf32>
    %35 = tpu.reciprocal %34 {approx = true} : vector<8x1xf32> -> vector<8x1xf32>
    %36 = vector.broadcast %35 : vector<8x1xf32> to vector<8x8xf32>
    %37 = arith.mulf %32, %36 : vector<8x8xf32>
    %cst_25 = arith.constant dense<0.000000e+00> : vector<8x8xf32>
    %38 = tpu.matmul %37, %24, %cst_25 {dimension_numbers = #tpu.dot_dimension_numbers<[1], [0], [0], [1], [0, 0, 1, 1], [], []>} : vector<8x8xf32>, vector<8x8xf32>, vector<8x8xf32> -> vector<8x8xf32>
    %39 = vector.extract_strided_slice %21 {offsets = [0, 8], sizes = [8, 8], strides = [1, 1]} : vector<8x96xf32> to vector<8x8xf32>
    %40 = vector.extract_strided_slice %21 {offsets = [0, 40], sizes = [8, 8], strides = [1, 1]} : vector<8x96xf32> to vector<8x8xf32>
    %41 = vector.extract_strided_slice %21 {offsets = [0, 72], sizes = [8, 8], strides = [1, 1]} : vector<8x96xf32> to vector<8x8xf32>
    %cst_26 = arith.constant dense<0.000000e+00> : vector<8x8xf32>
    %42 = tpu.matmul %39, %40, %cst_26 {dimension_numbers = #tpu.dot_dimension_numbers<[1], [1], [0], [0], [0, 0, 1, 0], [], []>} : vector<8x8xf32>, vector<8x8xf32>, vector<8x8xf32> -> vector<8x8xf32>
    %cst_27 = arith.constant 0.353553385 : f32
    %43 = vector.broadcast %cst_27 : f32 to vector<8x8xf32>
    %44 = arith.mulf %42, %43 : vector<8x8xf32>
    %cst_28 = arith.constant dense<0xFF800000> : vector<8xf32>
    %45 = vector.multi_reduction <maximumf>, %44, %cst_28 [1] : vector<8x8xf32> to vector<8xf32>
    %46 = vector.shape_cast %45 : vector<8xf32> to vector<8x1xf32>
    %47 = vector.broadcast %46 : vector<8x1xf32> to vector<8x8xf32>
    %48 = arith.subf %44, %47 : vector<8x8xf32>
    %49 = math.exp %48 : vector<8x8xf32>
    %cst_29 = arith.constant dense<0.000000e+00> : vector<8xf32>
    %50 = vector.multi_reduction <add>, %49, %cst_29 [1] : vector<8x8xf32> to vector<8xf32>
    %51 = vector.shape_cast %50 : vector<8xf32> to vector<8x1xf32>
    %52 = tpu.reciprocal %51 {approx = true} : vector<8x1xf32> -> vector<8x1xf32>
    %53 = vector.broadcast %52 : vector<8x1xf32> to vector<8x8xf32>
    %54 = arith.mulf %49, %53 : vector<8x8xf32>
    %cst_30 = arith.constant dense<0.000000e+00> : vector<8x8xf32>
    %55 = tpu.matmul %54, %41, %cst_30 {dimension_numbers = #tpu.dot_dimension_numbers<[1], [0], [0], [1], [0, 0, 1, 1], [], []>} : vector<8x8xf32>, vector<8x8xf32>, vector<8x8xf32> -> vector<8x8xf32>
    %56 = vector.extract_strided_slice %21 {offsets = [0, 16], sizes = [8, 8], strides = [1, 1]} : vector<8x96xf32> to vector<8x8xf32>
    %57 = vector.extract_strided_slice %21 {offsets = [0, 48], sizes = [8, 8], strides = [1, 1]} : vector<8x96xf32> to vector<8x8xf32>
    %58 = vector.extract_strided_slice %21 {offsets = [0, 80], sizes = [8, 8], strides = [1, 1]} : vector<8x96xf32> to vector<8x8xf32>
    %cst_31 = arith.constant dense<0.000000e+00> : vector<8x8xf32>
    %59 = tpu.matmul %56, %57, %cst_31 {dimension_numbers = #tpu.dot_dimension_numbers<[1], [1], [0], [0], [0, 0, 1, 0], [], []>} : vector<8x8xf32>, vector<8x8xf32>, vector<8x8xf32> -> vector<8x8xf32>
    %cst_32 = arith.constant 0.353553385 : f32
    %60 = vector.broadcast %cst_32 : f32 to vector<8x8xf32>
    %61 = arith.mulf %59, %60 : vector<8x8xf32>
    %cst_33 = arith.constant dense<0xFF800000> : vector<8xf32>
    %62 = vector.multi_reduction <maximumf>, %61, %cst_33 [1] : vector<8x8xf32> to vector<8xf32>
    %63 = vector.shape_cast %62 : vector<8xf32> to vector<8x1xf32>
    %64 = vector.broadcast %63 : vector<8x1xf32> to vector<8x8xf32>
    %65 = arith.subf %61, %64 : vector<8x8xf32>
    %66 = math.exp %65 : vector<8x8xf32>
    %cst_34 = arith.constant dense<0.000000e+00> : vector<8xf32>
    %67 = vector.multi_reduction <add>, %66, %cst_34 [1] : vector<8x8xf32> to vector<8xf32>
    %68 = vector.shape_cast %67 : vector<8xf32> to vector<8x1xf32>
    %69 = tpu.reciprocal %68 {approx = true} : vector<8x1xf32> -> vector<8x1xf32>
    %70 = vector.broadcast %69 : vector<8x1xf32> to vector<8x8xf32>
    %71 = arith.mulf %66, %70 : vector<8x8xf32>
    %cst_35 = arith.constant dense<0.000000e+00> : vector<8x8xf32>
    %72 = tpu.matmul %71, %58, %cst_35 {dimension_numbers = #tpu.dot_dimension_numbers<[1], [0], [0], [1], [0, 0, 1, 1], [], []>} : vector<8x8xf32>, vector<8x8xf32>, vector<8x8xf32> -> vector<8x8xf32>
    %73 = vector.extract_strided_slice %21 {offsets = [0, 24], sizes = [8, 8], strides = [1, 1]} : vector<8x96xf32> to vector<8x8xf32>
    %74 = vector.extract_strided_slice %21 {offsets = [0, 56], sizes = [8, 8], strides = [1, 1]} : vector<8x96xf32> to vector<8x8xf32>
    %75 = vector.extract_strided_slice %21 {offsets = [0, 88], sizes = [8, 8], strides = [1, 1]} : vector<8x96xf32> to vector<8x8xf32>
    %cst_36 = arith.constant dense<0.000000e+00> : vector<8x8xf32>
    %76 = tpu.matmul %73, %74, %cst_36 {dimension_numbers = #tpu.dot_dimension_numbers<[1], [1], [0], [0], [0, 0, 1, 0], [], []>} : vector<8x8xf32>, vector<8x8xf32>, vector<8x8xf32> -> vector<8x8xf32>
    %cst_37 = arith.constant 0.353553385 : f32
    %77 = vector.broadcast %cst_37 : f32 to vector<8x8xf32>
    %78 = arith.mulf %76, %77 : vector<8x8xf32>
    %cst_38 = arith.constant dense<0xFF800000> : vector<8xf32>
    %79 = vector.multi_reduction <maximumf>, %78, %cst_38 [1] : vector<8x8xf32> to vector<8xf32>
    %80 = vector.shape_cast %79 : vector<8xf32> to vector<8x1xf32>
    %81 = vector.broadcast %80 : vector<8x1xf32> to vector<8x8xf32>
    %82 = arith.subf %78, %81 : vector<8x8xf32>
    %83 = math.exp %82 : vector<8x8xf32>
    %cst_39 = arith.constant dense<0.000000e+00> : vector<8xf32>
    %84 = vector.multi_reduction <add>, %83, %cst_39 [1] : vector<8x8xf32> to vector<8xf32>
    %85 = vector.shape_cast %84 : vector<8xf32> to vector<8x1xf32>
    %86 = tpu.reciprocal %85 {approx = true} : vector<8x1xf32> -> vector<8x1xf32>
    %87 = vector.broadcast %86 : vector<8x1xf32> to vector<8x8xf32>
    %88 = arith.mulf %83, %87 : vector<8x8xf32>
    %cst_40 = arith.constant dense<0.000000e+00> : vector<8x8xf32>
    %89 = tpu.matmul %88, %75, %cst_40 {dimension_numbers = #tpu.dot_dimension_numbers<[1], [0], [0], [1], [0, 0, 1, 1], [], []>} : vector<8x8xf32>, vector<8x8xf32>, vector<8x8xf32> -> vector<8x8xf32>
    %90 = tpu.concatenate %38, %55, %72, %89 in 1 : vector<8x8xf32>, vector<8x8xf32>, vector<8x8xf32>, vector<8x8xf32> -> vector<8x32xf32>
    %c0_41 = arith.constant 0 : index
    %c0_42 = arith.constant 0 : index
    %c0_43 = arith.constant 0 : index
    %91 = vector.load %arg3[%c0_41, %c0_42, %c0_43] : memref<2x32x32xf32, #tpu.memory_space<vmem>>, vector<1x32x32xf32>
    %92 = vector.shape_cast %91 : vector<1x32x32xf32> to vector<32x32xf32>
    %cst_44 = arith.constant dense<0.000000e+00> : vector<8x32xf32>
    %93 = tpu.matmul %90, %92, %cst_44 {dimension_numbers = #tpu.dot_dimension_numbers<[1], [0], [0], [1], [0, 0, 1, 1], [], []>} : vector<8x32xf32>, vector<32x32xf32>, vector<8x32xf32> -> vector<8x32xf32>
    %94 = vector.broadcast %4 : vector<1x32xf32> to vector<8x32xf32>
    %95 = arith.addf %93, %94 : vector<8x32xf32>
    %96 = arith.addf %0, %95 : vector<8x32xf32>
    %cst_45 = arith.constant dense<0.000000e+00> : vector<8xf32>
    %97 = vector.multi_reduction <add>, %96, %cst_45 [1] : vector<8x32xf32> to vector<8xf32>
    %98 = vector.shape_cast %97 : vector<8xf32> to vector<8x1xf32>
    %cst_46 = arith.constant 3.200000e+01 : f32
    %99 = vector.broadcast %cst_46 : f32 to vector<8x1xf32>
    %100 = arith.divf %98, %99 : vector<8x1xf32>
    %101 = vector.broadcast %100 : vector<8x1xf32> to vector<8x32xf32>
    %102 = arith.subf %96, %101 : vector<8x32xf32>
    %103 = vector.broadcast %100 : vector<8x1xf32> to vector<8x32xf32>
    %104 = arith.subf %96, %103 : vector<8x32xf32>
    %105 = arith.mulf %102, %104 : vector<8x32xf32>
    %cst_47 = arith.constant dense<0.000000e+00> : vector<8xf32>
    %106 = vector.multi_reduction <add>, %105, %cst_47 [1] : vector<8x32xf32> to vector<8xf32>
    %107 = vector.shape_cast %106 : vector<8xf32> to vector<8x1xf32>
    %cst_48 = arith.constant 3.200000e+01 : f32
    %108 = vector.broadcast %cst_48 : f32 to vector<8x1xf32>
    %109 = arith.divf %107, %108 : vector<8x1xf32>
    %110 = vector.broadcast %100 : vector<8x1xf32> to vector<8x32xf32>
    %111 = arith.subf %96, %110 : vector<8x32xf32>
    %cst_49 = arith.constant 9.99999974E-6 : f32
    %112 = vector.broadcast %cst_49 : f32 to vector<8x1xf32>
    %113 = arith.addf %109, %112 : vector<8x1xf32>
    %114 = math.rsqrt %113 : vector<8x1xf32>
    %115 = vector.broadcast %114 : vector<8x1xf32> to vector<8x32xf32>
    %116 = arith.mulf %111, %115 : vector<8x32xf32>
    %117 = vector.broadcast %10 : vector<1x32xf32> to vector<8x32xf32>
    %118 = arith.mulf %116, %117 : vector<8x32xf32>
    %119 = vector.broadcast %12 : vector<1x32xf32> to vector<8x32xf32>
    %120 = arith.addf %118, %119 : vector<8x32xf32>
    %c0_50 = arith.constant 0 : index
    %c0_51 = arith.constant 0 : index
    %c0_52 = arith.constant 0 : index
    %121 = vector.load %arg4[%c0_50, %c0_51, %c0_52] : memref<2x32x128xf32, #tpu.memory_space<vmem>>, vector<1x32x128xf32>
    %122 = vector.shape_cast %121 : vector<1x32x128xf32> to vector<32x128xf32>
    %cst_53 = arith.constant dense<0.000000e+00> : vector<8x128xf32>
    %123 = tpu.matmul %120, %122, %cst_53 {dimension_numbers = #tpu.dot_dimension_numbers<[1], [0], [0], [1], [0, 0, 1, 1], [], []>} : vector<8x32xf32>, vector<32x128xf32>, vector<8x128xf32> -> vector<8x128xf32>
    %124 = vector.broadcast %6 : vector<1x128xf32> to vector<8x128xf32>
    %125 = arith.addf %123, %124 : vector<8x128xf32>
    %126 = arith.mulf %125, %125 : vector<8x128xf32>
    %127 = arith.mulf %125, %126 : vector<8x128xf32>
    %cst_54 = arith.constant 4.471500e-02 : f32
    %128 = vector.broadcast %cst_54 : f32 to vector<8x128xf32>
    %129 = arith.mulf %128, %127 : vector<8x128xf32>
    %130 = arith.addf %125, %129 : vector<8x128xf32>
    %cst_55 = arith.constant 0.797884583 : f32
    %131 = vector.broadcast %cst_55 : f32 to vector<8x128xf32>
    %132 = arith.mulf %131, %130 : vector<8x128xf32>
    %133 = math.tanh %132 : vector<8x128xf32>
    %cst_56 = arith.constant 1.000000e+00 : f32
    %134 = vector.broadcast %cst_56 : f32 to vector<8x128xf32>
    %135 = arith.addf %134, %133 : vector<8x128xf32>
    %cst_57 = arith.constant 5.000000e-01 : f32
    %136 = vector.broadcast %cst_57 : f32 to vector<8x128xf32>
    %137 = arith.mulf %136, %135 : vector<8x128xf32>
    %138 = arith.mulf %125, %137 : vector<8x128xf32>
    %c0_58 = arith.constant 0 : index
    %c0_59 = arith.constant 0 : index
    %c0_60 = arith.constant 0 : index
    %139 = vector.load %arg5[%c0_58, %c0_59, %c0_60] : memref<2x128x32xf32, #tpu.memory_space<vmem>>, vector<1x128x32xf32>
    %140 = vector.shape_cast %139 : vector<1x128x32xf32> to vector<128x32xf32>
    %cst_61 = arith.constant dense<0.000000e+00> : vector<8x32xf32>
    %141 = tpu.matmul %138, %140, %cst_61 {dimension_numbers = #tpu.dot_dimension_numbers<[1], [0], [0], [1], [0, 0, 1, 1], [], []>} : vector<8x128xf32>, vector<128x32xf32>, vector<8x32xf32> -> vector<8x32xf32>
    %142 = vector.broadcast %8 : vector<1x32xf32> to vector<8x32xf32>
    %143 = arith.addf %141, %142 : vector<8x32xf32>
    %144 = arith.addf %120, %143 : vector<8x32xf32>
    %cst_62 = arith.constant dense<0.000000e+00> : vector<8xf32>
    %145 = vector.multi_reduction <add>, %144, %cst_62 [1] : vector<8x32xf32> to vector<8xf32>
    %146 = vector.shape_cast %145 : vector<8xf32> to vector<8x1xf32>
    %cst_63 = arith.constant 3.200000e+01 : f32
    %147 = vector.broadcast %cst_63 : f32 to vector<8x1xf32>
    %148 = arith.divf %146, %147 : vector<8x1xf32>
    %149 = vector.broadcast %148 : vector<8x1xf32> to vector<8x32xf32>
    %150 = arith.subf %144, %149 : vector<8x32xf32>
    %151 = vector.broadcast %148 : vector<8x1xf32> to vector<8x32xf32>
    %152 = arith.subf %144, %151 : vector<8x32xf32>
    %153 = arith.mulf %150, %152 : vector<8x32xf32>
    %cst_64 = arith.constant dense<0.000000e+00> : vector<8xf32>
    %154 = vector.multi_reduction <add>, %153, %cst_64 [1] : vector<8x32xf32> to vector<8xf32>
    %155 = vector.shape_cast %154 : vector<8xf32> to vector<8x1xf32>
    %cst_65 = arith.constant 3.200000e+01 : f32
    %156 = vector.broadcast %cst_65 : f32 to vector<8x1xf32>
    %157 = arith.divf %155, %156 : vector<8x1xf32>
    %158 = vector.broadcast %148 : vector<8x1xf32> to vector<8x32xf32>
    %159 = arith.subf %144, %158 : vector<8x32xf32>
    %cst_66 = arith.constant 9.99999974E-6 : f32
    %160 = vector.broadcast %cst_66 : f32 to vector<8x1xf32>
    %161 = arith.addf %157, %160 : vector<8x1xf32>
    %162 = math.rsqrt %161 : vector<8x1xf32>
    %163 = vector.broadcast %162 : vector<8x1xf32> to vector<8x32xf32>
    %164 = arith.mulf %159, %163 : vector<8x32xf32>
    %165 = vector.broadcast %14 : vector<1x32xf32> to vector<8x32xf32>
    %166 = arith.mulf %164, %165 : vector<8x32xf32>
    %167 = vector.broadcast %16 : vector<1x32xf32> to vector<8x32xf32>
    %168 = arith.addf %166, %167 : vector<8x32xf32>
    %c1_67 = arith.constant 1 : index
    %c0_68 = arith.constant 0 : index
    %c0_69 = arith.constant 0 : index
    %169 = vector.load %arg6[%c1_67, %c0_68, %c0_69] : memref<2x8x128xf32, #tpu.memory_space<vmem>>, vector<1x1x96xf32>
    %170 = vector.shape_cast %169 : vector<1x1x96xf32> to vector<1x96xf32>
    %c1_70 = arith.constant 1 : index
    %c1_71 = arith.constant 1 : index
    %c0_72 = arith.constant 0 : index
    %171 = vector.load %arg6[%c1_70, %c1_71, %c0_72] : memref<2x8x128xf32, #tpu.memory_space<vmem>>, vector<1x1x32xf32>
    %172 = vector.shape_cast %171 : vector<1x1x32xf32> to vector<1x32xf32>
    %c1_73 = arith.constant 1 : index
    %c2_74 = arith.constant 2 : index
    %c0_75 = arith.constant 0 : index
    %173 = vector.load %arg6[%c1_73, %c2_74, %c0_75] : memref<2x8x128xf32, #tpu.memory_space<vmem>>, vector<1x1x128xf32>
    %174 = vector.shape_cast %173 : vector<1x1x128xf32> to vector<1x128xf32>
    %c1_76 = arith.constant 1 : index
    %c3_77 = arith.constant 3 : index
    %c0_78 = arith.constant 0 : index
    %175 = vector.load %arg6[%c1_76, %c3_77, %c0_78] : memref<2x8x128xf32, #tpu.memory_space<vmem>>, vector<1x1x32xf32>
    %176 = vector.shape_cast %175 : vector<1x1x32xf32> to vector<1x32xf32>
    %c1_79 = arith.constant 1 : index
    %c4_80 = arith.constant 4 : index
    %c0_81 = arith.constant 0 : index
    %177 = vector.load %arg6[%c1_79, %c4_80, %c0_81] : memref<2x8x128xf32, #tpu.memory_space<vmem>>, vector<1x1x32xf32>
    %178 = vector.shape_cast %177 : vector<1x1x32xf32> to vector<1x32xf32>
    %c1_82 = arith.constant 1 : index
    %c5_83 = arith.constant 5 : index
    %c0_84 = arith.constant 0 : index
    %179 = vector.load %arg6[%c1_82, %c5_83, %c0_84] : memref<2x8x128xf32, #tpu.memory_space<vmem>>, vector<1x1x32xf32>
    %180 = vector.shape_cast %179 : vector<1x1x32xf32> to vector<1x32xf32>
    %c1_85 = arith.constant 1 : index
    %c6_86 = arith.constant 6 : index
    %c0_87 = arith.constant 0 : index
    %181 = vector.load %arg6[%c1_85, %c6_86, %c0_87] : memref<2x8x128xf32, #tpu.memory_space<vmem>>, vector<1x1x32xf32>
    %182 = vector.shape_cast %181 : vector<1x1x32xf32> to vector<1x32xf32>
    %c1_88 = arith.constant 1 : index
    %c7_89 = arith.constant 7 : index
    %c0_90 = arith.constant 0 : index
    %183 = vector.load %arg6[%c1_88, %c7_89, %c0_90] : memref<2x8x128xf32, #tpu.memory_space<vmem>>, vector<1x1x32xf32>
    %184 = vector.shape_cast %183 : vector<1x1x32xf32> to vector<1x32xf32>
    %c1_91 = arith.constant 1 : index
    %c0_92 = arith.constant 0 : index
    %c0_93 = arith.constant 0 : index
    %185 = vector.load %arg2[%c1_91, %c0_92, %c0_93] : memref<2x32x96xf32, #tpu.memory_space<vmem>>, vector<1x32x96xf32>
    %186 = vector.shape_cast %185 : vector<1x32x96xf32> to vector<32x96xf32>
    %cst_94 = arith.constant dense<0.000000e+00> : vector<8x96xf32>
    %187 = tpu.matmul %168, %186, %cst_94 {dimension_numbers = #tpu.dot_dimension_numbers<[1], [0], [0], [1], [0, 0, 1, 1], [], []>} : vector<8x32xf32>, vector<32x96xf32>, vector<8x96xf32> -> vector<8x96xf32>
    %188 = vector.broadcast %170 : vector<1x96xf32> to vector<8x96xf32>
    %189 = arith.addf %187, %188 : vector<8x96xf32>
    %190 = vector.extract_strided_slice %189 {offsets = [0, 0], sizes = [8, 8], strides = [1, 1]} : vector<8x96xf32> to vector<8x8xf32>
    %191 = vector.extract_strided_slice %189 {offsets = [0, 32], sizes = [8, 8], strides = [1, 1]} : vector<8x96xf32> to vector<8x8xf32>
    %192 = vector.extract_strided_slice %189 {offsets = [0, 64], sizes = [8, 8], strides = [1, 1]} : vector<8x96xf32> to vector<8x8xf32>
    %cst_95 = arith.constant dense<0.000000e+00> : vector<8x8xf32>
    %193 = tpu.matmul %190, %191, %cst_95 {dimension_numbers = #tpu.dot_dimension_numbers<[1], [1], [0], [0], [0, 0, 1, 0], [], []>} : vector<8x8xf32>, vector<8x8xf32>, vector<8x8xf32> -> vector<8x8xf32>
    %cst_96 = arith.constant 0.353553385 : f32
    %194 = vector.broadcast %cst_96 : f32 to vector<8x8xf32>
    %195 = arith.mulf %193, %194 : vector<8x8xf32>
    %cst_97 = arith.constant dense<0xFF800000> : vector<8xf32>
    %196 = vector.multi_reduction <maximumf>, %195, %cst_97 [1] : vector<8x8xf32> to vector<8xf32>
    %197 = vector.shape_cast %196 : vector<8xf32> to vector<8x1xf32>
    %198 = vector.broadcast %197 : vector<8x1xf32> to vector<8x8xf32>
    %199 = arith.subf %195, %198 : vector<8x8xf32>
    %200 = math.exp %199 : vector<8x8xf32>
    %cst_98 = arith.constant dense<0.000000e+00> : vector<8xf32>
    %201 = vector.multi_reduction <add>, %200, %cst_98 [1] : vector<8x8xf32> to vector<8xf32>
    %202 = vector.shape_cast %201 : vector<8xf32> to vector<8x1xf32>
    %203 = tpu.reciprocal %202 {approx = true} : vector<8x1xf32> -> vector<8x1xf32>
    %204 = vector.broadcast %203 : vector<8x1xf32> to vector<8x8xf32>
    %205 = arith.mulf %200, %204 : vector<8x8xf32>
    %cst_99 = arith.constant dense<0.000000e+00> : vector<8x8xf32>
    %206 = tpu.matmul %205, %192, %cst_99 {dimension_numbers = #tpu.dot_dimension_numbers<[1], [0], [0], [1], [0, 0, 1, 1], [], []>} : vector<8x8xf32>, vector<8x8xf32>, vector<8x8xf32> -> vector<8x8xf32>
    %207 = vector.extract_strided_slice %189 {offsets = [0, 8], sizes = [8, 8], strides = [1, 1]} : vector<8x96xf32> to vector<8x8xf32>
    %208 = vector.extract_strided_slice %189 {offsets = [0, 40], sizes = [8, 8], strides = [1, 1]} : vector<8x96xf32> to vector<8x8xf32>
    %209 = vector.extract_strided_slice %189 {offsets = [0, 72], sizes = [8, 8], strides = [1, 1]} : vector<8x96xf32> to vector<8x8xf32>
    %cst_100 = arith.constant dense<0.000000e+00> : vector<8x8xf32>
    %210 = tpu.matmul %207, %208, %cst_100 {dimension_numbers = #tpu.dot_dimension_numbers<[1], [1], [0], [0], [0, 0, 1, 0], [], []>} : vector<8x8xf32>, vector<8x8xf32>, vector<8x8xf32> -> vector<8x8xf32>
    %cst_101 = arith.constant 0.353553385 : f32
    %211 = vector.broadcast %cst_101 : f32 to vector<8x8xf32>
    %212 = arith.mulf %210, %211 : vector<8x8xf32>
    %cst_102 = arith.constant dense<0xFF800000> : vector<8xf32>
    %213 = vector.multi_reduction <maximumf>, %212, %cst_102 [1] : vector<8x8xf32> to vector<8xf32>
    %214 = vector.shape_cast %213 : vector<8xf32> to vector<8x1xf32>
    %215 = vector.broadcast %214 : vector<8x1xf32> to vector<8x8xf32>
    %216 = arith.subf %212, %215 : vector<8x8xf32>
    %217 = math.exp %216 : vector<8x8xf32>
    %cst_103 = arith.constant dense<0.000000e+00> : vector<8xf32>
    %218 = vector.multi_reduction <add>, %217, %cst_103 [1] : vector<8x8xf32> to vector<8xf32>
    %219 = vector.shape_cast %218 : vector<8xf32> to vector<8x1xf32>
    %220 = tpu.reciprocal %219 {approx = true} : vector<8x1xf32> -> vector<8x1xf32>
    %221 = vector.broadcast %220 : vector<8x1xf32> to vector<8x8xf32>
    %222 = arith.mulf %217, %221 : vector<8x8xf32>
    %cst_104 = arith.constant dense<0.000000e+00> : vector<8x8xf32>
    %223 = tpu.matmul %222, %209, %cst_104 {dimension_numbers = #tpu.dot_dimension_numbers<[1], [0], [0], [1], [0, 0, 1, 1], [], []>} : vector<8x8xf32>, vector<8x8xf32>, vector<8x8xf32> -> vector<8x8xf32>
    %224 = vector.extract_strided_slice %189 {offsets = [0, 16], sizes = [8, 8], strides = [1, 1]} : vector<8x96xf32> to vector<8x8xf32>
    %225 = vector.extract_strided_slice %189 {offsets = [0, 48], sizes = [8, 8], strides = [1, 1]} : vector<8x96xf32> to vector<8x8xf32>
    %226 = vector.extract_strided_slice %189 {offsets = [0, 80], sizes = [8, 8], strides = [1, 1]} : vector<8x96xf32> to vector<8x8xf32>
    %cst_105 = arith.constant dense<0.000000e+00> : vector<8x8xf32>
    %227 = tpu.matmul %224, %225, %cst_105 {dimension_numbers = #tpu.dot_dimension_numbers<[1], [1], [0], [0], [0, 0, 1, 0], [], []>} : vector<8x8xf32>, vector<8x8xf32>, vector<8x8xf32> -> vector<8x8xf32>
    %cst_106 = arith.constant 0.353553385 : f32
    %228 = vector.broadcast %cst_106 : f32 to vector<8x8xf32>
    %229 = arith.mulf %227, %228 : vector<8x8xf32>
    %cst_107 = arith.constant dense<0xFF800000> : vector<8xf32>
    %230 = vector.multi_reduction <maximumf>, %229, %cst_107 [1] : vector<8x8xf32> to vector<8xf32>
    %231 = vector.shape_cast %230 : vector<8xf32> to vector<8x1xf32>
    %232 = vector.broadcast %231 : vector<8x1xf32> to vector<8x8xf32>
    %233 = arith.subf %229, %232 : vector<8x8xf32>
    %234 = math.exp %233 : vector<8x8xf32>
    %cst_108 = arith.constant dense<0.000000e+00> : vector<8xf32>
    %235 = vector.multi_reduction <add>, %234, %cst_108 [1] : vector<8x8xf32> to vector<8xf32>
    %236 = vector.shape_cast %235 : vector<8xf32> to vector<8x1xf32>
    %237 = tpu.reciprocal %236 {approx = true} : vector<8x1xf32> -> vector<8x1xf32>
    %238 = vector.broadcast %237 : vector<8x1xf32> to vector<8x8xf32>
    %239 = arith.mulf %234, %238 : vector<8x8xf32>
    %cst_109 = arith.constant dense<0.000000e+00> : vector<8x8xf32>
    %240 = tpu.matmul %239, %226, %cst_109 {dimension_numbers = #tpu.dot_dimension_numbers<[1], [0], [0], [1], [0, 0, 1, 1], [], []>} : vector<8x8xf32>, vector<8x8xf32>, vector<8x8xf32> -> vector<8x8xf32>
    %241 = vector.extract_strided_slice %189 {offsets = [0, 24], sizes = [8, 8], strides = [1, 1]} : vector<8x96xf32> to vector<8x8xf32>
    %242 = vector.extract_strided_slice %189 {offsets = [0, 56], sizes = [8, 8], strides = [1, 1]} : vector<8x96xf32> to vector<8x8xf32>
    %243 = vector.extract_strided_slice %189 {offsets = [0, 88], sizes = [8, 8], strides = [1, 1]} : vector<8x96xf32> to vector<8x8xf32>
    %cst_110 = arith.constant dense<0.000000e+00> : vector<8x8xf32>
    %244 = tpu.matmul %241, %242, %cst_110 {dimension_numbers = #tpu.dot_dimension_numbers<[1], [1], [0], [0], [0, 0, 1, 0], [], []>} : vector<8x8xf32>, vector<8x8xf32>, vector<8x8xf32> -> vector<8x8xf32>
    %cst_111 = arith.constant 0.353553385 : f32
    %245 = vector.broadcast %cst_111 : f32 to vector<8x8xf32>
    %246 = arith.mulf %244, %245 : vector<8x8xf32>
    %cst_112 = arith.constant dense<0xFF800000> : vector<8xf32>
    %247 = vector.multi_reduction <maximumf>, %246, %cst_112 [1] : vector<8x8xf32> to vector<8xf32>
    %248 = vector.shape_cast %247 : vector<8xf32> to vector<8x1xf32>
    %249 = vector.broadcast %248 : vector<8x1xf32> to vector<8x8xf32>
    %250 = arith.subf %246, %249 : vector<8x8xf32>
    %251 = math.exp %250 : vector<8x8xf32>
    %cst_113 = arith.constant dense<0.000000e+00> : vector<8xf32>
    %252 = vector.multi_reduction <add>, %251, %cst_113 [1] : vector<8x8xf32> to vector<8xf32>
    %253 = vector.shape_cast %252 : vector<8xf32> to vector<8x1xf32>
    %254 = tpu.reciprocal %253 {approx = true} : vector<8x1xf32> -> vector<8x1xf32>
    %255 = vector.broadcast %254 : vector<8x1xf32> to vector<8x8xf32>
    %256 = arith.mulf %251, %255 : vector<8x8xf32>
    %cst_114 = arith.constant dense<0.000000e+00> : vector<8x8xf32>
    %257 = tpu.matmul %256, %243, %cst_114 {dimension_numbers = #tpu.dot_dimension_numbers<[1], [0], [0], [1], [0, 0, 1, 1], [], []>} : vector<8x8xf32>, vector<8x8xf32>, vector<8x8xf32> -> vector<8x8xf32>
    %258 = tpu.concatenate %206, %223, %240, %257 in 1 : vector<8x8xf32>, vector<8x8xf32>, vector<8x8xf32>, vector<8x8xf32> -> vector<8x32xf32>
    %c1_115 = arith.constant 1 : index
    %c0_116 = arith.constant 0 : index
    %c0_117 = arith.constant 0 : index
    %259 = vector.load %arg3[%c1_115, %c0_116, %c0_117] : memref<2x32x32xf32, #tpu.memory_space<vmem>>, vector<1x32x32xf32>
    %260 = vector.shape_cast %259 : vector<1x32x32xf32> to vector<32x32xf32>
    %cst_118 = arith.constant dense<0.000000e+00> : vector<8x32xf32>
    %261 = tpu.matmul %258, %260, %cst_118 {dimension_numbers = #tpu.dot_dimension_numbers<[1], [0], [0], [1], [0, 0, 1, 1], [], []>} : vector<8x32xf32>, vector<32x32xf32>, vector<8x32xf32> -> vector<8x32xf32>
    %262 = vector.broadcast %172 : vector<1x32xf32> to vector<8x32xf32>
    %263 = arith.addf %261, %262 : vector<8x32xf32>
    %264 = arith.addf %168, %263 : vector<8x32xf32>
    %cst_119 = arith.constant dense<0.000000e+00> : vector<8xf32>
    %265 = vector.multi_reduction <add>, %264, %cst_119 [1] : vector<8x32xf32> to vector<8xf32>
    %266 = vector.shape_cast %265 : vector<8xf32> to vector<8x1xf32>
    %cst_120 = arith.constant 3.200000e+01 : f32
    %267 = vector.broadcast %cst_120 : f32 to vector<8x1xf32>
    %268 = arith.divf %266, %267 : vector<8x1xf32>
    %269 = vector.broadcast %268 : vector<8x1xf32> to vector<8x32xf32>
    %270 = arith.subf %264, %269 : vector<8x32xf32>
    %271 = vector.broadcast %268 : vector<8x1xf32> to vector<8x32xf32>
    %272 = arith.subf %264, %271 : vector<8x32xf32>
    %273 = arith.mulf %270, %272 : vector<8x32xf32>
    %cst_121 = arith.constant dense<0.000000e+00> : vector<8xf32>
    %274 = vector.multi_reduction <add>, %273, %cst_121 [1] : vector<8x32xf32> to vector<8xf32>
    %275 = vector.shape_cast %274 : vector<8xf32> to vector<8x1xf32>
    %cst_122 = arith.constant 3.200000e+01 : f32
    %276 = vector.broadcast %cst_122 : f32 to vector<8x1xf32>
    %277 = arith.divf %275, %276 : vector<8x1xf32>
    %278 = vector.broadcast %268 : vector<8x1xf32> to vector<8x32xf32>
    %279 = arith.subf %264, %278 : vector<8x32xf32>
    %cst_123 = arith.constant 9.99999974E-6 : f32
    %280 = vector.broadcast %cst_123 : f32 to vector<8x1xf32>
    %281 = arith.addf %277, %280 : vector<8x1xf32>
    %282 = math.rsqrt %281 : vector<8x1xf32>
    %283 = vector.broadcast %282 : vector<8x1xf32> to vector<8x32xf32>
    %284 = arith.mulf %279, %283 : vector<8x32xf32>
    %285 = vector.broadcast %178 : vector<1x32xf32> to vector<8x32xf32>
    %286 = arith.mulf %284, %285 : vector<8x32xf32>
    %287 = vector.broadcast %180 : vector<1x32xf32> to vector<8x32xf32>
    %288 = arith.addf %286, %287 : vector<8x32xf32>
    %c1_124 = arith.constant 1 : index
    %c0_125 = arith.constant 0 : index
    %c0_126 = arith.constant 0 : index
    %289 = vector.load %arg4[%c1_124, %c0_125, %c0_126] : memref<2x32x128xf32, #tpu.memory_space<vmem>>, vector<1x32x128xf32>
    %290 = vector.shape_cast %289 : vector<1x32x128xf32> to vector<32x128xf32>
    %cst_127 = arith.constant dense<0.000000e+00> : vector<8x128xf32>
    %291 = tpu.matmul %288, %290, %cst_127 {dimension_numbers = #tpu.dot_dimension_numbers<[1], [0], [0], [1], [0, 0, 1, 1], [], []>} : vector<8x32xf32>, vector<32x128xf32>, vector<8x128xf32> -> vector<8x128xf32>
    %292 = vector.broadcast %174 : vector<1x128xf32> to vector<8x128xf32>
    %293 = arith.addf %291, %292 : vector<8x128xf32>
    %294 = arith.mulf %293, %293 : vector<8x128xf32>
    %295 = arith.mulf %293, %294 : vector<8x128xf32>
    %cst_128 = arith.constant 4.471500e-02 : f32
    %296 = vector.broadcast %cst_128 : f32 to vector<8x128xf32>
    %297 = arith.mulf %296, %295 : vector<8x128xf32>
    %298 = arith.addf %293, %297 : vector<8x128xf32>
    %cst_129 = arith.constant 0.797884583 : f32
    %299 = vector.broadcast %cst_129 : f32 to vector<8x128xf32>
    %300 = arith.mulf %299, %298 : vector<8x128xf32>
    %301 = math.tanh %300 : vector<8x128xf32>
    %cst_130 = arith.constant 1.000000e+00 : f32
    %302 = vector.broadcast %cst_130 : f32 to vector<8x128xf32>
    %303 = arith.addf %302, %301 : vector<8x128xf32>
    %cst_131 = arith.constant 5.000000e-01 : f32
    %304 = vector.broadcast %cst_131 : f32 to vector<8x128xf32>
    %305 = arith.mulf %304, %303 : vector<8x128xf32>
    %306 = arith.mulf %293, %305 : vector<8x128xf32>
    %c1_132 = arith.constant 1 : index
    %c0_133 = arith.constant 0 : index
    %c0_134 = arith.constant 0 : index
    %307 = vector.load %arg5[%c1_132, %c0_133, %c0_134] : memref<2x128x32xf32, #tpu.memory_space<vmem>>, vector<1x128x32xf32>
    %308 = vector.shape_cast %307 : vector<1x128x32xf32> to vector<128x32xf32>
    %cst_135 = arith.constant dense<0.000000e+00> : vector<8x32xf32>
    %309 = tpu.matmul %306, %308, %cst_135 {dimension_numbers = #tpu.dot_dimension_numbers<[1], [0], [0], [1], [0, 0, 1, 1], [], []>} : vector<8x128xf32>, vector<128x32xf32>, vector<8x32xf32> -> vector<8x32xf32>
    %310 = vector.broadcast %176 : vector<1x32xf32> to vector<8x32xf32>
    %311 = arith.addf %309, %310 : vector<8x32xf32>
    %312 = arith.addf %288, %311 : vector<8x32xf32>
    %cst_136 = arith.constant dense<0.000000e+00> : vector<8xf32>
    %313 = vector.multi_reduction <add>, %312, %cst_136 [1] : vector<8x32xf32> to vector<8xf32>
    %314 = vector.shape_cast %313 : vector<8xf32> to vector<8x1xf32>
    %cst_137 = arith.constant 3.200000e+01 : f32
    %315 = vector.broadcast %cst_137 : f32 to vector<8x1xf32>
    %316 = arith.divf %314, %315 : vector<8x1xf32>
    %317 = vector.broadcast %316 : vector<8x1xf32> to vector<8x32xf32>
    %318 = arith.subf %312, %317 : vector<8x32xf32>
    %319 = vector.broadcast %316 : vector<8x1xf32> to vector<8x32xf32>
    %320 = arith.subf %312, %319 : vector<8x32xf32>
    %321 = arith.mulf %318, %320 : vector<8x32xf32>
    %cst_138 = arith.constant dense<0.000000e+00> : vector<8xf32>
    %322 = vector.multi_reduction <add>, %321, %cst_138 [1] : vector<8x32xf32> to vector<8xf32>
    %323 = vector.shape_cast %322 : vector<8xf32> to vector<8x1xf32>
    %cst_139 = arith.constant 3.200000e+01 : f32
    %324 = vector.broadcast %cst_139 : f32 to vector<8x1xf32>
    %325 = arith.divf %323, %324 : vector<8x1xf32>
    %326 = vector.broadcast %316 : vector<8x1xf32> to vector<8x32xf32>
    %327 = arith.subf %312, %326 : vector<8x32xf32>
    %cst_140 = arith.constant 9.99999974E-6 : f32
    %328 = vector.broadcast %cst_140 : f32 to vector<8x1xf32>
    %329 = arith.addf %325, %328 : vector<8x1xf32>
    %330 = math.rsqrt %329 : vector<8x1xf32>
    %331 = vector.broadcast %330 : vector<8x1xf32> to vector<8x32xf32>
    %332 = arith.mulf %327, %331 : vector<8x32xf32>
    %333 = vector.broadcast %182 : vector<1x32xf32> to vector<8x32xf32>
    %334 = arith.mulf %332, %333 : vector<8x32xf32>
    %335 = vector.broadcast %184 : vector<1x32xf32> to vector<8x32xf32>
    %336 = arith.addf %334, %335 : vector<8x32xf32>
    %c0_141 = arith.constant 0 : index
    %c0_142 = arith.constant 0 : index
    %337 = vector.load %arg7[%c0_141, %c0_142] : memref<8x32xf32, #tpu.memory_space<vmem>>, vector<8x32xf32>
    tpu.vector_store %arg7[%c0_141, %c0_142], %336 {strides = array<i32>} : memref<8x32xf32, #tpu.memory_space<vmem>>, vector<8x32xf32>,
    return
  }
  func.func @transform_0(%arg0: i32) -> (i32, i32) {
    %c0_i32 = arith.constant 0 : i32
    %c0_i32_0 = arith.constant 0 : i32
    return %arg0, %c0_i32 : i32, i32
  }
  func.func @transform_1(%arg0: i32) -> (i32, i32, i32) {
    %c0_i32 = arith.constant 0 : i32
    %c0_i32_0 = arith.constant 0 : i32
    %c0_i32_1 = arith.constant 0 : i32
    %c0_i32_2 = arith.constant 0 : i32
    return %c0_i32, %c0_i32_0, %c0_i32_1 : i32, i32, i32
  }
  func.func @transform_2(%arg0: i32) -> (i32, i32, i32) {
    %c0_i32 = arith.constant 0 : i32
    %c0_i32_0 = arith.constant 0 : i32
    %c0_i32_1 = arith.constant 0 : i32
    %c0_i32_2 = arith.constant 0 : i32
    return %c0_i32, %c0_i32_0, %c0_i32_1 : i32, i32, i32
  }
  func.func @transform_3(%arg0: i32) -> (i32, i32, i32) {
    %c0_i32 = arith.constant 0 : i32
    %c0_i32_0 = arith.constant 0 : i32
    %c0_i32_1 = arith.constant 0 : i32
    %c0_i32_2 = arith.constant 0 : i32
    return %c0_i32, %c0_i32_0, %c0_i32_1 : i32, i32, i32
  }
  func.func @transform_4(%arg0: i32) -> (i32, i32, i32) {
    %c0_i32 = arith.constant 0 : i32
    %c0_i32_0 = arith.constant 0 : i32
    %c0_i32_1 = arith.constant 0 : i32
    %c0_i32_2 = arith.constant 0 : i32
    return %c0_i32, %c0_i32_0, %c0_i32_1 : i32, i32, i32
  }
  func.func @transform_5(%arg0: i32) -> (i32, i32, i32) {
    %c0_i32 = arith.constant 0 : i32
    %c0_i32_0 = arith.constant 0 : i32
    %c0_i32_1 = arith.constant 0 : i32
    %c0_i32_2 = arith.constant 0 : i32
    return %c0_i32, %c0_i32_0, %c0_i32_1 : i32, i32, i32
  }
  func.func @transform_6(%arg0: i32) -> (i32, i32) {
    %c0_i32 = arith.constant 0 : i32
    %c0_i32_0 = arith.constant 0 : i32
    return %arg0, %c0_i32 : i32, i32
  }
}

</mosaic_0001>

<llo_original>
// kernel: transformer_forward.1
$region0: #{transformer_forward.1}
  #allocation0 [shape = 'u32[]', space=smem, size = 0x4, offset = 0x4, fixed_abs, tag = 'smem constant byte address 0x4 - core index']
  #allocation1 [shape = 'u32[144,128]{1,0:T(1,128)}', space=vmem, size = 0x12000, scoped, tag = 'internal scratch']
  %s0 = inlined_call_operand.vmem [shape: f32[16,32], index: 0, kind: input, shape index: {}]
  %s1 = inlined_call_operand.vmem [shape: f32[2,32,96], index: 1, kind: input, shape index: {}]
  %s2 = inlined_call_operand.vmem [shape: f32[2,32,32], index: 2, kind: input, shape index: {}]
  %s3 = inlined_call_operand.vmem [shape: f32[2,32,128], index: 3, kind: input, shape index: {}]
  %s4 = inlined_call_operand.vmem [shape: f32[2,128,32], index: 4, kind: input, shape index: {}]
  %s5 = inlined_call_operand.vmem [shape: f32[2,8,128], index: 5, kind: input, shape index: {}]
  %s6 = inlined_call_operand.hbm [shape: f32[16,32], index: 6, kind: output, shape index: {}]
  %s7 = sld [smem:[#allocation0]]
  $region57: #{transformer_forward.1} parent=0
    _
  %s9 = ssub.s32 1, %s7
  %s10 = scalar_select 0, %s9, %s7
  $region1: #{transformer_forward.1} parent=0
    #allocation2 [shape = 'u8[8192]{0}', space=vmem, size = 0x2000, scoped, tag = 'output window, operand 0']
    #allocation3 [shape = 's32[2]{0}', space=sflag, size = 0x8, scoped, tag = 'scoped memory for transformer_forward.1']
    %11 = vsyncpa [#allocation3], 0
    %s12 = scalar_lea.sflag [#allocation3], 1
    %13 = vsyncpa %s12, 0
    loop: start=0, step=1, limit=4
    $region2: #{transformer_forward.1} parent=1 // loop_pre_header
      _
    $region3: #{transformer_forward.1} parent=1 // loop_header
      %s15 = sphi 0, %s19
      %p16 = scmp.ge.s32.totalorder %s15, 4
      %s25 = sphi 0, %s27
      %s28 = sphi 0, %s25
      %s29 = sphi 0, %s28
      %s45 = sphi 0, %s29
      %s49 = sphi 0, %s49
      %s51 = sphi 0, %s49
      %s52 = sphi 0, %s51
      %s66 = sphi 0, %s52
      %s70 = sphi 0, %s70
      %s72 = sphi 0, %s70
      %s73 = sphi 0, %s72
      %s87 = sphi 0, %s73
      %s91 = sphi 0, %s91
      %s93 = sphi 0, %s91
      %s94 = sphi 0, %s93
      %s108 = sphi 0, %s94
      %s112 = sphi 0, %s112
      %s114 = sphi 0, %s112
      %s115 = sphi 0, %s114
      %s129 = sphi 0, %s115
      %s133 = sphi 0, %s133
      %s135 = sphi 0, %s133
      %s136 = sphi 0, %s135
      %s150 = sphi 0, %s136
      %s156 = sphi 0, %s158
      %s159 = sphi 0, %s156
      %s160 = sphi 0, %s159
      %s176 = sphi 0, %s160
    $region4: #{transformer_forward.1} parent=1 // loop_header_branch
      %18 = sbr.rel (%p16) target = $region8
    $region5: #{transformer_forward.1} parent=1 // loop_body
      %s20 = ssub.s32 %s15, 1
      %s21 = ssub.s32 %s15, 2
      %s22 = sadd.s32 %s15, 1
      %s23 = ssub.s32 %s15, %s22
      %p24 = scmp.eq.s32.totalorder %s23, 0
      %s26 = sadd.s32 %s25, 1
      %s27 = scalar_select %p24, %s25, %s26
      %p30 = pneg %p24
      %p31 = scmp.eq.s32.totalorder %s15, 1
      %p32 = por %p30, %p31
      %p33 = scmp.ne.s32.totalorder %s25, %s28
      %p34 = scmp.eq.s32.totalorder %s15, 0
      %p35 = por %p33, %p34
      %p36 = scmp.ne.s32.totalorder %s25, %s28
      %p37 = scmp.eq.s32.totalorder %s20, 1
      %p38 = por %p36, %p37
      %p39 = scmp.ne.s32.totalorder %s28, %s29
      %p40 = scmp.eq.s32.totalorder %s20, 0
      %p41 = por %p39, %p40
      %p42 = scmp.ne.s32.totalorder %s28, %s29
      %p43 = scmp.eq.s32.totalorder %s21, 1
      %p44 = por %p42, %p43
      %p46 = scmp.ne.s32.totalorder %s29, %s45
      %p47 = scmp.eq.s32.totalorder %s21, 0
      %p48 = por %p46, %p47
      %s50 = sadd.s32 %s49, 1
      %p53 = scmp.eq.s32.totalorder %s15, 1
      %p54 = scmp.ne.s32.totalorder %s49, %s51
      %p55 = scmp.eq.s32.totalorder %s15, 0
      %p56 = por %p54, %p55
      %p57 = scmp.ne.s32.totalorder %s49, %s51
      %p58 = scmp.eq.s32.totalorder %s20, 1
      %p59 = por %p57, %p58
      %p60 = scmp.ne.s32.totalorder %s51, %s52
      %p61 = scmp.eq.s32.totalorder %s20, 0
      %p62 = por %p60, %p61
      %p63 = scmp.ne.s32.totalorder %s51, %s52
      %p64 = scmp.eq.s32.totalorder %s21, 1
      %p65 = por %p63, %p64
      %p67 = scmp.ne.s32.totalorder %s52, %s66
      %p68 = scmp.eq.s32.totalorder %s21, 0
      %p69 = por %p67, %p68
      %s71 = sadd.s32 %s70, 1
      %p74 = scmp.eq.s32.totalorder %s15, 1
      %p75 = scmp.ne.s32.totalorder %s70, %s72
      %p76 = scmp.eq.s32.totalorder %s15, 0
      %p77 = por %p75, %p76
      %p78 = scmp.ne.s32.totalorder %s70, %s72
      %p79 = scmp.eq.s32.totalorder %s20, 1
      %p80 = por %p78, %p79
      %p81 = scmp.ne.s32.totalorder %s72, %s73
      %p82 = scmp.eq.s32.totalorder %s20, 0
      %p83 = por %p81, %p82
      %p84 = scmp.ne.s32.totalorder %s72, %s73
      %p85 = scmp.eq.s32.totalorder %s21, 1
      %p86 = por %p84, %p85
      %p88 = scmp.ne.s32.totalorder %s73, %s87
      %p89 = scmp.eq.s32.totalorder %s21, 0
      %p90 = por %p88, %p89
      %s92 = sadd.s32 %s91, 1
      %p95 = scmp.eq.s32.totalorder %s15, 1
      %p96 = scmp.ne.s32.totalorder %s91, %s93
      %p97 = scmp.eq.s32.totalorder %s15, 0
      %p98 = por %p96, %p97
      %p99 = scmp.ne.s32.totalorder %s91, %s93
      %p100 = scmp.eq.s32.totalorder %s20, 1
      %p101 = por %p99, %p100
      %p102 = scmp.ne.s32.totalorder %s93, %s94
      %p103 = scmp.eq.s32.totalorder %s20, 0
      %p104 = por %p102, %p103
      %p105 = scmp.ne.s32.totalorder %s93, %s94
      %p106 = scmp.eq.s32.totalorder %s21, 1
      %p107 = por %p105, %p106
      %p109 = scmp.ne.s32.totalorder %s94, %s108
      %p110 = scmp.eq.s32.totalorder %s21, 0
      %p111 = por %p109, %p110
      %s113 = sadd.s32 %s112, 1
      %p116 = scmp.eq.s32.totalorder %s15, 1
      %p117 = scmp.ne.s32.totalorder %s112, %s114
      %p118 = scmp.eq.s32.totalorder %s15, 0
      %p119 = por %p117, %p118
      %p120 = scmp.ne.s32.totalorder %s112, %s114
      %p121 = scmp.eq.s32.totalorder %s20, 1
      %p122 = por %p120, %p121
      %p123 = scmp.ne.s32.totalorder %s114, %s115
      %p124 = scmp.eq.s32.totalorder %s20, 0
      %p125 = por %p123, %p124
      %p126 = scmp.ne.s32.totalorder %s114, %s115
      %p127 = scmp.eq.s32.totalorder %s21, 1
      %p128 = por %p126, %p127
      %p130 = scmp.ne.s32.totalorder %s115, %s129
      %p131 = scmp.eq.s32.totalorder %s21, 0
      %p132 = por %p130, %p131
      %s134 = sadd.s32 %s133, 1
      %p137 = scmp.eq.s32.totalorder %s15, 1
      %p138 = scmp.ne.s32.totalorder %s133, %s135
      %p139 = scmp.eq.s32.totalorder %s15, 0
      %p140 = por %p138, %p139
      %p141 = scmp.ne.s32.totalorder %s133, %s135
      %p142 = scmp.eq.s32.totalorder %s20, 1
      %p143 = por %p141, %p142
      %p144 = scmp.ne.s32.totalorder %s135, %s136
      %p145 = scmp.eq.s32.totalorder %s20, 0
      %p146 = por %p144, %p145
      %p147 = scmp.ne.s32.totalorder %s135, %s136
      %p148 = scmp.eq.s32.totalorder %s21, 1
      %p149 = por %p147, %p148
      %p151 = scmp.ne.s32.totalorder %s136, %s150
      %p152 = scmp.eq.s32.totalorder %s21, 0
      %p153 = por %p151, %p152
      %s154 = ssub.s32 %s15, %s22
      %p155 = scmp.eq.s32.totalorder %s154, 0
      %s157 = sadd.s32 %s156, 1
      %s158 = scalar_select %p155, %s156, %s157
      %p161 = pneg %p155
      %p162 = scmp.eq.s32.totalorder %s15, 1
      %p163 = por %p161, %p162
      %p164 = scmp.ne.s32.totalorder %s156, %s159
      %p165 = scmp.eq.s32.totalorder %s15, 0
      %p166 = por %p164, %p165
      %p167 = scmp.ne.s32.totalorder %s156, %s159
      %p168 = scmp.eq.s32.totalorder %s20, 1
      %p169 = por %p167, %p168
      %p170 = scmp.ne.s32.totalorder %s159, %s160
      %p171 = scmp.eq.s32.totalorder %s20, 0
      %p172 = por %p170, %p171
      %p173 = scmp.ne.s32.totalorder %s159, %s160
      %p174 = scmp.eq.s32.totalorder %s21, 1
      %p175 = por %p173, %p174
      %p177 = scmp.ne.s32.totalorder %s160, %s176
      %p178 = scmp.eq.s32.totalorder %s21, 0
      %p179 = por %p177, %p178
      %p180 = scmp.le.s32.totalorder 1, %s15
      %p181 = scmp.lt.s32.totalorder %s15, 3
      %p182 = pnand %p180, %p181
      %p183 = pneg %p182
      // Predicated region
      $region9: #{transformer_forward.1} parent=5 // pred_check
        _
      $region10: #{transformer_forward.1} parent=5 // pred_check_branch
        %185 = sbr.rel (%p182) target = $region12
      $region11: #{transformer_forward.1} parent=5 // pred_region
        %s186 = ssub.s32 %s15, 1
        // Predicated region
        $region13: #{transformer_forward.1} parent=11 // pred_check
          %p187 = pneg %p62
        $region14: #{transformer_forward.1} parent=11 // pred_check_branch
          %189 = sbr.rel (%p187) target = $region16
        $region15: #{transformer_forward.1} parent=11 // pred_region
          _
        $region16: #{transformer_forward.1} parent=11 // pred_fallthru
          _
        // Predicated region
        $region17: #{transformer_forward.1} parent=11 // pred_check
          %p190 = pneg %p83
        $region18: #{transformer_forward.1} parent=11 // pred_check_branch
          %192 = sbr.rel (%p190) target = $region20
        $region19: #{transformer_forward.1} parent=11 // pred_region
          _
        $region20: #{transformer_forward.1} parent=11 // pred_fallthru
          _
        // Predicated region
        $region21: #{transformer_forward.1} parent=11 // pred_check
          %p193 = pneg %p104
        $region22: #{transformer_forward.1} parent=11 // pred_check_branch
          %195 = sbr.rel (%p193) target = $region24
        $region23: #{transformer_forward.1} parent=11 // pred_region
          _
        $region24: #{transformer_forward.1} parent=11 // pred_fallthru
          _
        // Predicated region
        $region25: #{transformer_forward.1} parent=11 // pred_check
          %p196 = pneg %p125
        $region26: #{transformer_forward.1} parent=11 // pred_check_branch
          %198 = sbr.rel (%p196) target = $region28
        $region27: #{transformer_forward.1} parent=11 // pred_region
          _
        $region28: #{transformer_forward.1} parent=11 // pred_fallthru
          _
        // Predicated region
        $region29: #{transformer_forward.1} parent=11 // pred_check
          %p199 = pneg %p146
        $region30: #{transformer_forward.1} parent=11 // pred_check_branch
          %201 = sbr.rel (%p199) target = $region32
        $region31: #{transformer_forward.1} parent=11 // pred_region
          _
        $region32: #{transformer_forward.1} parent=11 // pred_fallthru
          _
      $region12: #{transformer_forward.1} parent=5 // pred_fallthru
        _
      %p202 = scmp.lt.s32.totalorder %s15, 2
      // Predicated region
      $region33: #{transformer_forward.1} parent=5 // pred_check
        %p203 = pneg %p202
      $region34: #{transformer_forward.1} parent=5 // pred_check_branch
        %205 = sbr.rel (%p203) target = $region36
      $region35: #{transformer_forward.1} parent=5 // pred_region
        // Predicated region
        $region37: #{transformer_forward.1} parent=35 // pred_check
          %p206 = pneg %p35
        $region38: #{transformer_forward.1} parent=35 // pred_check_branch
          %208 = sbr.rel (%p206) target = $region40
        $region39: #{transformer_forward.1} parent=35 // pred_region
          %p209 = scmp.lt.s32.totalorder %s15, 1
          %s210 = scalar_select %p209, %s15, 1
          %s211 = smul.addr %s210, 8
          %s212 = scalar_lea.vmem %s0, %s211
        $region40: #{transformer_forward.1} parent=35 // pred_fallthru
          _
      $region36: #{transformer_forward.1} parent=5 // pred_fallthru
        _
      %p213 = scmp.le.s32.totalorder 1, %s15
      %p214 = scmp.lt.s32.totalorder %s15, 3
      %p215 = pnand %p213, %p214
      %p216 = pneg %p215
      // Predicated region
      $region41: #{transformer_forward.1} parent=5 // pred_check
        _
      $region42: #{transformer_forward.1} parent=5 // pred_check_branch
        %218 = sbr.rel (%p215) target = $region44
      $region43: #{transformer_forward.1} parent=5 // pred_region
        %s219 = ssub.s32 %s15, 1
        %p220 = scmp.lt.s32.totalorder %s20, 1
        %s221 = scalar_select %p220, %s20, 1
        %s222 = smul.addr %s221, 8
        %s223 = scalar_lea.vmem %s0, %s222
        %p224 = pneg %p41
        %p225 = pneg %p38
        %p226 = pneg %p62
        %p227 = pneg %p59
        %p228 = pneg %p83
        %p229 = pneg %p80
        %p230 = pneg %p104
        %p231 = pneg %p101
        %p232 = pneg %p125
        %p233 = pneg %p122
        %p234 = pneg %p146
        %p235 = pneg %p143
        %p236 = pneg %p172
        %p237 = pneg %p169
        %s238 = sand.u32 %s159, 1
        %s239 = scalar_lea.sflag [#allocation3], %s238
        %s240 = sand.u32 %s159, 1
        %s241 = smul.addr %s240, 8
        %s242 = scalar_lea.vmem [#allocation2], %s241
        %p243 = scmp.lt.s32.totalorder %s20, 1
        %s244 = scalar_select %p243, %s20, 1
        %s245 = smul.addr %s244, 8
        %s246 = scalar_lea.vmem %s0, %s245
        %v247 = vld [vmem:[%s246] sm:$0xff]
        %v248 = vld [vmem:[%s5] sm:$0x1]
        %v249 = vld [vmem:[%s5 + $0x1] sm:$0x1]
        %v250 = vld [vmem:[%s5 + $0x2] sm:$0x1]
        %v251 = vld [vmem:[%s5 + $0x3] sm:$0x1]
        %v252 = vld [vmem:[%s5 + $0x4] sm:$0x1]
        %v253 = vld [vmem:[%s5 + $0x5] sm:$0x1]
        %v254 = vld [vmem:[%s5 + $0x6] sm:$0x1]
        %v255 = vld [vmem:[%s5 + $0x7] sm:$0x1]
        %v256 = vld [vmem:[%s1] sm:$0xff]
        %v257 = vld [vmem:[%s1 + $0x8] sm:$0xff]
        %v258 = vld [vmem:[%s1 + $0x10] sm:$0xff]
        %v259 = vld [vmem:[%s1 + $0x18] sm:$0xff]
        %v260 = vlaneseq
        %v261 = vshrl.u32 %v260, 7
        %v262 = vsub.s32 0, %v261
        %v263 = vrot.slane %v248, %v262
        %vm264 = vcmask 261120
        %v266 = vsel %vm264, %v247, 0
        %268 = vmatprep.subr.mxu0 0.0
        %269 = vmatpush1.msra.mxu0 %v256
        %270 = vmatprep.subr.mxu0 0.0
        %271 = vmatpush1.msra.mxu0 %v257
        %272 = vmatprep.subr.mxu0 0.0
        %273 = vmatpush1.msra.mxu0 %v258
        %274 = vmatprep.subr.mxu0 0.0
        %275 = vmatpush1.msra.mxu0 %v259
        %276 = vmatprep.subr.mxu0 0.0
        %277 = vmatpush1.msra.mxu0 0.0
        %278 = vmatprep.subr.mxu0 0.0
        %279 = vmatpush1.msra.mxu0 0.0
        %280 = vmatprep.subr.mxu0 0.0
        %281 = vmatpush1.msra.mxu0 0.0
        %282 = vmatprep.subr.mxu0 0.0
        %283 = vmatpush1.msra.mxu0 0.0
        %284 = vmatprep.subr.mxu0 0.0
        %285 = vmatpush1.msra.mxu0 0.0
        %286 = vmatprep.subr.mxu0 0.0
        %287 = vmatpush1.msra.mxu0 0.0
        %288 = vmatprep.subr.mxu0 0.0
        %289 = vmatpush1.msra.mxu0 0.0
        %290 = vmatprep.subr.mxu0 0.0
        %291 = vmatpush1.msra.mxu0 0.0
        %292 = vmatprep.subr.mxu0 0.0
        %293 = vmatpush1.msra.mxu0 0.0
        %294 = vmatprep.subr.mxu0 0.0
        %295 = vmatpush1.msra.mxu0 0.0
        %296 = vmatprep.subr.mxu0 0.0
        %297 = vmatpush1.msra.mxu0 0.0
        %298 = vmatprep.subr.mxu0 0.0
        %299 = vmatpush1.msra.mxu0 0.0
        %300 = vmatprep.subr.mxu0 0.0
        %301 = vmatpush1.msra.mxu0 0.0
        %302 = vmatprep.subr.mxu0 0.0
        %303 = vmatpush1.msra.mxu0 0.0
        %304 = vmatprep.subr.mxu0 0.0
        %305 = vmatpush1.msra.mxu0 0.0
        %306 = vmatprep.subr.mxu0 0.0
        %307 = vmatpush1.msra.mxu0 0.0
        %308 = vmatprep.subr.mxu0 0.0
        %309 = vmatpush1.msra.mxu0 0.0
        %310 = vmatprep.subr.mxu0 0.0
        %311 = vmatpush1.msra.mxu0 0.0
        %312 = vmatprep.subr.mxu0 0.0
        %313 = vmatpush1.msra.mxu0 0.0
        %314 = vmatprep.subr.mxu0 0.0
        %315 = vmatpush1.msra.mxu0 0.0
        %316 = vmatprep.subr.mxu0 0.0
        %317 = vmatpush1.msra.mxu0 0.0
        %318 = vmatprep.subr.mxu0 0.0
        %319 = vmatpush1.msra.mxu0 0.0
        %320 = vmatprep.subr.mxu0 0.0
        %321 = vmatpush1.msra.mxu0 0.0
        %322 = vmatprep.subr.mxu0 0.0
        %323 = vmatpush1.msra.mxu0 0.0
        %324 = vmatprep.subr.mxu0 0.0
        %325 = vmatpush1.msra.mxu0 0.0
        %326 = vmatprep.subr.mxu0 0.0
        %327 = vmatpush1.msra.mxu0 0.0
        %328 = vmatprep.subr.mxu0 0.0
        %329 = vmatpush1.msra.mxu0 0.0
        %330 = vmatprep.subr.mxu0 0.0
        %331 = vmatpush1.msra.mxu0 0.0
        %332 = vmatprep.mubr.f32.mxu0 0.0
        %333 = vmatmul.mubr.f32.gmra.mrb[0].mxu0 %v266
        %v334 = vpop.f32.mrb[0].mxu0
        %v335 = vadd.f32 %v263, %v334
        %v336 = vpop.f32.mrb[0].mxu0
        %337 = vdwg.mxu0
        %339 = vrot.lane.b32.xlu0 %v335, 96
        %v340 = vpop.permute.xlu0 %339
        %vm341 = vcmask 64512
        %v342 = vsel %vm341, %v335, 0
        %v344 = vsel %vm341, %v340, 0
        %346 = vmatprep.subr.mxu0 0.0
        %347 = vmatpush1.xpose.msra.mxu0 %v344
        %348 = vmatprep.subr.mxu0 0.0
        %349 = vmatpush1.xpose.msra.mxu0 0.0
        %350 = vmatprep.subr.mxu0 0.0
        %351 = vmatpush1.xpose.msra.mxu0 0.0
        %352 = vmatprep.subr.mxu0 0.0
        %353 = vmatpush1.xpose.msra.mxu0 0.0
        %354 = vmatprep.subr.mxu0 0.0
        %355 = vmatpush1.xpose.msra.mxu0 0.0
        %356 = vmatprep.subr.mxu0 0.0
        %357 = vmatpush1.xpose.msra.mxu0 0.0
        %358 = vmatprep.subr.mxu0 0.0
        %359 = vmatpush1.xpose.msra.mxu0 0.0
        %360 = vmatprep.subr.mxu0 0.0
        %361 = vmatpush1.xpose.msra.mxu0 0.0
        %362 = vmatprep.subr.mxu0 0.0
        %363 = vmatpush1.xpose.msra.mxu0 0.0
        %364 = vmatprep.subr.mxu0 0.0
        %365 = vmatpush1.xpose.msra.mxu0 0.0
        %366 = vmatprep.subr.mxu0 0.0
        %367 = vmatpush1.xpose.msra.mxu0 0.0
        %368 = vmatprep.subr.mxu0 0.0
        %369 = vmatpush1.xpose.msra.mxu0 0.0
        %370 = vmatprep.subr.mxu0 0.0
        %371 = vmatpush1.xpose.msra.mxu0 0.0
        %372 = vmatprep.subr.mxu0 0.0
        %373 = vmatpush1.xpose.msra.mxu0 0.0
        %374 = vmatprep.subr.mxu0 0.0
        %375 = vmatpush1.xpose.msra.mxu0 0.0
        %376 = vmatprep.subr.mxu0 0.0
        %377 = vmatpush1.xpose.msra.mxu0 0.0
        %378 = vmatprep.subr.mxu0 0.0
        %379 = vmatpush1.xpose.msra.mxu0 0.0
        %380 = vmatprep.subr.mxu0 0.0
        %381 = vmatpush1.xpose.msra.mxu0 0.0
        %382 = vmatprep.subr.mxu0 0.0
        %383 = vmatpush1.xpose.msra.mxu0 0.0
        %384 = vmatprep.subr.mxu0 0.0
        %385 = vmatpush1.xpose.msra.mxu0 0.0
        %386 = vmatprep.subr.mxu0 0.0
        %387 = vmatpush1.xpose.msra.mxu0 0.0
        %388 = vmatprep.subr.mxu0 0.0
        %389 = vmatpush1.xpose.msra.mxu0 0.0
        %390 = vmatprep.subr.mxu0 0.0
        %391 = vmatpush1.xpose.msra.mxu0 0.0
        %392 = vmatprep.subr.mxu0 0.0
        %393 = vmatpush1.xpose.msra.mxu0 0.0
        %394 = vmatprep.subr.mxu0 0.0
        %395 = vmatpush1.xpose.msra.mxu0 0.0
        %396 = vmatprep.subr.mxu0 0.0
        %397 = vmatpush1.xpose.msra.mxu0 0.0
        %398 = vmatprep.subr.mxu0 0.0
        %399 = vmatpush1.xpose.msra.mxu0 0.0
        %400 = vmatprep.subr.mxu0 0.0
        %401 = vmatpush1.xpose.msra.mxu0 0.0
        %402 = vmatprep.subr.mxu0 0.0
        %403 = vmatpush1.xpose.msra.mxu0 0.0
        %404 = vmatprep.subr.mxu0 0.0
        %405 = vmatpush1.xpose.msra.mxu0 0.0
        %406 = vmatprep.subr.mxu0 0.0
        %407 = vmatpush1.xpose.msra.mxu0 0.0
        %408 = vmatprep.subr.mxu0 0.0
        %409 = vmatpush1.xpose.msra.mxu0 0.0
        %410 = vmatprep.mubr.f32.mxu0 0.0
        %411 = vmatmul.mubr.f32.gmra.mrb[0].mxu0 %v342
        %v412 = vpop.f32.mrb[0].mxu0
        %v413 = vadd.f32 0.0, %v412
        %v414 = vpop.f32.mrb[0].mxu0
        %415 = vdwg.mxu0
        %v416 = vmul.f32 %v413, 0.35355338
        %v417 = vsel %vm341, %v416, -inf
        %418 = vmax.xlane.f32.xlu0 %v417
        %v419 = vpop.xlane.xlu0 %418
        %v420 = vsub.f32 %v416, %v419
        %v421 = vmul.f32 %v420, 1.442695
        %v422 = vpow.pop %v421
        %v423 = vsel %vm341, %v422, 0.0
        %424 = vadd.xlane.f32.xlu0 %v423
        %v425 = vpop.xlane.xlu0 %424
        %v426 = vrcp.pop %v425
        %v427 = vmul.f32 %v422, %v426
        %428 = vrot.lane.b32.xlu0 %v335, 64
        %v429 = vpop.permute.xlu0 %428
        %v432 = vsel %vm341, %v427, 0
        %434 = vmatprep.subr.mxu0 0.0
        %435 = vmatpush1.msra.mxu0 %v429
        %436 = vmatprep.subr.mxu0 0.0
        %437 = vmatpush1.msra.mxu0 0.0
        %438 = vmatprep.subr.mxu0 0.0
        %439 = vmatpush1.msra.mxu0 0.0
        %440 = vmatprep.subr.mxu0 0.0
        %441 = vmatpush1.msra.mxu0 0.0
        %442 = vmatprep.subr.mxu0 0.0
        %443 = vmatpush1.msra.mxu0 0.0
        %444 = vmatprep.subr.mxu0 0.0
        %445 = vmatpush1.msra.mxu0 0.0
        %446 = vmatprep.subr.mxu0 0.0
        %447 = vmatpush1.msra.mxu0 0.0
        %448 = vmatprep.subr.mxu0 0.0
        %449 = vmatpush1.msra.mxu0 0.0
        %450 = vmatprep.subr.mxu0 0.0
        %451 = vmatpush1.msra.mxu0 0.0
        %452 = vmatprep.subr.mxu0 0.0
        %453 = vmatpush1.msra.mxu0 0.0
        %454 = vmatprep.subr.mxu0 0.0
        %455 = vmatpush1.msra.mxu0 0.0
        %456 = vmatprep.subr.mxu0 0.0
        %457 = vmatpush1.msra.mxu0 0.0
        %458 = vmatprep.subr.mxu0 0.0
        %459 = vmatpush1.msra.mxu0 0.0
        %460 = vmatprep.subr.mxu0 0.0
        %461 = vmatpush1.msra.mxu0 0.0
        %462 = vmatprep.subr.mxu0 0.0
        %463 = vmatpush1.msra.mxu0 0.0
        %464 = vmatprep.subr.mxu0 0.0
        %465 = vmatpush1.msra.mxu0 0.0
        %466 = vmatprep.subr.mxu0 0.0
        %467 = vmatpush1.msra.mxu0 0.0
        %468 = vmatprep.subr.mxu0 0.0
        %469 = vmatpush1.msra.mxu0 0.0
        %470 = vmatprep.subr.mxu0 0.0
        %471 = vmatpush1.msra.mxu0 0.0
        %472 = vmatprep.subr.mxu0 0.0
        %473 = vmatpush1.msra.mxu0 0.0
        %474 = vmatprep.subr.mxu0 0.0
        %475 = vmatpush1.msra.mxu0 0.0
        %476 = vmatprep.subr.mxu0 0.0
        %477 = vmatpush1.msra.mxu0 0.0
        %478 = vmatprep.subr.mxu0 0.0
        %479 = vmatpush1.msra.mxu0 0.0
        %480 = vmatprep.subr.mxu0 0.0
        %481 = vmatpush1.msra.mxu0 0.0
        %482 = vmatprep.subr.mxu0 0.0
        %483 = vmatpush1.msra.mxu0 0.0
        %484 = vmatprep.subr.mxu0 0.0
        %485 = vmatpush1.msra.mxu0 0.0
        %486 = vmatprep.subr.mxu0 0.0
        %487 = vmatpush1.msra.mxu0 0.0
        %488 = vmatprep.subr.mxu0 0.0
        %489 = vmatpush1.msra.mxu0 0.0
        %490 = vmatprep.subr.mxu0 0.0
        %491 = vmatpush1.msra.mxu0 0.0
        %492 = vmatprep.subr.mxu0 0.0
        %493 = vmatpush1.msra.mxu0 0.0
        %494 = vmatprep.subr.mxu0 0.0
        %495 = vmatpush1.msra.mxu0 0.0
        %496 = vmatprep.subr.mxu0 0.0
        %497 = vmatpush1.msra.mxu0 0.0
        %498 = vmatprep.mubr.f32.mxu0 0.0
        %499 = vmatmul.mubr.f32.gmra.mrb[0].mxu0 %v432
        %v500 = vpop.f32.mrb[0].mxu0
        %v501 = vadd.f32 0.0, %v500
        %v502 = vpop.f32.mrb[0].mxu0
        %503 = vdwg.mxu0
        %504 = vrot.lane.b32.xlu0 %v335, 120
        %v505 = vpop.permute.xlu0 %504
        %506 = vrot.lane.b32.xlu0 %v335, 88
        %v507 = vpop.permute.xlu0 %506
        %v508 = vsel %vm341, %v505, 0
        %v510 = vsel %vm341, %v507, 0
        %512 = vmatprep.subr.mxu0 0.0
        %513 = vmatpush1.xpose.msra.mxu0 %v510
        %514 = vmatprep.subr.mxu0 0.0
        %515 = vmatpush1.xpose.msra.mxu0 0.0
        %516 = vmatprep.subr.mxu0 0.0
        %517 = vmatpush1.xpose.msra.mxu0 0.0
        %518 = vmatprep.subr.mxu0 0.0
        %519 = vmatpush1.xpose.msra.mxu0 0.0
        %520 = vmatprep.subr.mxu0 0.0
        %521 = vmatpush1.xpose.msra.mxu0 0.0
        %522 = vmatprep.subr.mxu0 0.0
        %523 = vmatpush1.xpose.msra.mxu0 0.0
        %524 = vmatprep.subr.mxu0 0.0
        %525 = vmatpush1.xpose.msra.mxu0 0.0
        %526 = vmatprep.subr.mxu0 0.0
        %527 = vmatpush1.xpose.msra.mxu0 0.0
        %528 = vmatprep.subr.mxu0 0.0
        %529 = vmatpush1.xpose.msra.mxu0 0.0
        %530 = vmatprep.subr.mxu0 0.0
        %531 = vmatpush1.xpose.msra.mxu0 0.0
        %532 = vmatprep.subr.mxu0 0.0
        %533 = vmatpush1.xpose.msra.mxu0 0.0
        %534 = vmatprep.subr.mxu0 0.0
        %535 = vmatpush1.xpose.msra.mxu0 0.0
        %536 = vmatprep.subr.mxu0 0.0
        %537 = vmatpush1.xpose.msra.mxu0 0.0
        %538 = vmatprep.subr.mxu0 0.0
        %539 = vmatpush1.xpose.msra.mxu0 0.0
        %540 = vmatprep.subr.mxu0 0.0
        %541 = vmatpush1.xpose.msra.mxu0 0.0
        %542 = vmatprep.subr.mxu0 0.0
        %543 = vmatpush1.xpose.msra.mxu0 0.0
        %544 = vmatprep.subr.mxu0 0.0
        %545 = vmatpush1.xpose.msra.mxu0 0.0
        %546 = vmatprep.subr.mxu0 0.0
        %547 = vmatpush1.xpose.msra.mxu0 0.0
        %548 = vmatprep.subr.mxu0 0.0
        %549 = vmatpush1.xpose.msra.mxu0 0.0
        %550 = vmatprep.subr.mxu0 0.0
        %551 = vmatpush1.xpose.msra.mxu0 0.0
        %552 = vmatprep.subr.mxu0 0.0
        %553 = vmatpush1.xpose.msra.mxu0 0.0
        %554 = vmatprep.subr.mxu0 0.0
        %555 = vmatpush1.xpose.msra.mxu0 0.0
        %556 = vmatprep.subr.mxu0 0.0
        %557 = vmatpush1.xpose.msra.mxu0 0.0
        %558 = vmatprep.subr.mxu0 0.0
        %559 = vmatpush1.xpose.msra.mxu0 0.0
        %560 = vmatprep.subr.mxu0 0.0
        %561 = vmatpush1.xpose.msra.mxu0 0.0
        %562 = vmatprep.subr.mxu0 0.0
        %563 = vmatpush1.xpose.msra.mxu0 0.0
        %564 = vmatprep.subr.mxu0 0.0
        %565 = vmatpush1.xpose.msra.mxu0 0.0
        %566 = vmatprep.subr.mxu0 0.0
        %567 = vmatpush1.xpose.msra.mxu0 0.0
        %568 = vmatprep.subr.mxu0 0.0
        %569 = vmatpush1.xpose.msra.mxu0 0.0
        %570 = vmatprep.subr.mxu0 0.0
        %571 = vmatpush1.xpose.msra.mxu0 0.0
        %572 = vmatprep.subr.mxu0 0.0
        %573 = vmatpush1.xpose.msra.mxu0 0.0
        %574 = vmatprep.subr.mxu0 0.0
        %575 = vmatpush1.xpose.msra.mxu0 0.0
        %576 = vmatprep.mubr.f32.mxu0 0.0
        %577 = vmatmul.mubr.f32.gmra.mrb[0].mxu0 %v508
        %v578 = vpop.f32.mrb[0].mxu0
        %v579 = vadd.f32 0.0, %v578
        %v580 = vpop.f32.mrb[0].mxu0
        %581 = vdwg.mxu0
        %v582 = vmul.f32 %v579, 0.35355338
        %v583 = vsel %vm341, %v582, -inf
        %584 = vmax.xlane.f32.xlu0 %v583
        %v585 = vpop.xlane.xlu0 %584
        %v586 = vsub.f32 %v582, %v585
        %v587 = vmul.f32 %v586, 1.442695
        %v588 = vpow.pop %v587
        %v589 = vsel %vm341, %v588, 0.0
        %590 = vadd.xlane.f32.xlu0 %v589
        %v591 = vpop.xlane.xlu0 %590
        %v592 = vrcp.pop %v591
        %v593 = vmul.f32 %v588, %v592
        %594 = vrot.lane.b32.xlu0 %v335, 56
        %v595 = vpop.permute.xlu0 %594
        %v598 = vsel %vm341, %v593, 0
        %600 = vmatprep.subr.mxu0 0.0
        %601 = vmatpush1.msra.mxu0 %v595
        %602 = vmatprep.subr.mxu0 0.0
        %603 = vmatpush1.msra.mxu0 0.0
        %604 = vmatprep.subr.mxu0 0.0
        %605 = vmatpush1.msra.mxu0 0.0
        %606 = vmatprep.subr.mxu0 0.0
        %607 = vmatpush1.msra.mxu0 0.0
        %608 = vmatprep.subr.mxu0 0.0
        %609 = vmatpush1.msra.mxu0 0.0
        %610 = vmatprep.subr.mxu0 0.0
        %611 = vmatpush1.msra.mxu0 0.0
        %612 = vmatprep.subr.mxu0 0.0
        %613 = vmatpush1.msra.mxu0 0.0
        %614 = vmatprep.subr.mxu0 0.0
        %615 = vmatpush1.msra.mxu0 0.0
        %616 = vmatprep.subr.mxu0 0.0
        %617 = vmatpush1.msra.mxu0 0.0
        %618 = vmatprep.subr.mxu0 0.0
        %619 = vmatpush1.msra.mxu0 0.0
        %620 = vmatprep.subr.mxu0 0.0
        %621 = vmatpush1.msra.mxu0 0.0
        %622 = vmatprep.subr.mxu0 0.0
        %623 = vmatpush1.msra.mxu0 0.0
        %624 = vmatprep.subr.mxu0 0.0
        %625 = vmatpush1.msra.mxu0 0.0
        %626 = vmatprep.subr.mxu0 0.0
        %627 = vmatpush1.msra.mxu0 0.0
        %628 = vmatprep.subr.mxu0 0.0
        %629 = vmatpush1.msra.mxu0 0.0
        %630 = vmatprep.subr.mxu0 0.0
        %631 = vmatpush1.msra.mxu0 0.0
        %632 = vmatprep.subr.mxu0 0.0
        %633 = vmatpush1.msra.mxu0 0.0
        %634 = vmatprep.subr.mxu0 0.0
        %635 = vmatpush1.msra.mxu0 0.0
        %636 = vmatprep.subr.mxu0 0.0
        %637 = vmatpush1.msra.mxu0 0.0
        %638 = vmatprep.subr.mxu0 0.0
        %639 = vmatpush1.msra.mxu0 0.0
        %640 = vmatprep.subr.mxu0 0.0
        %641 = vmatpush1.msra.mxu0 0.0
        %642 = vmatprep.subr.mxu0 0.0
        %643 = vmatpush1.msra.mxu0 0.0
        %644 = vmatprep.subr.mxu0 0.0
        %645 = vmatpush1.msra.mxu0 0.0
        %646 = vmatprep.subr.mxu0 0.0
        %647 = vmatpush1.msra.mxu0 0.0
        %648 = vmatprep.subr.mxu0 0.0
        %649 = vmatpush1.msra.mxu0 0.0
        %650 = vmatprep.subr.mxu0 0.0
        %651 = vmatpush1.msra.mxu0 0.0
        %652 = vmatprep.subr.mxu0 0.0
        %653 = vmatpush1.msra.mxu0 0.0
        %654 = vmatprep.subr.mxu0 0.0
        %655 = vmatpush1.msra.mxu0 0.0
        %656 = vmatprep.subr.mxu0 0.0
        %657 = vmatpush1.msra.mxu0 0.0
        %658 = vmatprep.subr.mxu0 0.0
        %659 = vmatpush1.msra.mxu0 0.0
        %660 = vmatprep.subr.mxu0 0.0
        %661 = vmatpush1.msra.mxu0 0.0
        %662 = vmatprep.subr.mxu0 0.0
        %663 = vmatpush1.msra.mxu0 0.0
        %664 = vmatprep.mubr.f32.mxu0 0.0
        %665 = vmatmul.mubr.f32.gmra.mrb[0].mxu0 %v598
        %v666 = vpop.f32.mrb[0].mxu0
        %v667 = vadd.f32 0.0, %v666
        %v668 = vpop.f32.mrb[0].mxu0
        %669 = vdwg.mxu0
        %670 = vrot.lane.b32.xlu0 %v335, 112
        %v671 = vpop.permute.xlu0 %670
        %672 = vrot.lane.b32.xlu0 %v335, 80
        %v673 = vpop.permute.xlu0 %672
        %v674 = vsel %vm341, %v671, 0
        %v676 = vsel %vm341, %v673, 0
        %678 = vmatprep.subr.mxu0 0.0
        %679 = vmatpush1.xpose.msra.mxu0 %v676
        %680 = vmatprep.subr.mxu0 0.0
        %681 = vmatpush1.xpose.msra.mxu0 0.0
        %682 = vmatprep.subr.mxu0 0.0
        %683 = vmatpush1.xpose.msra.mxu0 0.0
        %684 = vmatprep.subr.mxu0 0.0
        %685 = vmatpush1.xpose.msra.mxu0 0.0
        %686 = vmatprep.subr.mxu0 0.0
        %687 = vmatpush1.xpose.msra.mxu0 0.0
        %688 = vmatprep.subr.mxu0 0.0
        %689 = vmatpush1.xpose.msra.mxu0 0.0
        %690 = vmatprep.subr.mxu0 0.0
        %691 = vmatpush1.xpose.msra.mxu0 0.0
        %692 = vmatprep.subr.mxu0 0.0
        %693 = vmatpush1.xpose.msra.mxu0 0.0
        %694 = vmatprep.subr.mxu0 0.0
        %695 = vmatpush1.xpose.msra.mxu0 0.0
        %696 = vmatprep.subr.mxu0 0.0
        %697 = vmatpush1.xpose.msra.mxu0 0.0
        %698 = vmatprep.subr.mxu0 0.0
        %699 = vmatpush1.xpose.msra.mxu0 0.0
        %700 = vmatprep.subr.mxu0 0.0
        %701 = vmatpush1.xpose.msra.mxu0 0.0
        %702 = vmatprep.subr.mxu0 0.0
        %703 = vmatpush1.xpose.msra.mxu0 0.0
        %704 = vmatprep.subr.mxu0 0.0
        %705 = vmatpush1.xpose.msra.mxu0 0.0
        %706 = vmatprep.subr.mxu0 0.0
        %707 = vmatpush1.xpose.msra.mxu0 0.0
        %708 = vmatprep.subr.mxu0 0.0
        %709 = vmatpush1.xpose.msra.mxu0 0.0
        %710 = vmatprep.subr.mxu0 0.0
        %711 = vmatpush1.xpose.msra.mxu0 0.0
        %712 = vmatprep.subr.mxu0 0.0
        %713 = vmatpush1.xpose.msra.mxu0 0.0
        %714 = vmatprep.subr.mxu0 0.0
        %715 = vmatpush1.xpose.msra.mxu0 0.0
        %716 = vmatprep.subr.mxu0 0.0
        %717 = vmatpush1.xpose.msra.mxu0 0.0
        %718 = vmatprep.subr.mxu0 0.0
        %719 = vmatpush1.xpose.msra.mxu0 0.0
        %720 = vmatprep.subr.mxu0 0.0
        %721 = vmatpush1.xpose.msra.mxu0 0.0
        %722 = vmatprep.subr.mxu0 0.0
        %723 = vmatpush1.xpose.msra.mxu0 0.0
        %724 = vmatprep.subr.mxu0 0.0
        %725 = vmatpush1.xpose.msra.mxu0 0.0
        %726 = vmatprep.subr.mxu0 0.0
        %727 = vmatpush1.xpose.msra.mxu0 0.0
        %728 = vmatprep.subr.mxu0 0.0
        %729 = vmatpush1.xpose.msra.mxu0 0.0
        %730 = vmatprep.subr.mxu0 0.0
        %731 = vmatpush1.xpose.msra.mxu0 0.0
        %732 = vmatprep.subr.mxu0 0.0
        %733 = vmatpush1.xpose.msra.mxu0 0.0
        %734 = vmatprep.subr.mxu0 0.0
        %735 = vmatpush1.xpose.msra.mxu0 0.0
        %736 = vmatprep.subr.mxu0 0.0
        %737 = vmatpush1.xpose.msra.mxu0 0.0
        %738 = vmatprep.subr.mxu0 0.0
        %739 = vmatpush1.xpose.msra.mxu0 0.0
        %740 = vmatprep.subr.mxu0 0.0
        %741 = vmatpush1.xpose.msra.mxu0 0.0
        %742 = vmatprep.mubr.f32.mxu0 0.0
        %743 = vmatmul.mubr.f32.gmra.mrb[0].mxu0 %v674
        %v744 = vpop.f32.mrb[0].mxu0
        %v745 = vadd.f32 0.0, %v744
        %v746 = vpop.f32.mrb[0].mxu0
        %747 = vdwg.mxu0
        %v748 = vmul.f32 %v745, 0.35355338
        %v749 = vsel %vm341, %v748, -inf
        %750 = vmax.xlane.f32.xlu0 %v749
        %v751 = vpop.xlane.xlu0 %750
        %v752 = vsub.f32 %v748, %v751
        %v753 = vmul.f32 %v752, 1.442695
        %v754 = vpow.pop %v753
        %v755 = vsel %vm341, %v754, 0.0
        %756 = vadd.xlane.f32.xlu0 %v755
        %v757 = vpop.xlane.xlu0 %756
        %v758 = vrcp.pop %v757
        %v759 = vmul.f32 %v754, %v758
        %760 = vrot.lane.b32.xlu0 %v335, 48
        %v761 = vpop.permute.xlu0 %760
        %v764 = vsel %vm341, %v759, 0
        %766 = vmatprep.subr.mxu0 0.0
        %767 = vmatpush1.msra.mxu0 %v761
        %768 = vmatprep.subr.mxu0 0.0
        %769 = vmatpush1.msra.mxu0 0.0
        %770 = vmatprep.subr.mxu0 0.0
        %771 = vmatpush1.msra.mxu0 0.0
        %772 = vmatprep.subr.mxu0 0.0
        %773 = vmatpush1.msra.mxu0 0.0
        %774 = vmatprep.subr.mxu0 0.0
        %775 = vmatpush1.msra.mxu0 0.0
        %776 = vmatprep.subr.mxu0 0.0
        %777 = vmatpush1.msra.mxu0 0.0
        %778 = vmatprep.subr.mxu0 0.0
        %779 = vmatpush1.msra.mxu0 0.0
        %780 = vmatprep.subr.mxu0 0.0
        %781 = vmatpush1.msra.mxu0 0.0
        %782 = vmatprep.subr.mxu0 0.0
        %783 = vmatpush1.msra.mxu0 0.0
        %784 = vmatprep.subr.mxu0 0.0
        %785 = vmatpush1.msra.mxu0 0.0
        %786 = vmatprep.subr.mxu0 0.0
        %787 = vmatpush1.msra.mxu0 0.0
        %788 = vmatprep.subr.mxu0 0.0
        %789 = vmatpush1.msra.mxu0 0.0
        %790 = vmatprep.subr.mxu0 0.0
        %791 = vmatpush1.msra.mxu0 0.0
        %792 = vmatprep.subr.mxu0 0.0
        %793 = vmatpush1.msra.mxu0 0.0
        %794 = vmatprep.subr.mxu0 0.0
        %795 = vmatpush1.msra.mxu0 0.0
        %796 = vmatprep.subr.mxu0 0.0
        %797 = vmatpush1.msra.mxu0 0.0
        %798 = vmatprep.subr.mxu0 0.0
        %799 = vmatpush1.msra.mxu0 0.0
        %800 = vmatprep.subr.mxu0 0.0
        %801 = vmatpush1.msra.mxu0 0.0
        %802 = vmatprep.subr.mxu0 0.0
        %803 = vmatpush1.msra.mxu0 0.0
        %804 = vmatprep.subr.mxu0 0.0
        %805 = vmatpush1.msra.mxu0 0.0
        %806 = vmatprep.subr.mxu0 0.0
        %807 = vmatpush1.msra.mxu0 0.0
        %808 = vmatprep.subr.mxu0 0.0
        %809 = vmatpush1.msra.mxu0 0.0
        %810 = vmatprep.subr.mxu0 0.0
        %811 = vmatpush1.msra.mxu0 0.0
        %812 = vmatprep.subr.mxu0 0.0
        %813 = vmatpush1.msra.mxu0 0.0
        %814 = vmatprep.subr.mxu0 0.0
        %815 = vmatpush1.msra.mxu0 0.0
        %816 = vmatprep.subr.mxu0 0.0
        %817 = vmatpush1.msra.mxu0 0.0
        %818 = vmatprep.subr.mxu0 0.0
        %819 = vmatpush1.msra.mxu0 0.0
        %820 = vmatprep.subr.mxu0 0.0
        %821 = vmatpush1.msra.mxu0 0.0
        %822 = vmatprep.subr.mxu0 0.0
        %823 = vmatpush1.msra.mxu0 0.0
        %824 = vmatprep.subr.mxu0 0.0
        %825 = vmatpush1.msra.mxu0 0.0
        %826 = vmatprep.subr.mxu0 0.0
        %827 = vmatpush1.msra.mxu0 0.0
        %828 = vmatprep.subr.mxu0 0.0
        %829 = vmatpush1.msra.mxu0 0.0
        %830 = vmatprep.mubr.f32.mxu0 0.0
        %831 = vmatmul.mubr.f32.gmra.mrb[0].mxu0 %v764
        %v832 = vpop.f32.mrb[0].mxu0
        %v833 = vadd.f32 0.0, %v832
        %v834 = vpop.f32.mrb[0].mxu0
        %835 = vdwg.mxu0
        %836 = vrot.lane.b32.xlu0 %v335, 104
        %v837 = vpop.permute.xlu0 %836
        %838 = vrot.lane.b32.xlu0 %v335, 72
        %v839 = vpop.permute.xlu0 %838
        %v840 = vsel %vm341, %v837, 0
        %v842 = vsel %vm341, %v839, 0
        %844 = vmatprep.subr.mxu0 0.0
        %845 = vmatpush1.xpose.msra.mxu0 %v842
        %846 = vmatprep.subr.mxu0 0.0
        %847 = vmatpush1.xpose.msra.mxu0 0.0
        %848 = vmatprep.subr.mxu0 0.0
        %849 = vmatpush1.xpose.msra.mxu0 0.0
        %850 = vmatprep.subr.mxu0 0.0
        %851 = vmatpush1.xpose.msra.mxu0 0.0
        %852 = vmatprep.subr.mxu0 0.0
        %853 = vmatpush1.xpose.msra.mxu0 0.0
        %854 = vmatprep.subr.mxu0 0.0
        %855 = vmatpush1.xpose.msra.mxu0 0.0
        %856 = vmatprep.subr.mxu0 0.0
        %857 = vmatpush1.xpose.msra.mxu0 0.0
        %858 = vmatprep.subr.mxu0 0.0
        %859 = vmatpush1.xpose.msra.mxu0 0.0
        %860 = vmatprep.subr.mxu0 0.0
        %861 = vmatpush1.xpose.msra.mxu0 0.0
        %862 = vmatprep.subr.mxu0 0.0
        %863 = vmatpush1.xpose.msra.mxu0 0.0
        %864 = vmatprep.subr.mxu0 0.0
        %865 = vmatpush1.xpose.msra.mxu0 0.0
        %866 = vmatprep.subr.mxu0 0.0
        %867 = vmatpush1.xpose.msra.mxu0 0.0
        %868 = vmatprep.subr.mxu0 0.0
        %869 = vmatpush1.xpose.msra.mxu0 0.0
        %870 = vmatprep.subr.mxu0 0.0
        %871 = vmatpush1.xpose.msra.mxu0 0.0
        %872 = vmatprep.subr.mxu0 0.0
        %873 = vmatpush1.xpose.msra.mxu0 0.0
        %874 = vmatprep.subr.mxu0 0.0
        %875 = vmatpush1.xpose.msra.mxu0 0.0
        %876 = vmatprep.subr.mxu0 0.0
        %877 = vmatpush1.xpose.msra.mxu0 0.0
        %878 = vmatprep.subr.mxu0 0.0
        %879 = vmatpush1.xpose.msra.mxu0 0.0
        %880 = vmatprep.subr.mxu0 0.0
        %881 = vmatpush1.xpose.msra.mxu0 0.0
        %882 = vmatprep.subr.mxu0 0.0
        %883 = vmatpush1.xpose.msra.mxu0 0.0
        %884 = vmatprep.subr.mxu0 0.0
        %885 = vmatpush1.xpose.msra.mxu0 0.0
        %886 = vmatprep.subr.mxu0 0.0
        %887 = vmatpush1.xpose.msra.mxu0 0.0
        %888 = vmatprep.subr.mxu0 0.0
        %889 = vmatpush1.xpose.msra.mxu0 0.0
        %890 = vmatprep.subr.mxu0 0.0
        %891 = vmatpush1.xpose.msra.mxu0 0.0
        %892 = vmatprep.subr.mxu0 0.0
        %893 = vmatpush1.xpose.msra.mxu0 0.0
        %894 = vmatprep.subr.mxu0 0.0
        %895 = vmatpush1.xpose.msra.mxu0 0.0
        %896 = vmatprep.subr.mxu0 0.0
        %897 = vmatpush1.xpose.msra.mxu0 0.0
        %898 = vmatprep.subr.mxu0 0.0
        %899 = vmatpush1.xpose.msra.mxu0 0.0
        %900 = vmatprep.subr.mxu0 0.0
        %901 = vmatpush1.xpose.msra.mxu0 0.0
        %902 = vmatprep.subr.mxu0 0.0
        %903 = vmatpush1.xpose.msra.mxu0 0.0
        %904 = vmatprep.subr.mxu0 0.0
        %905 = vmatpush1.xpose.msra.mxu0 0.0
        %906 = vmatprep.subr.mxu0 0.0
        %907 = vmatpush1.xpose.msra.mxu0 0.0
        %908 = vmatprep.mubr.f32.mxu0 0.0
        %909 = vmatmul.mubr.f32.gmra.mrb[0].mxu0 %v840
        %v910 = vpop.f32.mrb[0].mxu0
        %v911 = vadd.f32 0.0, %v910
        %v912 = vpop.f32.mrb[0].mxu0
        %913 = vdwg.mxu0
        %v914 = vmul.f32 %v911, 0.35355338
        %v915 = vsel %vm341, %v914, -inf
        %916 = vmax.xlane.f32.xlu0 %v915
        %v917 = vpop.xlane.xlu0 %916
        %v918 = vsub.f32 %v914, %v917
        %v919 = vmul.f32 %v918, 1.442695
        %v920 = vpow.pop %v919
        %v921 = vsel %vm341, %v920, 0.0
        %922 = vadd.xlane.f32.xlu0 %v921
        %v923 = vpop.xlane.xlu0 %922
        %v924 = vrcp.pop %v923
        %v925 = vmul.f32 %v920, %v924
        %926 = vrot.lane.b32.xlu0 %v335, 40
        %v927 = vpop.permute.xlu0 %926
        %v930 = vsel %vm341, %v925, 0
        %932 = vmatprep.subr.mxu0 0.0
        %933 = vmatpush1.msra.mxu0 %v927
        %934 = vmatprep.subr.mxu0 0.0
        %935 = vmatpush1.msra.mxu0 0.0
        %936 = vmatprep.subr.mxu0 0.0
        %937 = vmatpush1.msra.mxu0 0.0
        %938 = vmatprep.subr.mxu0 0.0
        %939 = vmatpush1.msra.mxu0 0.0
        %940 = vmatprep.subr.mxu0 0.0
        %941 = vmatpush1.msra.mxu0 0.0
        %942 = vmatprep.subr.mxu0 0.0
        %943 = vmatpush1.msra.mxu0 0.0
        %944 = vmatprep.subr.mxu0 0.0
        %945 = vmatpush1.msra.mxu0 0.0
        %946 = vmatprep.subr.mxu0 0.0
        %947 = vmatpush1.msra.mxu0 0.0
        %948 = vmatprep.subr.mxu0 0.0
        %949 = vmatpush1.msra.mxu0 0.0
        %950 = vmatprep.subr.mxu0 0.0
        %951 = vmatpush1.msra.mxu0 0.0
        %952 = vmatprep.subr.mxu0 0.0
        %953 = vmatpush1.msra.mxu0 0.0
        %954 = vmatprep.subr.mxu0 0.0
        %955 = vmatpush1.msra.mxu0 0.0
        %956 = vmatprep.subr.mxu0 0.0
        %957 = vmatpush1.msra.mxu0 0.0
        %958 = vmatprep.subr.mxu0 0.0
        %959 = vmatpush1.msra.mxu0 0.0
        %960 = vmatprep.subr.mxu0 0.0
        %961 = vmatpush1.msra.mxu0 0.0
        %962 = vmatprep.subr.mxu0 0.0
        %963 = vmatpush1.msra.mxu0 0.0
        %964 = vmatprep.subr.mxu0 0.0
        %965 = vmatpush1.msra.mxu0 0.0
        %966 = vmatprep.subr.mxu0 0.0
        %967 = vmatpush1.msra.mxu0 0.0
        %968 = vmatprep.subr.mxu0 0.0
        %969 = vmatpush1.msra.mxu0 0.0
        %970 = vmatprep.subr.mxu0 0.0
        %971 = vmatpush1.msra.mxu0 0.0
        %972 = vmatprep.subr.mxu0 0.0
        %973 = vmatpush1.msra.mxu0 0.0
        %974 = vmatprep.subr.mxu0 0.0
        %975 = vmatpush1.msra.mxu0 0.0
        %976 = vmatprep.subr.mxu0 0.0
        %977 = vmatpush1.msra.mxu0 0.0
        %978 = vmatprep.subr.mxu0 0.0
        %979 = vmatpush1.msra.mxu0 0.0
        %980 = vmatprep.subr.mxu0 0.0
        %981 = vmatpush1.msra.mxu0 0.0
        %982 = vmatprep.subr.mxu0 0.0
        %983 = vmatpush1.msra.mxu0 0.0
        %984 = vmatprep.subr.mxu0 0.0
        %985 = vmatpush1.msra.mxu0 0.0
        %986 = vmatprep.subr.mxu0 0.0
        %987 = vmatpush1.msra.mxu0 0.0
        %988 = vmatprep.subr.mxu0 0.0
        %989 = vmatpush1.msra.mxu0 0.0
        %990 = vmatprep.subr.mxu0 0.0
        %991 = vmatpush1.msra.mxu0 0.0
        %992 = vmatprep.subr.mxu0 0.0
        %993 = vmatpush1.msra.mxu0 0.0
        %994 = vmatprep.subr.mxu0 0.0
        %995 = vmatpush1.msra.mxu0 0.0
        %996 = vmatprep.mubr.f32.mxu0 0.0
        %997 = vmatmul.mubr.f32.gmra.mrb[0].mxu0 %v930
        %v998 = vpop.f32.mrb[0].mxu0
        %v999 = vadd.f32 0.0, %v998
        %v1000 = vpop.f32.mrb[0].mxu0
        %1001 = vdwg.mxu0
        %1003 = vrot.lane.b32.xlu0 %v667, 8
        %v1004 = vpop.permute.xlu0 %1003
        %1007 = vrot.lane.b32.xlu0 %v833, 16
        %v1008 = vpop.permute.xlu0 %1007
        %1011 = vrot.lane.b32.xlu0 %v999, 24
        %v1012 = vpop.permute.xlu0 %1011
        %v1014 = vsel %vm341, %v501, %v1004
        %vm1015 = vcmask 130048
        %v1016 = vsel %vm1015, %v1014, %v1008
        %vm1017 = vcmask 195584
        %v1018 = vsel %vm1017, %v1016, %v1012
        %v1019 = vld [vmem:[%s2] sm:$0xff]
        %v1020 = vld [vmem:[%s2 + $0x8] sm:$0xff]
        %v1021 = vld [vmem:[%s2 + $0x10] sm:$0xff]
        %v1022 = vld [vmem:[%s2 + $0x18] sm:$0xff]
        %v1023 = vlaneseq
        %v1024 = vshrl.u32 %v1023, 7
        %v1025 = vsub.s32 0, %v1024
        %v1026 = vrot.slane %v249, %v1025
        %v1028 = vsel %vm264, %v1018, 0
        %1030 = vmatprep.subr.mxu0 0.0
        %1031 = vmatpush1.msra.mxu0 %v1019
        %1032 = vmatprep.subr.mxu0 0.0
        %1033 = vmatpush1.msra.mxu0 %v1020
        %1034 = vmatprep.subr.mxu0 0.0
        %1035 = vmatpush1.msra.mxu0 %v1021
        %1036 = vmatprep.subr.mxu0 0.0
        %1037 = vmatpush1.msra.mxu0 %v1022
        %1038 = vmatprep.subr.mxu0 0.0
        %1039 = vmatpush1.msra.mxu0 0.0
        %1040 = vmatprep.subr.mxu0 0.0
        %1041 = vmatpush1.msra.mxu0 0.0
        %1042 = vmatprep.subr.mxu0 0.0
        %1043 = vmatpush1.msra.mxu0 0.0
        %1044 = vmatprep.subr.mxu0 0.0
        %1045 = vmatpush1.msra.mxu0 0.0
        %1046 = vmatprep.subr.mxu0 0.0
        %1047 = vmatpush1.msra.mxu0 0.0
        %1048 = vmatprep.subr.mxu0 0.0
        %1049 = vmatpush1.msra.mxu0 0.0
        %1050 = vmatprep.subr.mxu0 0.0
        %1051 = vmatpush1.msra.mxu0 0.0
        %1052 = vmatprep.subr.mxu0 0.0
        %1053 = vmatpush1.msra.mxu0 0.0
        %1054 = vmatprep.subr.mxu0 0.0
        %1055 = vmatpush1.msra.mxu0 0.0
        %1056 = vmatprep.subr.mxu0 0.0
        %1057 = vmatpush1.msra.mxu0 0.0
        %1058 = vmatprep.subr.mxu0 0.0
        %1059 = vmatpush1.msra.mxu0 0.0
        %1060 = vmatprep.subr.mxu0 0.0
        %1061 = vmatpush1.msra.mxu0 0.0
        %1062 = vmatprep.subr.mxu0 0.0
        %1063 = vmatpush1.msra.mxu0 0.0
        %1064 = vmatprep.subr.mxu0 0.0
        %1065 = vmatpush1.msra.mxu0 0.0
        %1066 = vmatprep.subr.mxu0 0.0
        %1067 = vmatpush1.msra.mxu0 0.0
        %1068 = vmatprep.subr.mxu0 0.0
        %1069 = vmatpush1.msra.mxu0 0.0
        %1070 = vmatprep.subr.mxu0 0.0
        %1071 = vmatpush1.msra.mxu0 0.0
        %1072 = vmatprep.subr.mxu0 0.0
        %1073 = vmatpush1.msra.mxu0 0.0
        %1074 = vmatprep.subr.mxu0 0.0
        %1075 = vmatpush1.msra.mxu0 0.0
        %1076 = vmatprep.subr.mxu0 0.0
        %1077 = vmatpush1.msra.mxu0 0.0
        %1078 = vmatprep.subr.mxu0 0.0
        %1079 = vmatpush1.msra.mxu0 0.0
        %1080 = vmatprep.subr.mxu0 0.0
        %1081 = vmatpush1.msra.mxu0 0.0
        %1082 = vmatprep.subr.mxu0 0.0
        %1083 = vmatpush1.msra.mxu0 0.0
        %1084 = vmatprep.subr.mxu0 0.0
        %1085 = vmatpush1.msra.mxu0 0.0
        %1086 = vmatprep.subr.mxu0 0.0
        %1087 = vmatpush1.msra.mxu0 0.0
        %1088 = vmatprep.subr.mxu0 0.0
        %1089 = vmatpush1.msra.mxu0 0.0
        %1090 = vmatprep.subr.mxu0 0.0
        %1091 = vmatpush1.msra.mxu0 0.0
        %1092 = vmatprep.subr.mxu0 0.0
        %1093 = vmatpush1.msra.mxu0 0.0
        %1094 = vmatprep.mubr.f32.mxu0 0.0
        %1095 = vmatmul.mubr.f32.gmra.mrb[0].mxu0 %v1028
        %v1096 = vpop.f32.mrb[0].mxu0
        %v1097 = vadd.f32 %v1026, %v1096
        %v1098 = vpop.f32.mrb[0].mxu0
        %1099 = vdwg.mxu0
        %v1100 = vadd.f32 %v247, %v1097
        %v1101 = vsel %vm264, %v1100, 0.0
        %1102 = vadd.xlane.f32.xlu0 %v1101
        %v1103 = vpop.xlane.xlu0 %1102
        %v1104 = vrcp.pop 32.0
        %v1105 = vmul.f32 %v1103, %v1104
        %v1106 = vsub.f32 %v1100, %v1105
        %v1107 = vmul.f32 %v1106, %v1106
        %v1108 = vsel %vm264, %v1107, 0.0
        %1109 = vadd.xlane.f32.xlu0 %v1108
        %v1110 = vpop.xlane.xlu0 %1109
        %v1111 = vmul.f32 %v1110, %v1104
        %v1112 = vadd.f32 %v1111, 1e-05
        %v1113 = vrsqrt.pop %v1112
        %v1114 = vmul.f32 %v1106, %v1113
        %v1115 = vlaneseq
        %v1116 = vshrl.u32 %v1115, 7
        %v1117 = vsub.s32 0, %v1116
        %v1118 = vrot.slane %v252, %v1117
        %v1119 = vmul.f32 %v1114, %v1118
        %v1120 = vlaneseq
        %v1121 = vshrl.u32 %v1120, 7
        %v1122 = vsub.s32 0, %v1121
        %v1123 = vrot.slane %v253, %v1122
        %v1124 = vadd.f32 %v1119, %v1123
        %v1125 = vld [vmem:[%s3] sm:$0xff]
        %v1126 = vld [vmem:[%s3 + $0x8] sm:$0xff]
        %v1127 = vld [vmem:[%s3 + $0x10] sm:$0xff]
        %v1128 = vld [vmem:[%s3 + $0x18] sm:$0xff]
        %v1129 = vlaneseq
        %v1130 = vshrl.u32 %v1129, 7
        %v1131 = vsub.s32 0, %v1130
        %v1132 = vrot.slane %v250, %v1131
        %v1134 = vsel %vm264, %v1124, 0
        %1136 = vmatprep.subr.mxu0 0.0
        %1137 = vmatpush1.msra.mxu0 %v1125
        %1138 = vmatprep.subr.mxu0 0.0
        %1139 = vmatpush1.msra.mxu0 %v1126
        %1140 = vmatprep.subr.mxu0 0.0
        %1141 = vmatpush1.msra.mxu0 %v1127
        %1142 = vmatprep.subr.mxu0 0.0
        %1143 = vmatpush1.msra.mxu0 %v1128
        %1144 = vmatprep.subr.mxu0 0.0
        %1145 = vmatpush1.msra.mxu0 0.0
        %1146 = vmatprep.subr.mxu0 0.0
        %1147 = vmatpush1.msra.mxu0 0.0
        %1148 = vmatprep.subr.mxu0 0.0
        %1149 = vmatpush1.msra.mxu0 0.0
        %1150 = vmatprep.subr.mxu0 0.0
        %1151 = vmatpush1.msra.mxu0 0.0
        %1152 = vmatprep.subr.mxu0 0.0
        %1153 = vmatpush1.msra.mxu0 0.0
        %1154 = vmatprep.subr.mxu0 0.0
        %1155 = vmatpush1.msra.mxu0 0.0
        %1156 = vmatprep.subr.mxu0 0.0
        %1157 = vmatpush1.msra.mxu0 0.0
        %1158 = vmatprep.subr.mxu0 0.0
        %1159 = vmatpush1.msra.mxu0 0.0
        %1160 = vmatprep.subr.mxu0 0.0
        %1161 = vmatpush1.msra.mxu0 0.0
        %1162 = vmatprep.subr.mxu0 0.0
        %1163 = vmatpush1.msra.mxu0 0.0
        %1164 = vmatprep.subr.mxu0 0.0
        %1165 = vmatpush1.msra.mxu0 0.0
        %1166 = vmatprep.subr.mxu0 0.0
        %1167 = vmatpush1.msra.mxu0 0.0
        %1168 = vmatprep.subr.mxu0 0.0
        %1169 = vmatpush1.msra.mxu0 0.0
        %1170 = vmatprep.subr.mxu0 0.0
        %1171 = vmatpush1.msra.mxu0 0.0
        %1172 = vmatprep.subr.mxu0 0.0
        %1173 = vmatpush1.msra.mxu0 0.0
        %1174 = vmatprep.subr.mxu0 0.0
        %1175 = vmatpush1.msra.mxu0 0.0
        %1176 = vmatprep.subr.mxu0 0.0
        %1177 = vmatpush1.msra.mxu0 0.0
        %1178 = vmatprep.subr.mxu0 0.0
        %1179 = vmatpush1.msra.mxu0 0.0
        %1180 = vmatprep.subr.mxu0 0.0
        %1181 = vmatpush1.msra.mxu0 0.0
        %1182 = vmatprep.subr.mxu0 0.0
        %1183 = vmatpush1.msra.mxu0 0.0
        %1184 = vmatprep.subr.mxu0 0.0
        %1185 = vmatpush1.msra.mxu0 0.0
        %1186 = vmatprep.subr.mxu0 0.0
        %1187 = vmatpush1.msra.mxu0 0.0
        %1188 = vmatprep.subr.mxu0 0.0
        %1189 = vmatpush1.msra.mxu0 0.0
        %1190 = vmatprep.subr.mxu0 0.0
        %1191 = vmatpush1.msra.mxu0 0.0
        %1192 = vmatprep.subr.mxu0 0.0
        %1193 = vmatpush1.msra.mxu0 0.0
        %1194 = vmatprep.subr.mxu0 0.0
        %1195 = vmatpush1.msra.mxu0 0.0
        %1196 = vmatprep.subr.mxu0 0.0
        %1197 = vmatpush1.msra.mxu0 0.0
        %1198 = vmatprep.subr.mxu0 0.0
        %1199 = vmatpush1.msra.mxu0 0.0
        %1200 = vmatprep.mubr.f32.mxu0 0.0
        %1201 = vmatmul.mubr.f32.gmra.mrb[0].mxu0 %v1134
        %v1202 = vpop.f32.mrb[0].mxu0
        %v1203 = vadd.f32 %v1132, %v1202
        %v1204 = vpop.f32.mrb[0].mxu0
        %1205 = vdwg.mxu0
        %v1206 = vmul.f32 %v1203, %v1203
        %v1207 = vmul.f32 %v1203, %v1206
        %v1208 = vmul.f32 %v1207, 0.044715
        %v1209 = vadd.f32 %v1203, %v1208
        %v1210 = vmul.f32 %v1209, 0.7978846
        %v1211 = vtanh.pop %v1210
        %v1212 = vadd.f32 %v1211, 1.0
        %v1213 = vmul.f32 %v1212, 0.5
        %v1214 = vmul.f32 %v1203, %v1213
        %v1215 = vld [vmem:[%s4] sm:$0xff]
        %v1216 = vld [vmem:[%s4 + $0x8] sm:$0xff]
        %v1217 = vld [vmem:[%s4 + $0x10] sm:$0xff]
        %v1218 = vld [vmem:[%s4 + $0x18] sm:$0xff]
        %v1219 = vld [vmem:[%s4 + $0x20] sm:$0xff]
        %v1220 = vld [vmem:[%s4 + $0x28] sm:$0xff]
        %v1221 = vld [vmem:[%s4 + $0x30] sm:$0xff]
        %v1222 = vld [vmem:[%s4 + $0x38] sm:$0xff]
        %v1223 = vld [vmem:[%s4 + $0x40] sm:$0xff]
        %v1224 = vld [vmem:[%s4 + $0x48] sm:$0xff]
        %v1225 = vld [vmem:[%s4 + $0x50] sm:$0xff]
        %v1226 = vld [vmem:[%s4 + $0x58] sm:$0xff]
        %v1227 = vld [vmem:[%s4 + $0x60] sm:$0xff]
        %v1228 = vld [vmem:[%s4 + $0x68] sm:$0xff]
        %v1229 = vld [vmem:[%s4 + $0x70] sm:$0xff]
        %v1230 = vld [vmem:[%s4 + $0x78] sm:$0xff]
        %v1231 = vlaneseq
        %v1232 = vshrl.u32 %v1231, 7
        %v1233 = vsub.s32 0, %v1232
        %v1234 = vrot.slane %v251, %v1233
        %1235 = vmatprep.subr.mxu0 0.0
        %1236 = vmatpush1.msra.mxu0 %v1215
        %1237 = vmatprep.subr.mxu0 0.0
        %1238 = vmatpush1.msra.mxu0 %v1216
        %1239 = vmatprep.subr.mxu0 0.0
        %1240 = vmatpush1.msra.mxu0 %v1217
        %1241 = vmatprep.subr.mxu0 0.0
        %1242 = vmatpush1.msra.mxu0 %v1218
        %1243 = vmatprep.subr.mxu0 0.0
        %1244 = vmatpush1.msra.mxu0 %v1219
        %1245 = vmatprep.subr.mxu0 0.0
        %1246 = vmatpush1.msra.mxu0 %v1220
        %1247 = vmatprep.subr.mxu0 0.0
        %1248 = vmatpush1.msra.mxu0 %v1221
        %1249 = vmatprep.subr.mxu0 0.0
        %1250 = vmatpush1.msra.mxu0 %v1222
        %1251 = vmatprep.subr.mxu0 0.0
        %1252 = vmatpush1.msra.mxu0 %v1223
        %1253 = vmatprep.subr.mxu0 0.0
        %1254 = vmatpush1.msra.mxu0 %v1224
        %1255 = vmatprep.subr.mxu0 0.0
        %1256 = vmatpush1.msra.mxu0 %v1225
        %1257 = vmatprep.subr.mxu0 0.0
        %1258 = vmatpush1.msra.mxu0 %v1226
        %1259 = vmatprep.subr.mxu0 0.0
        %1260 = vmatpush1.msra.mxu0 %v1227
        %1261 = vmatprep.subr.mxu0 0.0
        %1262 = vmatpush1.msra.mxu0 %v1228
        %1263 = vmatprep.subr.mxu0 0.0
        %1264 = vmatpush1.msra.mxu0 %v1229
        %1265 = vmatprep.subr.mxu0 0.0
        %1266 = vmatpush1.msra.mxu0 %v1230
        %1267 = vmatprep.subr.mxu0 0.0
        %1268 = vmatpush1.msra.mxu0 0.0
        %1269 = vmatprep.subr.mxu0 0.0
        %1270 = vmatpush1.msra.mxu0 0.0
        %1271 = vmatprep.subr.mxu0 0.0
        %1272 = vmatpush1.msra.mxu0 0.0
        %1273 = vmatprep.subr.mxu0 0.0
        %1274 = vmatpush1.msra.mxu0 0.0
        %1275 = vmatprep.subr.mxu0 0.0
        %1276 = vmatpush1.msra.mxu0 0.0
        %1277 = vmatprep.subr.mxu0 0.0
        %1278 = vmatpush1.msra.mxu0 0.0
        %1279 = vmatprep.subr.mxu0 0.0
        %1280 = vmatpush1.msra.mxu0 0.0
        %1281 = vmatprep.subr.mxu0 0.0
        %1282 = vmatpush1.msra.mxu0 0.0
        %1283 = vmatprep.subr.mxu0 0.0
        %1284 = vmatpush1.msra.mxu0 0.0
        %1285 = vmatprep.subr.mxu0 0.0
        %1286 = vmatpush1.msra.mxu0 0.0
        %1287 = vmatprep.subr.mxu0 0.0
        %1288 = vmatpush1.msra.mxu0 0.0
        %1289 = vmatprep.subr.mxu0 0.0
        %1290 = vmatpush1.msra.mxu0 0.0
        %1291 = vmatprep.subr.mxu0 0.0
        %1292 = vmatpush1.msra.mxu0 0.0
        %1293 = vmatprep.subr.mxu0 0.0
        %1294 = vmatpush1.msra.mxu0 0.0
        %1295 = vmatprep.subr.mxu0 0.0
        %1296 = vmatpush1.msra.mxu0 0.0
        %1297 = vmatprep.subr.mxu0 0.0
        %1298 = vmatpush1.msra.mxu0 0.0
        %1299 = vmatprep.mubr.f32.mxu0 0.0
        %1300 = vmatmul.mubr.f32.gmra.mrb[0].mxu0 %v1214
        %v1301 = vpop.f32.mrb[0].mxu0
        %v1302 = vadd.f32 %v1234, %v1301
        %v1303 = vpop.f32.mrb[0].mxu0
        %1304 = vdwg.mxu0
        %v1305 = vadd.f32 %v1124, %v1302
        %v1306 = vsel %vm264, %v1305, 0.0
        %1307 = vadd.xlane.f32.xlu0 %v1306
        %v1308 = vpop.xlane.xlu0 %1307
        %v1309 = vmul.f32 %v1308, %v1104
        %v1310 = vsub.f32 %v1305, %v1309
        %v1311 = vmul.f32 %v1310, %v1310
        %v1312 = vsel %vm264, %v1311, 0.0
        %1313 = vadd.xlane.f32.xlu0 %v1312
        %v1314 = vpop.xlane.xlu0 %1313
        %v1315 = vmul.f32 %v1314, %v1104
        %v1316 = vadd.f32 %v1315, 1e-05
        %v1317 = vrsqrt.pop %v1316
        %v1318 = vmul.f32 %v1310, %v1317
        %v1319 = vlaneseq
        %v1320 = vshrl.u32 %v1319, 7
        %v1321 = vsub.s32 0, %v1320
        %v1322 = vrot.slane %v254, %v1321
        %v1323 = vmul.f32 %v1318, %v1322
        %v1324 = vlaneseq
        %v1325 = vshrl.u32 %v1324, 7
        %v1326 = vsub.s32 0, %v1325
        %v1327 = vrot.slane %v255, %v1326
        %v1328 = vadd.f32 %v1323, %v1327
        %s1329 = scalar_lea.vmem %s5, 8
        %v1330 = vld [vmem:[%s1329] sm:$0x1]
        %v1331 = vld [vmem:[%s1329 + $0x1] sm:$0x1]
        %v1332 = vld [vmem:[%s1329 + $0x2] sm:$0x1]
        %v1333 = vld [vmem:[%s1329 + $0x3] sm:$0x1]
        %v1334 = vld [vmem:[%s1329 + $0x4] sm:$0x1]
        %v1335 = vld [vmem:[%s1329 + $0x5] sm:$0x1]
        %v1336 = vld [vmem:[%s1329 + $0x6] sm:$0x1]
        %v1337 = vld [vmem:[%s1329 + $0x7] sm:$0x1]
        %s1338 = scalar_lea.vmem %s1, 32
        %v1339 = vld [vmem:[%s1338] sm:$0xff]
        %v1340 = vld [vmem:[%s1338 + $0x8] sm:$0xff]
        %v1341 = vld [vmem:[%s1338 + $0x10] sm:$0xff]
        %v1342 = vld [vmem:[%s1338 + $0x18] sm:$0xff]
        %v1343 = vlaneseq
        %v1344 = vshrl.u32 %v1343, 7
        %v1345 = vsub.s32 0, %v1344
        %v1346 = vrot.slane %v1330, %v1345
        %v1348 = vsel %vm264, %v1328, 0
        %1350 = vmatprep.subr.mxu0 0.0
        %1351 = vmatpush1.msra.mxu0 %v1339
        %1352 = vmatprep.subr.mxu0 0.0
        %1353 = vmatpush1.msra.mxu0 %v1340
        %1354 = vmatprep.subr.mxu0 0.0
        %1355 = vmatpush1.msra.mxu0 %v1341
        %1356 = vmatprep.subr.mxu0 0.0
        %1357 = vmatpush1.msra.mxu0 %v1342
        %1358 = vmatprep.subr.mxu0 0.0
        %1359 = vmatpush1.msra.mxu0 0.0
        %1360 = vmatprep.subr.mxu0 0.0
        %1361 = vmatpush1.msra.mxu0 0.0
        %1362 = vmatprep.subr.mxu0 0.0
        %1363 = vmatpush1.msra.mxu0 0.0
        %1364 = vmatprep.subr.mxu0 0.0
        %1365 = vmatpush1.msra.mxu0 0.0
        %1366 = vmatprep.subr.mxu0 0.0
        %1367 = vmatpush1.msra.mxu0 0.0
        %1368 = vmatprep.subr.mxu0 0.0
        %1369 = vmatpush1.msra.mxu0 0.0
        %1370 = vmatprep.subr.mxu0 0.0
        %1371 = vmatpush1.msra.mxu0 0.0
        %1372 = vmatprep.subr.mxu0 0.0
        %1373 = vmatpush1.msra.mxu0 0.0
        %1374 = vmatprep.subr.mxu0 0.0
        %1375 = vmatpush1.msra.mxu0 0.0
        %1376 = vmatprep.subr.mxu0 0.0
        %1377 = vmatpush1.msra.mxu0 0.0
        %1378 = vmatprep.subr.mxu0 0.0
        %1379 = vmatpush1.msra.mxu0 0.0
        %1380 = vmatprep.subr.mxu0 0.0
        %1381 = vmatpush1.msra.mxu0 0.0
        %1382 = vmatprep.subr.mxu0 0.0
        %1383 = vmatpush1.msra.mxu0 0.0
        %1384 = vmatprep.subr.mxu0 0.0
        %1385 = vmatpush1.msra.mxu0 0.0
        %1386 = vmatprep.subr.mxu0 0.0
        %1387 = vmatpush1.msra.mxu0 0.0
        %1388 = vmatprep.subr.mxu0 0.0
        %1389 = vmatpush1.msra.mxu0 0.0
        %1390 = vmatprep.subr.mxu0 0.0
        %1391 = vmatpush1.msra.mxu0 0.0
        %1392 = vmatprep.subr.mxu0 0.0
        %1393 = vmatpush1.msra.mxu0 0.0
        %1394 = vmatprep.subr.mxu0 0.0
        %1395 = vmatpush1.msra.mxu0 0.0
        %1396 = vmatprep.subr.mxu0 0.0
        %1397 = vmatpush1.msra.mxu0 0.0
        %1398 = vmatprep.subr.mxu0 0.0
        %1399 = vmatpush1.msra.mxu0 0.0
        %1400 = vmatprep.subr.mxu0 0.0
        %1401 = vmatpush1.msra.mxu0 0.0
        %1402 = vmatprep.subr.mxu0 0.0
        %1403 = vmatpush1.msra.mxu0 0.0
        %1404 = vmatprep.subr.mxu0 0.0
        %1405 = vmatpush1.msra.mxu0 0.0
        %1406 = vmatprep.subr.mxu0 0.0
        %1407 = vmatpush1.msra.mxu0 0.0
        %1408 = vmatprep.subr.mxu0 0.0
        %1409 = vmatpush1.msra.mxu0 0.0
        %1410 = vmatprep.subr.mxu0 0.0
        %1411 = vmatpush1.msra.mxu0 0.0
        %1412 = vmatprep.subr.mxu0 0.0
        %1413 = vmatpush1.msra.mxu0 0.0
        %1414 = vmatprep.mubr.f32.mxu0 0.0
        %1415 = vmatmul.mubr.f32.gmra.mrb[0].mxu0 %v1348
        %v1416 = vpop.f32.mrb[0].mxu0
        %v1417 = vadd.f32 %v1346, %v1416
        %v1418 = vpop.f32.mrb[0].mxu0
        %1419 = vdwg.mxu0
        %1421 = vrot.lane.b32.xlu0 %v1417, 96
        %v1422 = vpop.permute.xlu0 %1421
        %v1423 = vsel %vm341, %v1417, 0
        %v1425 = vsel %vm341, %v1422, 0
        %1427 = vmatprep.subr.mxu0 0.0
        %1428 = vmatpush1.xpose.msra.mxu0 %v1425
        %1429 = vmatprep.subr.mxu0 0.0
        %1430 = vmatpush1.xpose.msra.mxu0 0.0
        %1431 = vmatprep.subr.mxu0 0.0
        %1432 = vmatpush1.xpose.msra.mxu0 0.0
        %1433 = vmatprep.subr.mxu0 0.0
        %1434 = vmatpush1.xpose.msra.mxu0 0.0
        %1435 = vmatprep.subr.mxu0 0.0
        %1436 = vmatpush1.xpose.msra.mxu0 0.0
        %1437 = vmatprep.subr.mxu0 0.0
        %1438 = vmatpush1.xpose.msra.mxu0 0.0
        %1439 = vmatprep.subr.mxu0 0.0
        %1440 = vmatpush1.xpose.msra.mxu0 0.0
        %1441 = vmatprep.subr.mxu0 0.0
        %1442 = vmatpush1.xpose.msra.mxu0 0.0
        %1443 = vmatprep.subr.mxu0 0.0
        %1444 = vmatpush1.xpose.msra.mxu0 0.0
        %1445 = vmatprep.subr.mxu0 0.0
        %1446 = vmatpush1.xpose.msra.mxu0 0.0
        %1447 = vmatprep.subr.mxu0 0.0
        %1448 = vmatpush1.xpose.msra.mxu0 0.0
        %1449 = vmatprep.subr.mxu0 0.0
        %1450 = vmatpush1.xpose.msra.mxu0 0.0
        %1451 = vmatprep.subr.mxu0 0.0
        %1452 = vmatpush1.xpose.msra.mxu0 0.0
        %1453 = vmatprep.subr.mxu0 0.0
        %1454 = vmatpush1.xpose.msra.mxu0 0.0
        %1455 = vmatprep.subr.mxu0 0.0
        %1456 = vmatpush1.xpose.msra.mxu0 0.0
        %1457 = vmatprep.subr.mxu0 0.0
        %1458 = vmatpush1.xpose.msra.mxu0 0.0
        %1459 = vmatprep.subr.mxu0 0.0
        %1460 = vmatpush1.xpose.msra.mxu0 0.0
        %1461 = vmatprep.subr.mxu0 0.0
        %1462 = vmatpush1.xpose.msra.mxu0 0.0
        %1463 = vmatprep.subr.mxu0 0.0
        %1464 = vmatpush1.xpose.msra.mxu0 0.0
        %1465 = vmatprep.subr.mxu0 0.0
        %1466 = vmatpush1.xpose.msra.mxu0 0.0
        %1467 = vmatprep.subr.mxu0 0.0
        %1468 = vmatpush1.xpose.msra.mxu0 0.0
        %1469 = vmatprep.subr.mxu0 0.0
        %1470 = vmatpush1.xpose.msra.mxu0 0.0
        %1471 = vmatprep.subr.mxu0 0.0
        %1472 = vmatpush1.xpose.msra.mxu0 0.0
        %1473 = vmatprep.subr.mxu0 0.0
        %1474 = vmatpush1.xpose.msra.mxu0 0.0
        %1475 = vmatprep.subr.mxu0 0.0
        %1476 = vmatpush1.xpose.msra.mxu0 0.0
        %1477 = vmatprep.subr.mxu0 0.0
        %1478 = vmatpush1.xpose.msra.mxu0 0.0
        %1479 = vmatprep.subr.mxu0 0.0
        %1480 = vmatpush1.xpose.msra.mxu0 0.0
        %1481 = vmatprep.subr.mxu0 0.0
        %1482 = vmatpush1.xpose.msra.mxu0 0.0
        %1483 = vmatprep.subr.mxu0 0.0
        %1484 = vmatpush1.xpose.msra.mxu0 0.0
        %1485 = vmatprep.subr.mxu0 0.0
        %1486 = vmatpush1.xpose.msra.mxu0 0.0
        %1487 = vmatprep.subr.mxu0 0.0
        %1488 = vmatpush1.xpose.msra.mxu0 0.0
        %1489 = vmatprep.subr.mxu0 0.0
        %1490 = vmatpush1.xpose.msra.mxu0 0.0
        %1491 = vmatprep.mubr.f32.mxu0 0.0
        %1492 = vmatmul.mubr.f32.gmra.mrb[0].mxu0 %v1423
        %v1493 = vpop.f32.mrb[0].mxu0
        %v1494 = vadd.f32 0.0, %v1493
        %v1495 = vpop.f32.mrb[0].mxu0
        %1496 = vdwg.mxu0
        %v1497 = vmul.f32 %v1494, 0.35355338
        %v1498 = vsel %vm341, %v1497, -inf
        %1499 = vmax.xlane.f32.xlu0 %v1498
        %v1500 = vpop.xlane.xlu0 %1499
        %v1501 = vsub.f32 %v1497, %v1500
        %v1502 = vmul.f32 %v1501, 1.442695
        %v1503 = vpow.pop %v1502
        %v1504 = vsel %vm341, %v1503, 0.0
        %1505 = vadd.xlane.f32.xlu0 %v1504
        %v1506 = vpop.xlane.xlu0 %1505
        %v1507 = vrcp.pop %v1506
        %v1508 = vmul.f32 %v1503, %v1507
        %1509 = vrot.lane.b32.xlu0 %v1417, 64
        %v1510 = vpop.permute.xlu0 %1509
        %v1513 = vsel %vm341, %v1508, 0
        %1515 = vmatprep.subr.mxu0 0.0
        %1516 = vmatpush1.msra.mxu0 %v1510
        %1517 = vmatprep.subr.mxu0 0.0
        %1518 = vmatpush1.msra.mxu0 0.0
        %1519 = vmatprep.subr.mxu0 0.0
        %1520 = vmatpush1.msra.mxu0 0.0
        %1521 = vmatprep.subr.mxu0 0.0
        %1522 = vmatpush1.msra.mxu0 0.0
        %1523 = vmatprep.subr.mxu0 0.0
        %1524 = vmatpush1.msra.mxu0 0.0
        %1525 = vmatprep.subr.mxu0 0.0
        %1526 = vmatpush1.msra.mxu0 0.0
        %1527 = vmatprep.subr.mxu0 0.0
        %1528 = vmatpush1.msra.mxu0 0.0
        %1529 = vmatprep.subr.mxu0 0.0
        %1530 = vmatpush1.msra.mxu0 0.0
        %1531 = vmatprep.subr.mxu0 0.0
        %1532 = vmatpush1.msra.mxu0 0.0
        %1533 = vmatprep.subr.mxu0 0.0
        %1534 = vmatpush1.msra.mxu0 0.0
        %1535 = vmatprep.subr.mxu0 0.0
        %1536 = vmatpush1.msra.mxu0 0.0
        %1537 = vmatprep.subr.mxu0 0.0
        %1538 = vmatpush1.msra.mxu0 0.0
        %1539 = vmatprep.subr.mxu0 0.0
        %1540 = vmatpush1.msra.mxu0 0.0
        %1541 = vmatprep.subr.mxu0 0.0
        %1542 = vmatpush1.msra.mxu0 0.0
        %1543 = vmatprep.subr.mxu0 0.0
        %1544 = vmatpush1.msra.mxu0 0.0
        %1545 = vmatprep.subr.mxu0 0.0
        %1546 = vmatpush1.msra.mxu0 0.0
        %1547 = vmatprep.subr.mxu0 0.0
        %1548 = vmatpush1.msra.mxu0 0.0
        %1549 = vmatprep.subr.mxu0 0.0
        %1550 = vmatpush1.msra.mxu0 0.0
        %1551 = vmatprep.subr.mxu0 0.0
        %1552 = vmatpush1.msra.mxu0 0.0
        %1553 = vmatprep.subr.mxu0 0.0
        %1554 = vmatpush1.msra.mxu0 0.0
        %1555 = vmatprep.subr.mxu0 0.0
        %1556 = vmatpush1.msra.mxu0 0.0
        %1557 = vmatprep.subr.mxu0 0.0
        %1558 = vmatpush1.msra.mxu0 0.0
        %1559 = vmatprep.subr.mxu0 0.0
        %1560 = vmatpush1.msra.mxu0 0.0
        %1561 = vmatprep.subr.mxu0 0.0
        %1562 = vmatpush1.msra.mxu0 0.0
        %1563 = vmatprep.subr.mxu0 0.0
        %1564 = vmatpush1.msra.mxu0 0.0
        %1565 = vmatprep.subr.mxu0 0.0
        %1566 = vmatpush1.msra.mxu0 0.0
        %1567 = vmatprep.subr.mxu0 0.0
        %1568 = vmatpush1.msra.mxu0 0.0
        %1569 = vmatprep.subr.mxu0 0.0
        %1570 = vmatpush1.msra.mxu0 0.0
        %1571 = vmatprep.subr.mxu0 0.0
        %1572 = vmatpush1.msra.mxu0 0.0
        %1573 = vmatprep.subr.mxu0 0.0
        %1574 = vmatpush1.msra.mxu0 0.0
        %1575 = vmatprep.subr.mxu0 0.0
        %1576 = vmatpush1.msra.mxu0 0.0
        %1577 = vmatprep.subr.mxu0 0.0
        %1578 = vmatpush1.msra.mxu0 0.0
        %1579 = vmatprep.mubr.f32.mxu0 0.0
        %1580 = vmatmul.mubr.f32.gmra.mrb[0].mxu0 %v1513
        %v1581 = vpop.f32.mrb[0].mxu0
        %v1582 = vadd.f32 0.0, %v1581
        %v1583 = vpop.f32.mrb[0].mxu0
        %1584 = vdwg.mxu0
        %1585 = vrot.lane.b32.xlu0 %v1417, 120
        %v1586 = vpop.permute.xlu0 %1585
        %1587 = vrot.lane.b32.xlu0 %v1417, 88
        %v1588 = vpop.permute.xlu0 %1587
        %v1589 = vsel %vm341, %v1586, 0
        %v1591 = vsel %vm341, %v1588, 0
        %1593 = vmatprep.subr.mxu0 0.0
        %1594 = vmatpush1.xpose.msra.mxu0 %v1591
        %1595 = vmatprep.subr.mxu0 0.0
        %1596 = vmatpush1.xpose.msra.mxu0 0.0
        %1597 = vmatprep.subr.mxu0 0.0
        %1598 = vmatpush1.xpose.msra.mxu0 0.0
        %1599 = vmatprep.subr.mxu0 0.0
        %1600 = vmatpush1.xpose.msra.mxu0 0.0
        %1601 = vmatprep.subr.mxu0 0.0
        %1602 = vmatpush1.xpose.msra.mxu0 0.0
        %1603 = vmatprep.subr.mxu0 0.0
        %1604 = vmatpush1.xpose.msra.mxu0 0.0
        %1605 = vmatprep.subr.mxu0 0.0
        %1606 = vmatpush1.xpose.msra.mxu0 0.0
        %1607 = vmatprep.subr.mxu0 0.0
        %1608 = vmatpush1.xpose.msra.mxu0 0.0
        %1609 = vmatprep.subr.mxu0 0.0
        %1610 = vmatpush1.xpose.msra.mxu0 0.0
        %1611 = vmatprep.subr.mxu0 0.0
        %1612 = vmatpush1.xpose.msra.mxu0 0.0
        %1613 = vmatprep.subr.mxu0 0.0
        %1614 = vmatpush1.xpose.msra.mxu0 0.0
        %1615 = vmatprep.subr.mxu0 0.0
        %1616 = vmatpush1.xpose.msra.mxu0 0.0
        %1617 = vmatprep.subr.mxu0 0.0
        %1618 = vmatpush1.xpose.msra.mxu0 0.0
        %1619 = vmatprep.subr.mxu0 0.0
        %1620 = vmatpush1.xpose.msra.mxu0 0.0
        %1621 = vmatprep.subr.mxu0 0.0
        %1622 = vmatpush1.xpose.msra.mxu0 0.0
        %1623 = vmatprep.subr.mxu0 0.0
        %1624 = vmatpush1.xpose.msra.mxu0 0.0
        %1625 = vmatprep.subr.mxu0 0.0
        %1626 = vmatpush1.xpose.msra.mxu0 0.0
        %1627 = vmatprep.subr.mxu0 0.0
        %1628 = vmatpush1.xpose.msra.mxu0 0.0
        %1629 = vmatprep.subr.mxu0 0.0
        %1630 = vmatpush1.xpose.msra.mxu0 0.0
        %1631 = vmatprep.subr.mxu0 0.0
        %1632 = vmatpush1.xpose.msra.mxu0 0.0
        %1633 = vmatprep.subr.mxu0 0.0
        %1634 = vmatpush1.xpose.msra.mxu0 0.0
        %1635 = vmatprep.subr.mxu0 0.0
        %1636 = vmatpush1.xpose.msra.mxu0 0.0
        %1637 = vmatprep.subr.mxu0 0.0
        %1638 = vmatpush1.xpose.msra.mxu0 0.0
        %1639 = vmatprep.subr.mxu0 0.0
        %1640 = vmatpush1.xpose.msra.mxu0 0.0
        %1641 = vmatprep.subr.mxu0 0.0
        %1642 = vmatpush1.xpose.msra.mxu0 0.0
        %1643 = vmatprep.subr.mxu0 0.0
        %1644 = vmatpush1.xpose.msra.mxu0 0.0
        %1645 = vmatprep.subr.mxu0 0.0
        %1646 = vmatpush1.xpose.msra.mxu0 0.0
        %1647 = vmatprep.subr.mxu0 0.0
        %1648 = vmatpush1.xpose.msra.mxu0 0.0
        %1649 = vmatprep.subr.mxu0 0.0
        %1650 = vmatpush1.xpose.msra.mxu0 0.0
        %1651 = vmatprep.subr.mxu0 0.0
        %1652 = vmatpush1.xpose.msra.mxu0 0.0
        %1653 = vmatprep.subr.mxu0 0.0
        %1654 = vmatpush1.xpose.msra.mxu0 0.0
        %1655 = vmatprep.subr.mxu0 0.0
        %1656 = vmatpush1.xpose.msra.mxu0 0.0
        %1657 = vmatprep.mubr.f32.mxu0 0.0
        %1658 = vmatmul.mubr.f32.gmra.mrb[0].mxu0 %v1589
        %v1659 = vpop.f32.mrb[0].mxu0
        %v1660 = vadd.f32 0.0, %v1659
        %v1661 = vpop.f32.mrb[0].mxu0
        %1662 = vdwg.mxu0
        %v1663 = vmul.f32 %v1660, 0.35355338
        %v1664 = vsel %vm341, %v1663, -inf
        %1665 = vmax.xlane.f32.xlu0 %v1664
        %v1666 = vpop.xlane.xlu0 %1665
        %v1667 = vsub.f32 %v1663, %v1666
        %v1668 = vmul.f32 %v1667, 1.442695
        %v1669 = vpow.pop %v1668
        %v1670 = vsel %vm341, %v1669, 0.0
        %1671 = vadd.xlane.f32.xlu0 %v1670
        %v1672 = vpop.xlane.xlu0 %1671
        %v1673 = vrcp.pop %v1672
        %v1674 = vmul.f32 %v1669, %v1673
        %1675 = vrot.lane.b32.xlu0 %v1417, 56
        %v1676 = vpop.permute.xlu0 %1675
        %v1679 = vsel %vm341, %v1674, 0
        %1681 = vmatprep.subr.mxu0 0.0
        %1682 = vmatpush1.msra.mxu0 %v1676
        %1683 = vmatprep.subr.mxu0 0.0
        %1684 = vmatpush1.msra.mxu0 0.0
        %1685 = vmatprep.subr.mxu0 0.0
        %1686 = vmatpush1.msra.mxu0 0.0
        %1687 = vmatprep.subr.mxu0 0.0
        %1688 = vmatpush1.msra.mxu0 0.0
        %1689 = vmatprep.subr.mxu0 0.0
        %1690 = vmatpush1.msra.mxu0 0.0
        %1691 = vmatprep.subr.mxu0 0.0
        %1692 = vmatpush1.msra.mxu0 0.0
        %1693 = vmatprep.subr.mxu0 0.0
        %1694 = vmatpush1.msra.mxu0 0.0
        %1695 = vmatprep.subr.mxu0 0.0
        %1696 = vmatpush1.msra.mxu0 0.0
        %1697 = vmatprep.subr.mxu0 0.0
        %1698 = vmatpush1.msra.mxu0 0.0
        %1699 = vmatprep.subr.mxu0 0.0
        %1700 = vmatpush1.msra.mxu0 0.0
        %1701 = vmatprep.subr.mxu0 0.0
        %1702 = vmatpush1.msra.mxu0 0.0
        %1703 = vmatprep.subr.mxu0 0.0
        %1704 = vmatpush1.msra.mxu0 0.0
        %1705 = vmatprep.subr.mxu0 0.0
        %1706 = vmatpush1.msra.mxu0 0.0
        %1707 = vmatprep.subr.mxu0 0.0
        %1708 = vmatpush1.msra.mxu0 0.0
        %1709 = vmatprep.subr.mxu0 0.0
        %1710 = vmatpush1.msra.mxu0 0.0
        %1711 = vmatprep.subr.mxu0 0.0
        %1712 = vmatpush1.msra.mxu0 0.0
        %1713 = vmatprep.subr.mxu0 0.0
        %1714 = vmatpush1.msra.mxu0 0.0
        %1715 = vmatprep.subr.mxu0 0.0
        %1716 = vmatpush1.msra.mxu0 0.0
        %1717 = vmatprep.subr.mxu0 0.0
        %1718 = vmatpush1.msra.mxu0 0.0
        %1719 = vmatprep.subr.mxu0 0.0
        %1720 = vmatpush1.msra.mxu0 0.0
        %1721 = vmatprep.subr.mxu0 0.0
        %1722 = vmatpush1.msra.mxu0 0.0
        %1723 = vmatprep.subr.mxu0 0.0
        %1724 = vmatpush1.msra.mxu0 0.0
        %1725 = vmatprep.subr.mxu0 0.0
        %1726 = vmatpush1.msra.mxu0 0.0
        %1727 = vmatprep.subr.mxu0 0.0
        %1728 = vmatpush1.msra.mxu0 0.0
        %1729 = vmatprep.subr.mxu0 0.0
        %1730 = vmatpush1.msra.mxu0 0.0
        %1731 = vmatprep.subr.mxu0 0.0
        %1732 = vmatpush1.msra.mxu0 0.0
        %1733 = vmatprep.subr.mxu0 0.0
        %1734 = vmatpush1.msra.mxu0 0.0
        %1735 = vmatprep.subr.mxu0 0.0
        %1736 = vmatpush1.msra.mxu0 0.0
        %1737 = vmatprep.subr.mxu0 0.0
        %1738 = vmatpush1.msra.mxu0 0.0
        %1739 = vmatprep.subr.mxu0 0.0
        %1740 = vmatpush1.msra.mxu0 0.0
        %1741 = vmatprep.subr.mxu0 0.0
        %1742 = vmatpush1.msra.mxu0 0.0
        %1743 = vmatprep.subr.mxu0 0.0
        %1744 = vmatpush1.msra.mxu0 0.0
        %1745 = vmatprep.mubr.f32.mxu0 0.0
        %1746 = vmatmul.mubr.f32.gmra.mrb[0].mxu0 %v1679
        %v1747 = vpop.f32.mrb[0].mxu0
        %v1748 = vadd.f32 0.0, %v1747
        %v1749 = vpop.f32.mrb[0].mxu0
        %1750 = vdwg.mxu0
        %1751 = vrot.lane.b32.xlu0 %v1417, 112
        %v1752 = vpop.permute.xlu0 %1751
        %1753 = vrot.lane.b32.xlu0 %v1417, 80
        %v1754 = vpop.permute.xlu0 %1753
        %v1755 = vsel %vm341, %v1752, 0
        %v1757 = vsel %vm341, %v1754, 0
        %1759 = vmatprep.subr.mxu0 0.0
        %1760 = vmatpush1.xpose.msra.mxu0 %v1757
        %1761 = vmatprep.subr.mxu0 0.0
        %1762 = vmatpush1.xpose.msra.mxu0 0.0
        %1763 = vmatprep.subr.mxu0 0.0
        %1764 = vmatpush1.xpose.msra.mxu0 0.0
        %1765 = vmatprep.subr.mxu0 0.0
        %1766 = vmatpush1.xpose.msra.mxu0 0.0
        %1767 = vmatprep.subr.mxu0 0.0
        %1768 = vmatpush1.xpose.msra.mxu0 0.0
        %1769 = vmatprep.subr.mxu0 0.0
        %1770 = vmatpush1.xpose.msra.mxu0 0.0
        %1771 = vmatprep.subr.mxu0 0.0
        %1772 = vmatpush1.xpose.msra.mxu0 0.0
        %1773 = vmatprep.subr.mxu0 0.0
        %1774 = vmatpush1.xpose.msra.mxu0 0.0
        %1775 = vmatprep.subr.mxu0 0.0
        %1776 = vmatpush1.xpose.msra.mxu0 0.0
        %1777 = vmatprep.subr.mxu0 0.0
        %1778 = vmatpush1.xpose.msra.mxu0 0.0
        %1779 = vmatprep.subr.mxu0 0.0
        %1780 = vmatpush1.xpose.msra.mxu0 0.0
        %1781 = vmatprep.subr.mxu0 0.0
        %1782 = vmatpush1.xpose.msra.mxu0 0.0
        %1783 = vmatprep.subr.mxu0 0.0
        %1784 = vmatpush1.xpose.msra.mxu0 0.0
        %1785 = vmatprep.subr.mxu0 0.0
        %1786 = vmatpush1.xpose.msra.mxu0 0.0
        %1787 = vmatprep.subr.mxu0 0.0
        %1788 = vmatpush1.xpose.msra.mxu0 0.0
        %1789 = vmatprep.subr.mxu0 0.0
        %1790 = vmatpush1.xpose.msra.mxu0 0.0
        %1791 = vmatprep.subr.mxu0 0.0
        %1792 = vmatpush1.xpose.msra.mxu0 0.0
        %1793 = vmatprep.subr.mxu0 0.0
        %1794 = vmatpush1.xpose.msra.mxu0 0.0
        %1795 = vmatprep.subr.mxu0 0.0
        %1796 = vmatpush1.xpose.msra.mxu0 0.0
        %1797 = vmatprep.subr.mxu0 0.0
        %1798 = vmatpush1.xpose.msra.mxu0 0.0
        %1799 = vmatprep.subr.mxu0 0.0
        %1800 = vmatpush1.xpose.msra.mxu0 0.0
        %1801 = vmatprep.subr.mxu0 0.0
        %1802 = vmatpush1.xpose.msra.mxu0 0.0
        %1803 = vmatprep.subr.mxu0 0.0
        %1804 = vmatpush1.xpose.msra.mxu0 0.0
        %1805 = vmatprep.subr.mxu0 0.0
        %1806 = vmatpush1.xpose.msra.mxu0 0.0
        %1807 = vmatprep.subr.mxu0 0.0
        %1808 = vmatpush1.xpose.msra.mxu0 0.0
        %1809 = vmatprep.subr.mxu0 0.0
        %1810 = vmatpush1.xpose.msra.mxu0 0.0
        %1811 = vmatprep.subr.mxu0 0.0
        %1812 = vmatpush1.xpose.msra.mxu0 0.0
        %1813 = vmatprep.subr.mxu0 0.0
        %1814 = vmatpush1.xpose.msra.mxu0 0.0
        %1815 = vmatprep.subr.mxu0 0.0
        %1816 = vmatpush1.xpose.msra.mxu0 0.0
        %1817 = vmatprep.subr.mxu0 0.0
        %1818 = vmatpush1.xpose.msra.mxu0 0.0
        %1819 = vmatprep.subr.mxu0 0.0
        %1820 = vmatpush1.xpose.msra.mxu0 0.0
        %1821 = vmatprep.subr.mxu0 0.0
        %1822 = vmatpush1.xpose.msra.mxu0 0.0
        %1823 = vmatprep.mubr.f32.mxu0 0.0
        %1824 = vmatmul.mubr.f32.gmra.mrb[0].mxu0 %v1755
        %v1825 = vpop.f32.mrb[0].mxu0
        %v1826 = vadd.f32 0.0, %v1825
        %v1827 = vpop.f32.mrb[0].mxu0
        %1828 = vdwg.mxu0
        %v1829 = vmul.f32 %v1826, 0.35355338
        %v1830 = vsel %vm341, %v1829, -inf
        %1831 = vmax.xlane.f32.xlu0 %v1830
        %v1832 = vpop.xlane.xlu0 %1831
        %v1833 = vsub.f32 %v1829, %v1832
        %v1834 = vmul.f32 %v1833, 1.442695
        %v1835 = vpow.pop %v1834
        %v1836 = vsel %vm341, %v1835, 0.0
        %1837 = vadd.xlane.f32.xlu0 %v1836
        %v1838 = vpop.xlane.xlu0 %1837
        %v1839 = vrcp.pop %v1838
        %v1840 = vmul.f32 %v1835, %v1839
        %1841 = vrot.lane.b32.xlu0 %v1417, 48
        %v1842 = vpop.permute.xlu0 %1841
        %v1845 = vsel %vm341, %v1840, 0
        %1847 = vmatprep.subr.mxu0 0.0
        %1848 = vmatpush1.msra.mxu0 %v1842
        %1849 = vmatprep.subr.mxu0 0.0
        %1850 = vmatpush1.msra.mxu0 0.0
        %1851 = vmatprep.subr.mxu0 0.0
        %1852 = vmatpush1.msra.mxu0 0.0
        %1853 = vmatprep.subr.mxu0 0.0
        %1854 = vmatpush1.msra.mxu0 0.0
        %1855 = vmatprep.subr.mxu0 0.0
        %1856 = vmatpush1.msra.mxu0 0.0
        %1857 = vmatprep.subr.mxu0 0.0
        %1858 = vmatpush1.msra.mxu0 0.0
        %1859 = vmatprep.subr.mxu0 0.0
        %1860 = vmatpush1.msra.mxu0 0.0
        %1861 = vmatprep.subr.mxu0 0.0
        %1862 = vmatpush1.msra.mxu0 0.0
        %1863 = vmatprep.subr.mxu0 0.0
        %1864 = vmatpush1.msra.mxu0 0.0
        %1865 = vmatprep.subr.mxu0 0.0
        %1866 = vmatpush1.msra.mxu0 0.0
        %1867 = vmatprep.subr.mxu0 0.0
        %1868 = vmatpush1.msra.mxu0 0.0
        %1869 = vmatprep.subr.mxu0 0.0
        %1870 = vmatpush1.msra.mxu0 0.0
        %1871 = vmatprep.subr.mxu0 0.0
        %1872 = vmatpush1.msra.mxu0 0.0
        %1873 = vmatprep.subr.mxu0 0.0
        %1874 = vmatpush1.msra.mxu0 0.0
        %1875 = vmatprep.subr.mxu0 0.0
        %1876 = vmatpush1.msra.mxu0 0.0
        %1877 = vmatprep.subr.mxu0 0.0
        %1878 = vmatpush1.msra.mxu0 0.0
        %1879 = vmatprep.subr.mxu0 0.0
        %1880 = vmatpush1.msra.mxu0 0.0
        %1881 = vmatprep.subr.mxu0 0.0
        %1882 = vmatpush1.msra.mxu0 0.0
        %1883 = vmatprep.subr.mxu0 0.0
        %1884 = vmatpush1.msra.mxu0 0.0
        %1885 = vmatprep.subr.mxu0 0.0
        %1886 = vmatpush1.msra.mxu0 0.0
        %1887 = vmatprep.subr.mxu0 0.0
        %1888 = vmatpush1.msra.mxu0 0.0
        %1889 = vmatprep.subr.mxu0 0.0
        %1890 = vmatpush1.msra.mxu0 0.0
        %1891 = vmatprep.subr.mxu0 0.0
        %1892 = vmatpush1.msra.mxu0 0.0
        %1893 = vmatprep.subr.mxu0 0.0
        %1894 = vmatpush1.msra.mxu0 0.0
        %1895 = vmatprep.subr.mxu0 0.0
        %1896 = vmatpush1.msra.mxu0 0.0
        %1897 = vmatprep.subr.mxu0 0.0
        %1898 = vmatpush1.msra.mxu0 0.0
        %1899 = vmatprep.subr.mxu0 0.0
        %1900 = vmatpush1.msra.mxu0 0.0
        %1901 = vmatprep.subr.mxu0 0.0
        %1902 = vmatpush1.msra.mxu0 0.0
        %1903 = vmatprep.subr.mxu0 0.0
        %1904 = vmatpush1.msra.mxu0 0.0
        %1905 = vmatprep.subr.mxu0 0.0
        %1906 = vmatpush1.msra.mxu0 0.0
        %1907 = vmatprep.subr.mxu0 0.0
        %1908 = vmatpush1.msra.mxu0 0.0
        %1909 = vmatprep.subr.mxu0 0.0
        %1910 = vmatpush1.msra.mxu0 0.0
        %1911 = vmatprep.mubr.f32.mxu0 0.0
        %1912 = vmatmul.mubr.f32.gmra.mrb[0].mxu0 %v1845
        %v1913 = vpop.f32.mrb[0].mxu0
        %v1914 = vadd.f32 0.0, %v1913
        %v1915 = vpop.f32.mrb[0].mxu0
        %1916 = vdwg.mxu0
        %1917 = vrot.lane.b32.xlu0 %v1417, 104
        %v1918 = vpop.permute.xlu0 %1917
        %1919 = vrot.lane.b32.xlu0 %v1417, 72
        %v1920 = vpop.permute.xlu0 %1919
        %v1921 = vsel %vm341, %v1918, 0
        %v1923 = vsel %vm341, %v1920, 0
        %1925 = vmatprep.subr.mxu0 0.0
        %1926 = vmatpush1.xpose.msra.mxu0 %v1923
        %1927 = vmatprep.subr.mxu0 0.0
        %1928 = vmatpush1.xpose.msra.mxu0 0.0
        %1929 = vmatprep.subr.mxu0 0.0
        %1930 = vmatpush1.xpose.msra.mxu0 0.0
        %1931 = vmatprep.subr.mxu0 0.0
        %1932 = vmatpush1.xpose.msra.mxu0 0.0
        %1933 = vmatprep.subr.mxu0 0.0
        %1934 = vmatpush1.xpose.msra.mxu0 0.0
        %1935 = vmatprep.subr.mxu0 0.0
        %1936 = vmatpush1.xpose.msra.mxu0 0.0
        %1937 = vmatprep.subr.mxu0 0.0
        %1938 = vmatpush1.xpose.msra.mxu0 0.0
        %1939 = vmatprep.subr.mxu0 0.0
        %1940 = vmatpush1.xpose.msra.mxu0 0.0
        %1941 = vmatprep.subr.mxu0 0.0
        %1942 = vmatpush1.xpose.msra.mxu0 0.0
        %1943 = vmatprep.subr.mxu0 0.0
        %1944 = vmatpush1.xpose.msra.mxu0 0.0
        %1945 = vmatprep.subr.mxu0 0.0
        %1946 = vmatpush1.xpose.msra.mxu0 0.0
        %1947 = vmatprep.subr.mxu0 0.0
        %1948 = vmatpush1.xpose.msra.mxu0 0.0
        %1949 = vmatprep.subr.mxu0 0.0
        %1950 = vmatpush1.xpose.msra.mxu0 0.0
        %1951 = vmatprep.subr.mxu0 0.0
        %1952 = vmatpush1.xpose.msra.mxu0 0.0
        %1953 = vmatprep.subr.mxu0 0.0
        %1954 = vmatpush1.xpose.msra.mxu0 0.0
        %1955 = vmatprep.subr.mxu0 0.0
        %1956 = vmatpush1.xpose.msra.mxu0 0.0
        %1957 = vmatprep.subr.mxu0 0.0
        %1958 = vmatpush1.xpose.msra.mxu0 0.0
        %1959 = vmatprep.subr.mxu0 0.0
        %1960 = vmatpush1.xpose.msra.mxu0 0.0
        %1961 = vmatprep.subr.mxu0 0.0
        %1962 = vmatpush1.xpose.msra.mxu0 0.0
        %1963 = vmatprep.subr.mxu0 0.0
        %1964 = vmatpush1.xpose.msra.mxu0 0.0
        %1965 = vmatprep.subr.mxu0 0.0
        %1966 = vmatpush1.xpose.msra.mxu0 0.0
        %1967 = vmatprep.subr.mxu0 0.0
        %1968 = vmatpush1.xpose.msra.mxu0 0.0
        %1969 = vmatprep.subr.mxu0 0.0
        %1970 = vmatpush1.xpose.msra.mxu0 0.0
        %1971 = vmatprep.subr.mxu0 0.0
        %1972 = vmatpush1.xpose.msra.mxu0 0.0
        %1973 = vmatprep.subr.mxu0 0.0
        %1974 = vmatpush1.xpose.msra.mxu0 0.0
        %1975 = vmatprep.subr.mxu0 0.0
        %1976 = vmatpush1.xpose.msra.mxu0 0.0
        %1977 = vmatprep.subr.mxu0 0.0
        %1978 = vmatpush1.xpose.msra.mxu0 0.0
        %1979 = vmatprep.subr.mxu0 0.0
        %1980 = vmatpush1.xpose.msra.mxu0 0.0
        %1981 = vmatprep.subr.mxu0 0.0
        %1982 = vmatpush1.xpose.msra.mxu0 0.0
        %1983 = vmatprep.subr.mxu0 0.0
        %1984 = vmatpush1.xpose.msra.mxu0 0.0
        %1985 = vmatprep.subr.mxu0 0.0
        %1986 = vmatpush1.xpose.msra.mxu0 0.0
        %1987 = vmatprep.subr.mxu0 0.0
        %1988 = vmatpush1.xpose.msra.mxu0 0.0
        %1989 = vmatprep.mubr.f32.mxu0 0.0
        %1990 = vmatmul.mubr.f32.gmra.mrb[0].mxu0 %v1921
        %v1991 = vpop.f32.mrb[0].mxu0
        %v1992 = vadd.f32 0.0, %v1991
        %v1993 = vpop.f32.mrb[0].mxu0
        %1994 = vdwg.mxu0
        %v1995 = vmul.f32 %v1992, 0.35355338
        %v1996 = vsel %vm341, %v1995, -inf
        %1997 = vmax.xlane.f32.xlu0 %v1996
        %v1998 = vpop.xlane.xlu0 %1997
        %v1999 = vsub.f32 %v1995, %v1998
        %v2000 = vmul.f32 %v1999, 1.442695
        %v2001 = vpow.pop %v2000
        %v2002 = vsel %vm341, %v2001, 0.0
        %2003 = vadd.xlane.f32.xlu0 %v2002
        %v2004 = vpop.xlane.xlu0 %2003
        %v2005 = vrcp.pop %v2004
        %v2006 = vmul.f32 %v2001, %v2005
        %2007 = vrot.lane.b32.xlu0 %v1417, 40
        %v2008 = vpop.permute.xlu0 %2007
        %v2011 = vsel %vm341, %v2006, 0
        %2013 = vmatprep.subr.mxu0 0.0
        %2014 = vmatpush1.msra.mxu0 %v2008
        %2015 = vmatprep.subr.mxu0 0.0
        %2016 = vmatpush1.msra.mxu0 0.0
        %2017 = vmatprep.subr.mxu0 0.0
        %2018 = vmatpush1.msra.mxu0 0.0
        %2019 = vmatprep.subr.mxu0 0.0
        %2020 = vmatpush1.msra.mxu0 0.0
        %2021 = vmatprep.subr.mxu0 0.0
        %2022 = vmatpush1.msra.mxu0 0.0
        %2023 = vmatprep.subr.mxu0 0.0
        %2024 = vmatpush1.msra.mxu0 0.0
        %2025 = vmatprep.subr.mxu0 0.0
        %2026 = vmatpush1.msra.mxu0 0.0
        %2027 = vmatprep.subr.mxu0 0.0
        %2028 = vmatpush1.msra.mxu0 0.0
        %2029 = vmatprep.subr.mxu0 0.0
        %2030 = vmatpush1.msra.mxu0 0.0
        %2031 = vmatprep.subr.mxu0 0.0
        %2032 = vmatpush1.msra.mxu0 0.0
        %2033 = vmatprep.subr.mxu0 0.0
        %2034 = vmatpush1.msra.mxu0 0.0
        %2035 = vmatprep.subr.mxu0 0.0
        %2036 = vmatpush1.msra.mxu0 0.0
        %2037 = vmatprep.subr.mxu0 0.0
        %2038 = vmatpush1.msra.mxu0 0.0
        %2039 = vmatprep.subr.mxu0 0.0
        %2040 = vmatpush1.msra.mxu0 0.0
        %2041 = vmatprep.subr.mxu0 0.0
        %2042 = vmatpush1.msra.mxu0 0.0
        %2043 = vmatprep.subr.mxu0 0.0
        %2044 = vmatpush1.msra.mxu0 0.0
        %2045 = vmatprep.subr.mxu0 0.0
        %2046 = vmatpush1.msra.mxu0 0.0
        %2047 = vmatprep.subr.mxu0 0.0
        %2048 = vmatpush1.msra.mxu0 0.0
        %2049 = vmatprep.subr.mxu0 0.0
        %2050 = vmatpush1.msra.mxu0 0.0
        %2051 = vmatprep.subr.mxu0 0.0
        %2052 = vmatpush1.msra.mxu0 0.0
        %2053 = vmatprep.subr.mxu0 0.0
        %2054 = vmatpush1.msra.mxu0 0.0
        %2055 = vmatprep.subr.mxu0 0.0
        %2056 = vmatpush1.msra.mxu0 0.0
        %2057 = vmatprep.subr.mxu0 0.0
        %2058 = vmatpush1.msra.mxu0 0.0
        %2059 = vmatprep.subr.mxu0 0.0
        %2060 = vmatpush1.msra.mxu0 0.0
        %2061 = vmatprep.subr.mxu0 0.0
        %2062 = vmatpush1.msra.mxu0 0.0
        %2063 = vmatprep.subr.mxu0 0.0
        %2064 = vmatpush1.msra.mxu0 0.0
        %2065 = vmatprep.subr.mxu0 0.0
        %2066 = vmatpush1.msra.mxu0 0.0
        %2067 = vmatprep.subr.mxu0 0.0
        %2068 = vmatpush1.msra.mxu0 0.0
        %2069 = vmatprep.subr.mxu0 0.0
        %2070 = vmatpush1.msra.mxu0 0.0
        %2071 = vmatprep.subr.mxu0 0.0
        %2072 = vmatpush1.msra.mxu0 0.0
        %2073 = vmatprep.subr.mxu0 0.0
        %2074 = vmatpush1.msra.mxu0 0.0
        %2075 = vmatprep.subr.mxu0 0.0
        %2076 = vmatpush1.msra.mxu0 0.0
        %2077 = vmatprep.mubr.f32.mxu0 0.0
        %2078 = vmatmul.mubr.f32.gmra.mrb[0].mxu0 %v2011
        %v2079 = vpop.f32.mrb[0].mxu0
        %v2080 = vadd.f32 0.0, %v2079
        %v2081 = vpop.f32.mrb[0].mxu0
        %2082 = vdwg.mxu0
        %2084 = vrot.lane.b32.xlu0 %v1748, 8
        %v2085 = vpop.permute.xlu0 %2084
        %2088 = vrot.lane.b32.xlu0 %v1914, 16
        %v2089 = vpop.permute.xlu0 %2088
        %2092 = vrot.lane.b32.xlu0 %v2080, 24
        %v2093 = vpop.permute.xlu0 %2092
        %v2095 = vsel %vm341, %v1582, %v2085
        %v2096 = vsel %vm1015, %v2095, %v2089
        %v2097 = vsel %vm1017, %v2096, %v2093
        %s2098 = scalar_lea.vmem %s2, 32
        %v2099 = vld [vmem:[%s2098] sm:$0xff]
        %v2100 = vld [vmem:[%s2098 + $0x8] sm:$0xff]
        %v2101 = vld [vmem:[%s2098 + $0x10] sm:$0xff]
        %v2102 = vld [vmem:[%s2098 + $0x18] sm:$0xff]
        %v2103 = vlaneseq
        %v2104 = vshrl.u32 %v2103, 7
        %v2105 = vsub.s32 0, %v2104
        %v2106 = vrot.slane %v1331, %v2105
        %v2108 = vsel %vm264, %v2097, 0
        %2110 = vmatprep.subr.mxu0 0.0
        %2111 = vmatpush1.msra.mxu0 %v2099
        %2112 = vmatprep.subr.mxu0 0.0
        %2113 = vmatpush1.msra.mxu0 %v2100
        %2114 = vmatprep.subr.mxu0 0.0
        %2115 = vmatpush1.msra.mxu0 %v2101
        %2116 = vmatprep.subr.mxu0 0.0
        %2117 = vmatpush1.msra.mxu0 %v2102
        %2118 = vmatprep.subr.mxu0 0.0
        %2119 = vmatpush1.msra.mxu0 0.0
        %2120 = vmatprep.subr.mxu0 0.0
        %2121 = vmatpush1.msra.mxu0 0.0
        %2122 = vmatprep.subr.mxu0 0.0
        %2123 = vmatpush1.msra.mxu0 0.0
        %2124 = vmatprep.subr.mxu0 0.0
        %2125 = vmatpush1.msra.mxu0 0.0
        %2126 = vmatprep.subr.mxu0 0.0
        %2127 = vmatpush1.msra.mxu0 0.0
        %2128 = vmatprep.subr.mxu0 0.0
        %2129 = vmatpush1.msra.mxu0 0.0
        %2130 = vmatprep.subr.mxu0 0.0
        %2131 = vmatpush1.msra.mxu0 0.0
        %2132 = vmatprep.subr.mxu0 0.0
        %2133 = vmatpush1.msra.mxu0 0.0
        %2134 = vmatprep.subr.mxu0 0.0
        %2135 = vmatpush1.msra.mxu0 0.0
        %2136 = vmatprep.subr.mxu0 0.0
        %2137 = vmatpush1.msra.mxu0 0.0
        %2138 = vmatprep.subr.mxu0 0.0
        %2139 = vmatpush1.msra.mxu0 0.0
        %2140 = vmatprep.subr.mxu0 0.0
        %2141 = vmatpush1.msra.mxu0 0.0
        %2142 = vmatprep.subr.mxu0 0.0
        %2143 = vmatpush1.msra.mxu0 0.0
        %2144 = vmatprep.subr.mxu0 0.0
        %2145 = vmatpush1.msra.mxu0 0.0
        %2146 = vmatprep.subr.mxu0 0.0
        %2147 = vmatpush1.msra.mxu0 0.0
        %2148 = vmatprep.subr.mxu0 0.0
        %2149 = vmatpush1.msra.mxu0 0.0
        %2150 = vmatprep.subr.mxu0 0.0
        %2151 = vmatpush1.msra.mxu0 0.0
        %2152 = vmatprep.subr.mxu0 0.0
        %2153 = vmatpush1.msra.mxu0 0.0
        %2154 = vmatprep.subr.mxu0 0.0
        %2155 = vmatpush1.msra.mxu0 0.0
        %2156 = vmatprep.subr.mxu0 0.0
        %2157 = vmatpush1.msra.mxu0 0.0
        %2158 = vmatprep.subr.mxu0 0.0
        %2159 = vmatpush1.msra.mxu0 0.0
        %2160 = vmatprep.subr.mxu0 0.0
        %2161 = vmatpush1.msra.mxu0 0.0
        %2162 = vmatprep.subr.mxu0 0.0
        %2163 = vmatpush1.msra.mxu0 0.0
        %2164 = vmatprep.subr.mxu0 0.0
        %2165 = vmatpush1.msra.mxu0 0.0
        %2166 = vmatprep.subr.mxu0 0.0
        %2167 = vmatpush1.msra.mxu0 0.0
        %2168 = vmatprep.subr.mxu0 0.0
        %2169 = vmatpush1.msra.mxu0 0.0
        %2170 = vmatprep.subr.mxu0 0.0
        %2171 = vmatpush1.msra.mxu0 0.0
        %2172 = vmatprep.subr.mxu0 0.0
        %2173 = vmatpush1.msra.mxu0 0.0
        %2174 = vmatprep.mubr.f32.mxu0 0.0
        %2175 = vmatmul.mubr.f32.gmra.mrb[0].mxu0 %v2108
        %v2176 = vpop.f32.mrb[0].mxu0
        %v2177 = vadd.f32 %v2106, %v2176
        %v2178 = vpop.f32.mrb[0].mxu0
        %2179 = vdwg.mxu0
        %v2180 = vadd.f32 %v1328, %v2177
        %v2181 = vsel %vm264, %v2180, 0.0
        %2182 = vadd.xlane.f32.xlu0 %v2181
        %v2183 = vpop.xlane.xlu0 %2182
        %v2184 = vmul.f32 %v2183, %v1104
        %v2185 = vsub.f32 %v2180, %v2184
        %v2186 = vmul.f32 %v2185, %v2185
        %v2187 = vsel %vm264, %v2186, 0.0
        %2188 = vadd.xlane.f32.xlu0 %v2187
        %v2189 = vpop.xlane.xlu0 %2188
        %v2190 = vmul.f32 %v2189, %v1104
        %v2191 = vadd.f32 %v2190, 1e-05
        %v2192 = vrsqrt.pop %v2191
        %v2193 = vmul.f32 %v2185, %v2192
        %v2194 = vlaneseq
        %v2195 = vshrl.u32 %v2194, 7
        %v2196 = vsub.s32 0, %v2195
        %v2197 = vrot.slane %v1334, %v2196
        %v2198 = vmul.f32 %v2193, %v2197
        %v2199 = vlaneseq
        %v2200 = vshrl.u32 %v2199, 7
        %v2201 = vsub.s32 0, %v2200
        %v2202 = vrot.slane %v1335, %v2201
        %v2203 = vadd.f32 %v2198, %v2202
        %s2204 = scalar_lea.vmem %s3, 32
        %v2205 = vld [vmem:[%s2204] sm:$0xff]
        %v2206 = vld [vmem:[%s2204 + $0x8] sm:$0xff]
        %v2207 = vld [vmem:[%s2204 + $0x10] sm:$0xff]
        %v2208 = vld [vmem:[%s2204 + $0x18] sm:$0xff]
        %v2209 = vlaneseq
        %v2210 = vshrl.u32 %v2209, 7
        %v2211 = vsub.s32 0, %v2210
        %v2212 = vrot.slane %v1332, %v2211
        %v2214 = vsel %vm264, %v2203, 0
        %2216 = vmatprep.subr.mxu0 0.0
        %2217 = vmatpush1.msra.mxu0 %v2205
        %2218 = vmatprep.subr.mxu0 0.0
        %2219 = vmatpush1.msra.mxu0 %v2206
        %2220 = vmatprep.subr.mxu0 0.0
        %2221 = vmatpush1.msra.mxu0 %v2207
        %2222 = vmatprep.subr.mxu0 0.0
        %2223 = vmatpush1.msra.mxu0 %v2208
        %2224 = vmatprep.subr.mxu0 0.0
        %2225 = vmatpush1.msra.mxu0 0.0
        %2226 = vmatprep.subr.mxu0 0.0
        %2227 = vmatpush1.msra.mxu0 0.0
        %2228 = vmatprep.subr.mxu0 0.0
        %2229 = vmatpush1.msra.mxu0 0.0
        %2230 = vmatprep.subr.mxu0 0.0
        %2231 = vmatpush1.msra.mxu0 0.0
        %2232 = vmatprep.subr.mxu0 0.0
        %2233 = vmatpush1.msra.mxu0 0.0
        %2234 = vmatprep.subr.mxu0 0.0
        %2235 = vmatpush1.msra.mxu0 0.0
        %2236 = vmatprep.subr.mxu0 0.0
        %2237 = vmatpush1.msra.mxu0 0.0
        %2238 = vmatprep.subr.mxu0 0.0
        %2239 = vmatpush1.msra.mxu0 0.0
        %2240 = vmatprep.subr.mxu0 0.0
        %2241 = vmatpush1.msra.mxu0 0.0
        %2242 = vmatprep.subr.mxu0 0.0
        %2243 = vmatpush1.msra.mxu0 0.0
        %2244 = vmatprep.subr.mxu0 0.0
        %2245 = vmatpush1.msra.mxu0 0.0
        %2246 = vmatprep.subr.mxu0 0.0
        %2247 = vmatpush1.msra.mxu0 0.0
        %2248 = vmatprep.subr.mxu0 0.0
        %2249 = vmatpush1.msra.mxu0 0.0
        %2250 = vmatprep.subr.mxu0 0.0
        %2251 = vmatpush1.msra.mxu0 0.0
        %2252 = vmatprep.subr.mxu0 0.0
        %2253 = vmatpush1.msra.mxu0 0.0
        %2254 = vmatprep.subr.mxu0 0.0
        %2255 = vmatpush1.msra.mxu0 0.0
        %2256 = vmatprep.subr.mxu0 0.0
        %2257 = vmatpush1.msra.mxu0 0.0
        %2258 = vmatprep.subr.mxu0 0.0
        %2259 = vmatpush1.msra.mxu0 0.0
        %2260 = vmatprep.subr.mxu0 0.0
        %2261 = vmatpush1.msra.mxu0 0.0
        %2262 = vmatprep.subr.mxu0 0.0
        %2263 = vmatpush1.msra.mxu0 0.0
        %2264 = vmatprep.subr.mxu0 0.0
        %2265 = vmatpush1.msra.mxu0 0.0
        %2266 = vmatprep.subr.mxu0 0.0
        %2267 = vmatpush1.msra.mxu0 0.0
        %2268 = vmatprep.subr.mxu0 0.0
        %2269 = vmatpush1.msra.mxu0 0.0
        %2270 = vmatprep.subr.mxu0 0.0
        %2271 = vmatpush1.msra.mxu0 0.0
        %2272 = vmatprep.subr.mxu0 0.0
        %2273 = vmatpush1.msra.mxu0 0.0
        %2274 = vmatprep.subr.mxu0 0.0
        %2275 = vmatpush1.msra.mxu0 0.0
        %2276 = vmatprep.subr.mxu0 0.0
        %2277 = vmatpush1.msra.mxu0 0.0
        %2278 = vmatprep.subr.mxu0 0.0
        %2279 = vmatpush1.msra.mxu0 0.0
        %2280 = vmatprep.mubr.f32.mxu0 0.0
        %2281 = vmatmul.mubr.f32.gmra.mrb[0].mxu0 %v2214
        %v2282 = vpop.f32.mrb[0].mxu0
        %v2283 = vadd.f32 %v2212, %v2282
        %v2284 = vpop.f32.mrb[0].mxu0
        %2285 = vdwg.mxu0
        %v2286 = vmul.f32 %v2283, %v2283
        %v2287 = vmul.f32 %v2283, %v2286
        %v2288 = vmul.f32 %v2287, 0.044715
        %v2289 = vadd.f32 %v2283, %v2288
        %v2290 = vmul.f32 %v2289, 0.7978846
        %v2291 = vtanh.pop %v2290
        %v2292 = vadd.f32 %v2291, 1.0
        %v2293 = vmul.f32 %v2292, 0.5
        %v2294 = vmul.f32 %v2283, %v2293
        %s2295 = scalar_lea.vmem %s4, 128
        %v2296 = vld [vmem:[%s2295] sm:$0xff]
        %v2297 = vld [vmem:[%s2295 + $0x8] sm:$0xff]
        %v2298 = vld [vmem:[%s2295 + $0x10] sm:$0xff]
        %v2299 = vld [vmem:[%s2295 + $0x18] sm:$0xff]
        %v2300 = vld [vmem:[%s2295 + $0x20] sm:$0xff]
        %v2301 = vld [vmem:[%s2295 + $0x28] sm:$0xff]
        %v2302 = vld [vmem:[%s2295 + $0x30] sm:$0xff]
        %v2303 = vld [vmem:[%s2295 + $0x38] sm:$0xff]
        %v2304 = vld [vmem:[%s2295 + $0x40] sm:$0xff]
        %v2305 = vld [vmem:[%s2295 + $0x48] sm:$0xff]
        %v2306 = vld [vmem:[%s2295 + $0x50] sm:$0xff]
        %v2307 = vld [vmem:[%s2295 + $0x58] sm:$0xff]
        %v2308 = vld [vmem:[%s2295 + $0x60] sm:$0xff]
        %v2309 = vld [vmem:[%s2295 + $0x68] sm:$0xff]
        %v2310 = vld [vmem:[%s2295 + $0x70] sm:$0xff]
        %v2311 = vld [vmem:[%s2295 + $0x78] sm:$0xff]
        %v2312 = vlaneseq
        %v2313 = vshrl.u32 %v2312, 7
        %v2314 = vsub.s32 0, %v2313
        %v2315 = vrot.slane %v1333, %v2314
        %2316 = vmatprep.subr.mxu0 0.0
        %2317 = vmatpush1.msra.mxu0 %v2296
        %2318 = vmatprep.subr.mxu0 0.0
        %2319 = vmatpush1.msra.mxu0 %v2297
        %2320 = vmatprep.subr.mxu0 0.0
        %2321 = vmatpush1.msra.mxu0 %v2298
        %2322 = vmatprep.subr.mxu0 0.0
        %2323 = vmatpush1.msra.mxu0 %v2299
        %2324 = vmatprep.subr.mxu0 0.0
        %2325 = vmatpush1.msra.mxu0 %v2300
        %2326 = vmatprep.subr.mxu0 0.0
        %2327 = vmatpush1.msra.mxu0 %v2301
        %2328 = vmatprep.subr.mxu0 0.0
        %2329 = vmatpush1.msra.mxu0 %v2302
        %2330 = vmatprep.subr.mxu0 0.0
        %2331 = vmatpush1.msra.mxu0 %v2303
        %2332 = vmatprep.subr.mxu0 0.0
        %2333 = vmatpush1.msra.mxu0 %v2304
        %2334 = vmatprep.subr.mxu0 0.0
        %2335 = vmatpush1.msra.mxu0 %v2305
        %2336 = vmatprep.subr.mxu0 0.0
        %2337 = vmatpush1.msra.mxu0 %v2306
        %2338 = vmatprep.subr.mxu0 0.0
        %2339 = vmatpush1.msra.mxu0 %v2307
        %2340 = vmatprep.subr.mxu0 0.0
        %2341 = vmatpush1.msra.mxu0 %v2308
        %2342 = vmatprep.subr.mxu0 0.0
        %2343 = vmatpush1.msra.mxu0 %v2309
        %2344 = vmatprep.subr.mxu0 0.0
        %2345 = vmatpush1.msra.mxu0 %v2310
        %2346 = vmatprep.subr.mxu0 0.0
        %2347 = vmatpush1.msra.mxu0 %v2311
        %2348 = vmatprep.subr.mxu0 0.0
        %2349 = vmatpush1.msra.mxu0 0.0
        %2350 = vmatprep.subr.mxu0 0.0
        %2351 = vmatpush1.msra.mxu0 0.0
        %2352 = vmatprep.subr.mxu0 0.0
        %2353 = vmatpush1.msra.mxu0 0.0
        %2354 = vmatprep.subr.mxu0 0.0
        %2355 = vmatpush1.msra.mxu0 0.0
        %2356 = vmatprep.subr.mxu0 0.0
        %2357 = vmatpush1.msra.mxu0 0.0
        %2358 = vmatprep.subr.mxu0 0.0
        %2359 = vmatpush1.msra.mxu0 0.0
        %2360 = vmatprep.subr.mxu0 0.0
        %2361 = vmatpush1.msra.mxu0 0.0
        %2362 = vmatprep.subr.mxu0 0.0
        %2363 = vmatpush1.msra.mxu0 0.0
        %2364 = vmatprep.subr.mxu0 0.0
        %2365 = vmatpush1.msra.mxu0 0.0
        %2366 = vmatprep.subr.mxu0 0.0
        %2367 = vmatpush1.msra.mxu0 0.0
        %2368 = vmatprep.subr.mxu0 0.0
        %2369 = vmatpush1.msra.mxu0 0.0
        %2370 = vmatprep.subr.mxu0 0.0
        %2371 = vmatpush1.msra.mxu0 0.0
        %2372 = vmatprep.subr.mxu0 0.0
        %2373 = vmatpush1.msra.mxu0 0.0
        %2374 = vmatprep.subr.mxu0 0.0
        %2375 = vmatpush1.msra.mxu0 0.0
        %2376 = vmatprep.subr.mxu0 0.0
        %2377 = vmatpush1.msra.mxu0 0.0
        %2378 = vmatprep.subr.mxu0 0.0
        %2379 = vmatpush1.msra.mxu0 0.0
        %2380 = vmatprep.mubr.f32.mxu0 0.0
        %2381 = vmatmul.mubr.f32.gmra.mrb[0].mxu0 %v2294
        %v2382 = vpop.f32.mrb[0].mxu0
        %v2383 = vadd.f32 %v2315, %v2382
        %v2384 = vpop.f32.mrb[0].mxu0
        %2385 = vdwg.mxu0
        %v2386 = vadd.f32 %v2203, %v2383
        %v2387 = vsel %vm264, %v2386, 0.0
        %2388 = vadd.xlane.f32.xlu0 %v2387
        %v2389 = vpop.xlane.xlu0 %2388
        %v2390 = vmul.f32 %v2389, %v1104
        %v2391 = vsub.f32 %v2386, %v2390
        %v2392 = vmul.f32 %v2391, %v2391
        %v2393 = vsel %vm264, %v2392, 0.0
        %2394 = vadd.xlane.f32.xlu0 %v2393
        %v2395 = vpop.xlane.xlu0 %2394
        %v2396 = vmul.f32 %v2395, %v1104
        %v2397 = vadd.f32 %v2396, 1e-05
        %v2398 = vrsqrt.pop %v2397
        %v2399 = vmul.f32 %v2391, %v2398
        %v2400 = vlaneseq
        %v2401 = vshrl.u32 %v2400, 7
        %v2402 = vsub.s32 0, %v2401
        %v2403 = vrot.slane %v1336, %v2402
        %v2404 = vmul.f32 %v2399, %v2403
        %v2405 = vlaneseq
        %v2406 = vshrl.u32 %v2405, 7
        %v2407 = vsub.s32 0, %v2406
        %v2408 = vrot.slane %v1337, %v2407
        %v2409 = vadd.f32 %v2404, %v2408
        %2410 = vst.msk [vmem:[%s242] sm:$0xff] %vm264, %v2409
        %s2411 = sand.u32 %s159, 1
        %s2412 = scalar_lea.sflag [#allocation3], %s2411
        %s2413 = sand.u32 %s159, 1
        %s2414 = smul.addr %s2413, 8
        %s2415 = scalar_lea.vmem [#allocation2], %s2414
        // Predicated region
        $region45: #{transformer_forward.1} parent=43 // pred_check
          %p2416 = pneg %p169
        $region46: #{transformer_forward.1} parent=43 // pred_check_branch
          %2418 = sbr.rel (%p2416) target = $region48
        $region47: #{transformer_forward.1} parent=43 // pred_region
          %s2420 = ssub.s32 128, 128
          %2421 = vsyncadd %s2412, %s2420
          %s2422 = smul.addr %s20, 128
          %s2423 = scalar_lea.hbm %s6, %s2422
          %s2425 = sshll.u32 %s2415, 4
          %s2426 = int_to_ptr.vmem [resolvable:$true] %s2425
          %2428 = dma.vmem_to_hbm [thread:$0]  %s2426, 128, %s2423, %s2412
        $region48: #{transformer_forward.1} parent=43 // pred_fallthru
          _
      $region44: #{transformer_forward.1} parent=5 // pred_fallthru
        _
      %p2429 = scmp.le.s32.totalorder 2, %s15
      // Predicated region
      $region49: #{transformer_forward.1} parent=5 // pred_check
        %p2430 = pneg %p2429
      $region50: #{transformer_forward.1} parent=5 // pred_check_branch
        %2432 = sbr.rel (%p2430) target = $region52
      $region51: #{transformer_forward.1} parent=5 // pred_region
        %s2433 = ssub.s32 %s15, 2
        // Predicated region
        $region53: #{transformer_forward.1} parent=51 // pred_check
          %p2434 = pneg %p175
        $region54: #{transformer_forward.1} parent=51 // pred_check_branch
          %2436 = sbr.rel (%p2434) target = $region56
        $region55: #{transformer_forward.1} parent=51 // pred_region
          %s2437 = sand.u32 %s160, 1
          %s2438 = scalar_lea.sflag [#allocation3], %s2437
          %s2439 = sand.u32 %s160, 1
          %s2440 = smul.addr %s2439, 8
          %s2441 = scalar_lea.vmem [#allocation2], %s2440
          %2442 = dma.done %s2438, 128
        $region56: #{transformer_forward.1} parent=51 // pred_fallthru
          _
      $region52: #{transformer_forward.1} parent=5 // pred_fallthru
        _
    $region6: #{transformer_forward.1} parent=1 // loop_footer
      %s19 = sadd.s32 1, %s15
    $region7: #{transformer_forward.1} parent=1 // loop_footer_branch
      %14 = sbr.rel target = $region3
    $region8: #{transformer_forward.1} parent=1 // loop_exit
      _
    %2443 = vsyncpa [#allocation3], 1
    %s2444 = scalar_lea.sflag [#allocation3], 1
    %2445 = vsyncpa %s2444, 1

</llo_original>
